<compile_context>
chip_gen: v7x
topology: tpu7x:2x2x1
jax: 0.10.0
libtpu: 0.0.40
codegen_flags: <defaults>
</compile_context>

<pallas_src>
import functools

import jax
import jax.numpy as jnp
from jax.experimental import pallas as pl
from jax.experimental.pallas import tpu as pltpu


# ---------------------------------------------------------------------------
# Fused kernel: per grid step = one view (satellite or drone).
#   patches_ref : (1, B*P, PD)  bf16   im2col'd patches for this view
#   pool_ref    : (B, B*P)      f32    block-diagonal 1/P averaging matrix
#   we_ref      : (PD, E)       bf16   patch-embedding weight (shared, resident)
#   be_ref      : (1, E)        f32    patch-embedding bias
#   wh_ref      : (1, E, HD)    bf16   per-view fused head  [cls_pad | align_v]
#   bh_ref      : (1, 1, HD)    f32    per-view fused head bias
# outputs:
#   feat_ref    : (1, B, E)     f32    global features (fed to alignment)
#   head_ref    : (1, B, HD)    f32    [padded class logits | aligned features]
# ---------------------------------------------------------------------------
def fused_two_view_kernel(patches_ref, pool_ref, we_ref, be_ref, wh_ref, bh_ref,
                          feat_ref, head_ref):
    x = patches_ref[0]                                            # (B*P, PD) bf16
    # Patch embedding: bf16 x bf16 -> f32 accumulate on the MXU.
    tok = jnp.dot(x, we_ref[...], preferred_element_type=jnp.float32)
    tok = jax.nn.gelu(tok + be_ref[...], approximate=True)        # (B*P, E) f32
    # Per-image mean pool over tokens as a tiny block-diagonal matmul.
    gfeat = jnp.dot(pool_ref[...], tok,
                    preferred_element_type=jnp.float32)           # (B, E) f32
    feat_ref[0] = gfeat
    # Fused classifier + cross-view alignment head (lane-dense output).
    head_ref[0] = (
        jnp.dot(gfeat.astype(jnp.bfloat16), wh_ref[0],
                preferred_element_type=jnp.float32)
        + bh_ref[0]
    )                                                             # (B, HD) f32


def run_fused_two_view(patches2, pool, w_embed, b_embed, w_head, b_head):
    V, BP, PD = patches2.shape          # V = 2 views
    B = pool.shape[0]
    E = w_embed.shape[1]
    HD = w_head.shape[2]
    feat, head = pl.pallas_call(
        fused_two_view_kernel,
        out_shape=(
            jax.ShapeDtypeStruct((V, B, E), jnp.float32),
            jax.ShapeDtypeStruct((V, B, HD), jnp.float32),
        ),
        grid_spec=pltpu.PrefetchScalarGridSpec(
            num_scalar_prefetch=0,
            grid=(V,),
            in_specs=[
                pl.BlockSpec((1, BP, PD), lambda v: (v, 0, 0)),   # per-view patches
                pl.BlockSpec((B, BP), lambda v: (0, 0)),          # shared (resident)
                pl.BlockSpec((PD, E), lambda v: (0, 0)),          # shared (resident)
                pl.BlockSpec((1, E), lambda v: (0, 0)),           # shared (resident)
                pl.BlockSpec((1, E, HD), lambda v: (v, 0, 0)),    # per-view head W
                pl.BlockSpec((1, 1, HD), lambda v: (v, 0, 0)),    # per-view head b
            ],
            out_specs=[
                pl.BlockSpec((1, B, E), lambda v: (v, 0, 0)),
                pl.BlockSpec((1, B, HD), lambda v: (v, 0, 0)),
            ],
        ),
        compiler_params=pltpu.CompilerParams(
            dimension_semantics=("parallel",),   # views -> both v7x TensorCores
        ),
    )(patches2, pool, w_embed, b_embed, w_head, b_head)
    return feat, head


# ---------------------------------------------------------------------------
# Glue: im2col (matches PyTorch Conv2d with kernel=stride=patch on NCHW, patch
# flattened in (c, kh, kw) order), parameter init, forward composition.
# ---------------------------------------------------------------------------
def extract_patches_nchw(x, patch):
    # x: [B, C, H, W]  ->  [B, P, C*patch*patch]
    B, C, H, W = x.shape
    hp, wp = H // patch, W // patch
    x = x.reshape(B, C, hp, patch, wp, patch)
    x = jnp.transpose(x, (0, 2, 4, 1, 3, 5))          # [B, hp, wp, C, ph, pw]
    return x.reshape(B, hp * wp, C * patch * patch)


def _round_up(x, m):
    return ((x + m - 1) // m) * m


def init_params(key, patch_dim, embed_dim, num_classes, num_clusters):
    c_total = num_clusters * num_classes
    c_pad = _round_up(c_total, 128)                   # lane-dense classifier cols
    ks = jax.random.split(key, 4)
    scale = 0.02

    w_embed = scale * jax.random.normal(ks[0], (patch_dim, embed_dim), jnp.float32)
    b_embed = jnp.zeros((1, embed_dim), jnp.float32)

    w_cls = scale * jax.random.normal(ks[1], (embed_dim, c_total), jnp.float32)
    b_cls = jnp.zeros((1, c_total), jnp.float32)
    w_cls_pad = jnp.zeros((embed_dim, c_pad), jnp.float32).at[:, :c_total].set(w_cls)
    b_cls_pad = jnp.zeros((1, c_pad), jnp.float32).at[:, :c_total].set(b_cls)

    w_align_s = scale * jax.random.normal(ks[2], (embed_dim, embed_dim), jnp.float32)
    w_align_d = scale * jax.random.normal(ks[3], (embed_dim, embed_dim), jnp.float32)
    b_align_s = jnp.zeros((1, embed_dim), jnp.float32)
    b_align_d = jnp.zeros((1, embed_dim), jnp.float32)

    # Per-view fused head: [classifier (padded) | alignment projection].
    w_head = jnp.stack([
        jnp.concatenate([w_cls_pad, w_align_s], axis=1),
        jnp.concatenate([w_cls_pad, w_align_d], axis=1),
    ], axis=0)                                        # (2, E, c_pad + E)
    b_head = jnp.stack([
        jnp.concatenate([b_cls_pad, b_align_s], axis=1),
        jnp.concatenate([b_cls_pad, b_align_d], axis=1),
    ], axis=0)                                        # (2, 1, c_pad + E)

    return {
        "w_embed": w_embed.astype(jnp.bfloat16),
        "b_embed": b_embed,
        "w_head": w_head.astype(jnp.bfloat16),
        "b_head": b_head,
    }


@functools.partial(jax.jit, static_argnames=("patch", "num_clusters", "num_classes"))
def two_view_forward(params, x1, x2, *, patch, num_clusters, num_classes):
    B = x1.shape[0]
    p1 = extract_patches_nchw(x1, patch)              # (B, P, PD)
    p2 = extract_patches_nchw(x2, patch)
    P, PD = p1.shape[1], p1.shape[2]

    # Both views stacked on a leading axis; batch folded into the token rows.
    patches2 = jnp.stack(
        [p1.reshape(B * P, PD), p2.reshape(B * P, PD)], axis=0
    ).astype(jnp.bfloat16)                            # (2, B*P, PD)

    # Block-diagonal per-image averaging matrix (B, B*P).
    pool = jnp.repeat(jnp.eye(B, dtype=jnp.float32), P, axis=1) / float(P)

    feat, head = run_fused_two_view(
        patches2, pool,
        params["w_embed"], params["b_embed"],
        params["w_head"], params["b_head"],
    )

    c_total = num_clusters * num_classes
    c_pad = _round_up(c_total, 128)

    sat_global, drone_global = feat[0], feat[1]
    sat_head, drone_head = head[0], head[1]

    sat_predictions = [
        sat_head[:, k * num_classes:(k + 1) * num_classes]
        for k in range(num_clusters)
    ]
    drone_predictions = [
        drone_head[:, k * num_classes:(k + 1) * num_classes]
        for k in range(num_clusters)
    ]
    sat_aligned = sat_head[:, c_pad:]
    drone_aligned = drone_head[:, c_pad:]

    outputs = {
        "satellite": {"predictions": sat_predictions, "features": (sat_global,)},
        "drone": {"predictions": drone_predictions, "features": (drone_global,)},
        "alignment": {
            "satellite_aligned": sat_aligned,
            "drone_aligned": drone_aligned,
            "satellite_original": sat_global,
            "drone_original": drone_global,
        },
    }
    return outputs


# ---------------------------------------------------------------------------
# Pure-JAX reference (same bf16 operand quantization) for a correctness check.
# ---------------------------------------------------------------------------
def reference_forward(params, x1, x2, *, patch, num_clusters, num_classes):
    c_total = num_clusters * num_classes
    c_pad = _round_up(c_total, 128)
    we = params["w_embed"].astype(jnp.float32)
    be = params["b_embed"]
    wh = params["w_head"].astype(jnp.float32)
    bh = params["b_head"]

    def backbone(x, view):
        p = extract_patches_nchw(x, patch).astype(jnp.bfloat16).astype(jnp.float32)
        tok = jnp.einsum("bpd,de->bpe", p, we) + be
        tok = jax.nn.gelu(tok, approximate=True)
        gfeat = jnp.mean(tok, axis=1)                                  # (B, E)
        g_q = gfeat.astype(jnp.bfloat16).astype(jnp.float32)
        head = g_q @ wh[view] + bh[view]
        return gfeat, head

    g1, h1 = backbone(x1, 0)
    g2, h2 = backbone(x2, 1)
    return {
        "sat_global": g1, "drone_global": g2,
        "sat_cls": h1[:, :c_total], "drone_cls": h2[:, :c_total],
        "sat_aligned": h1[:, c_pad:], "drone_aligned": h2[:, c_pad:],
    }


if __name__ == "__main__":
    # Small deterministic example shapes.
    B, C, H, W = 2, 3, 16, 16
    PATCH = 4
    EMBED_DIM = 768            # required by CrossViewAlignment(feature_dim=768)
    NUM_CLASSES = 10
    NUM_CLUSTERS = 3
    PATCH_DIM = C * PATCH * PATCH

    key = jax.random.PRNGKey(0)
    k_params, k_x1, k_x2 = jax.random.split(key, 3)
    params = init_params(k_params, PATCH_DIM, EMBED_DIM, NUM_CLASSES, NUM_CLUSTERS)
    x1 = jax.random.normal(k_x1, (B, C, H, W), jnp.float32)   # satellite, NCHW
    x2 = jax.random.normal(k_x2, (B, C, H, W), jnp.float32)   # drone, NCHW

    outputs = two_view_forward(
        params, x1, x2,
        patch=PATCH, num_clusters=NUM_CLUSTERS, num_classes=NUM_CLASSES,
    )
    outputs = jax.block_until_ready(outputs)

    # Shape checks.
    assert outputs["satellite"]["features"][0].shape == (B, EMBED_DIM)
    assert outputs["drone"]["features"][0].shape == (B, EMBED_DIM)
    assert outputs["satellite"]["predictions"][0].shape == (B, NUM_CLASSES)
    assert outputs["drone"]["predictions"][0].shape == (B, NUM_CLASSES)
    assert outputs["alignment"]["satellite_aligned"].shape == (B, EMBED_DIM)
    assert outputs["alignment"]["drone_aligned"].shape == (B, EMBED_DIM)

    # Numerical check against pure-JAX reference.
    ref = reference_forward(
        params, x1, x2,
        patch=PATCH, num_clusters=NUM_CLUSTERS, num_classes=NUM_CLASSES,
    )
    ref = jax.block_until_ready(ref)
    sat_cls_kernel = jnp.concatenate(outputs["satellite"]["predictions"], axis=1)
    drone_cls_kernel = jnp.concatenate(outputs["drone"]["predictions"], axis=1)
    checks = [
        (outputs["satellite"]["features"][0], ref["sat_global"]),
        (outputs["drone"]["features"][0], ref["drone_global"]),
        (sat_cls_kernel, ref["sat_cls"]),
        (drone_cls_kernel, ref["drone_cls"]),
        (outputs["alignment"]["satellite_aligned"], ref["sat_aligned"]),
        (outputs["alignment"]["drone_aligned"], ref["drone_aligned"]),
    ]
    for got, want in checks:
        assert bool(jnp.allclose(got, want, atol=5e-3, rtol=5e-2)), (
            "mismatch vs reference"
        )

    print("KERNEL_OK")
</pallas_src>

<mosaic_0001>
module attributes {stable_mosaic.version = 11 : i64} {
  func.func @fused_two_view_kernel(%arg0: i32, %arg1: memref<1x32x48xbf16, #tpu.memory_space<vmem>>, %arg2: memref<2x32xf32, #tpu.memory_space<vmem>>, %arg3: memref<48x768xbf16, #tpu.memory_space<vmem>>, %arg4: memref<1x768xf32, #tpu.memory_space<vmem>>, %arg5: memref<1x768x896xbf16, #tpu.memory_space<vmem>>, %arg6: memref<1x1x896xf32, #tpu.memory_space<vmem>>, %arg7: memref<1x2x768xf32, #tpu.memory_space<vmem>>, %arg8: memref<1x2x896xf32, #tpu.memory_space<vmem>>) attributes {dimension_semantics = [#tpu.dimension_semantics<parallel>], iteration_bounds = array<i64: 2>, scalar_prefetch = 0 : i64, scratch_operands = 0 : i64, tpu.core_type = #tpu.core_type<tc>, window_params = [{transform_indices = @transform_0, window_bounds = array<i64: 1, 32, 48>}, {pipeline_mode = #tpu.pipeline_mode<synchronous>, transform_indices = @transform_1, window_bounds = array<i64: 2, 32>}, {pipeline_mode = #tpu.pipeline_mode<synchronous>, transform_indices = @transform_2, window_bounds = array<i64: 48, 768>}, {pipeline_mode = #tpu.pipeline_mode<synchronous>, transform_indices = @transform_3, window_bounds = array<i64: 1, 768>}, {transform_indices = @transform_4, window_bounds = array<i64: 1, 768, 896>}, {transform_indices = @transform_5, window_bounds = array<i64: 1, 1, 896>}, {transform_indices = @transform_6, window_bounds = array<i64: 1, 2, 768>}, {transform_indices = @transform_7, window_bounds = array<i64: 1, 2, 896>}]} {
    %c0 = arith.constant 0 : index
    %c0_0 = arith.constant 0 : index
    %c0_1 = arith.constant 0 : index
    %0 = vector.load %arg1[%c0, %c0_0, %c0_1] : memref<1x32x48xbf16, #tpu.memory_space<vmem>>, vector<1x32x48xbf16>
    %1 = vector.shape_cast %0 : vector<1x32x48xbf16> to vector<32x48xbf16>
    %c0_2 = arith.constant 0 : index
    %c0_3 = arith.constant 0 : index
    %2 = vector.load %arg3[%c0_2, %c0_3] : memref<48x768xbf16, #tpu.memory_space<vmem>>, vector<48x768xbf16>
    %cst = arith.constant dense<0.000000e+00> : vector<32x768xf32>
    %3 = tpu.matmul %1, %2, %cst {dimension_numbers = #tpu.dot_dimension_numbers<[1], [0], [0], [1], [0, 0, 1, 1], [], []>} : vector<32x48xbf16>, vector<48x768xbf16>, vector<32x768xf32> -> vector<32x768xf32>
    %c0_4 = arith.constant 0 : index
    %c0_5 = arith.constant 0 : index
    %4 = vector.load %arg4[%c0_4, %c0_5] : memref<1x768xf32, #tpu.memory_space<vmem>>, vector<1x768xf32>
    %5 = vector.broadcast %4 : vector<1x768xf32> to vector<32x768xf32>
    %6 = arith.addf %3, %5 : vector<32x768xf32>
    %7 = arith.mulf %6, %6 : vector<32x768xf32>
    %8 = arith.mulf %6, %7 : vector<32x768xf32>
    %cst_6 = arith.constant 4.471500e-02 : f32
    %9 = vector.broadcast %cst_6 : f32 to vector<32x768xf32>
    %10 = arith.mulf %9, %8 : vector<32x768xf32>
    %11 = arith.addf %6, %10 : vector<32x768xf32>
    %cst_7 = arith.constant 0.797884583 : f32
    %12 = vector.broadcast %cst_7 : f32 to vector<32x768xf32>
    %13 = arith.mulf %12, %11 : vector<32x768xf32>
    %14 = math.tanh %13 : vector<32x768xf32>
    %cst_8 = arith.constant 1.000000e+00 : f32
    %15 = vector.broadcast %cst_8 : f32 to vector<32x768xf32>
    %16 = arith.addf %15, %14 : vector<32x768xf32>
    %cst_9 = arith.constant 5.000000e-01 : f32
    %17 = vector.broadcast %cst_9 : f32 to vector<32x768xf32>
    %18 = arith.mulf %17, %16 : vector<32x768xf32>
    %19 = arith.mulf %6, %18 : vector<32x768xf32>
    %c0_10 = arith.constant 0 : index
    %c0_11 = arith.constant 0 : index
    %20 = vector.load %arg2[%c0_10, %c0_11] : memref<2x32xf32, #tpu.memory_space<vmem>>, vector<2x32xf32>
    %cst_12 = arith.constant dense<0.000000e+00> : vector<2x768xf32>
    %21 = tpu.matmul %20, %19, %cst_12 {dimension_numbers = #tpu.dot_dimension_numbers<[1], [0], [0], [1], [0, 0, 1, 1], [], []>} : vector<2x32xf32>, vector<32x768xf32>, vector<2x768xf32> -> vector<2x768xf32>
    %c0_13 = arith.constant 0 : index
    %c0_14 = arith.constant 0 : index
    %c0_15 = arith.constant 0 : index
    %22 = vector.load %arg7[%c0_13, %c0_14, %c0_15] : memref<1x2x768xf32, #tpu.memory_space<vmem>>, vector<1x2x768xf32>
    %23 = vector.shape_cast %22 : vector<1x2x768xf32> to vector<2x768xf32>
    %24 = vector.shape_cast %21 : vector<2x768xf32> to vector<1x2x768xf32>
    tpu.vector_store %arg7[%c0_13, %c0_14, %c0_15], %24 {strides = array<i32>} : memref<1x2x768xf32, #tpu.memory_space<vmem>>, vector<1x2x768xf32>,
    %25 = arith.truncf %21 : vector<2x768xf32> to vector<2x768xbf16>
    %c0_16 = arith.constant 0 : index
    %c0_17 = arith.constant 0 : index
    %c0_18 = arith.constant 0 : index
    %26 = vector.load %arg5[%c0_16, %c0_17, %c0_18] : memref<1x768x896xbf16, #tpu.memory_space<vmem>>, vector<1x768x896xbf16>
    %27 = vector.shape_cast %26 : vector<1x768x896xbf16> to vector<768x896xbf16>
    %cst_19 = arith.constant dense<0.000000e+00> : vector<2x896xf32>
    %28 = tpu.matmul %25, %27, %cst_19 {dimension_numbers = #tpu.dot_dimension_numbers<[1], [0], [0], [1], [0, 0, 1, 1], [], []>} : vector<2x768xbf16>, vector<768x896xbf16>, vector<2x896xf32> -> vector<2x896xf32>
    %c0_20 = arith.constant 0 : index
    %c0_21 = arith.constant 0 : index
    %c0_22 = arith.constant 0 : index
    %29 = vector.load %arg6[%c0_20, %c0_21, %c0_22] : memref<1x1x896xf32, #tpu.memory_space<vmem>>, vector<1x1x896xf32>
    %30 = vector.shape_cast %29 : vector<1x1x896xf32> to vector<1x896xf32>
    %31 = vector.broadcast %30 : vector<1x896xf32> to vector<2x896xf32>
    %32 = arith.addf %28, %31 : vector<2x896xf32>
    %c0_23 = arith.constant 0 : index
    %c0_24 = arith.constant 0 : index
    %c0_25 = arith.constant 0 : index
    %33 = vector.load %arg8[%c0_23, %c0_24, %c0_25] : memref<1x2x896xf32, #tpu.memory_space<vmem>>, vector<1x2x896xf32>
    %34 = vector.shape_cast %33 : vector<1x2x896xf32> to vector<2x896xf32>
    %35 = vector.shape_cast %32 : vector<2x896xf32> to vector<1x2x896xf32>
    tpu.vector_store %arg8[%c0_23, %c0_24, %c0_25], %35 {strides = array<i32>} : memref<1x2x896xf32, #tpu.memory_space<vmem>>, vector<1x2x896xf32>,
    return
  }
  func.func @transform_0(%arg0: i32) -> (i32, i32, i32) {
    %c0_i32 = arith.constant 0 : i32
    %c0_i32_0 = arith.constant 0 : i32
    %c0_i32_1 = arith.constant 0 : i32
    return %arg0, %c0_i32, %c0_i32_0 : i32, i32, i32
  }
  func.func @transform_1(%arg0: i32) -> (i32, i32) {
    %c0_i32 = arith.constant 0 : i32
    %c0_i32_0 = arith.constant 0 : i32
    %c0_i32_1 = arith.constant 0 : i32
    return %c0_i32, %c0_i32_0 : i32, i32
  }
  func.func @transform_2(%arg0: i32) -> (i32, i32) {
    %c0_i32 = arith.constant 0 : i32
    %c0_i32_0 = arith.constant 0 : i32
    %c0_i32_1 = arith.constant 0 : i32
    return %c0_i32, %c0_i32_0 : i32, i32
  }
  func.func @transform_3(%arg0: i32) -> (i32, i32) {
    %c0_i32 = arith.constant 0 : i32
    %c0_i32_0 = arith.constant 0 : i32
    %c0_i32_1 = arith.constant 0 : i32
    return %c0_i32, %c0_i32_0 : i32, i32
  }
  func.func @transform_4(%arg0: i32) -> (i32, i32, i32) {
    %c0_i32 = arith.constant 0 : i32
    %c0_i32_0 = arith.constant 0 : i32
    %c0_i32_1 = arith.constant 0 : i32
    return %arg0, %c0_i32, %c0_i32_0 : i32, i32, i32
  }
  func.func @transform_5(%arg0: i32) -> (i32, i32, i32) {
    %c0_i32 = arith.constant 0 : i32
    %c0_i32_0 = arith.constant 0 : i32
    %c0_i32_1 = arith.constant 0 : i32
    return %arg0, %c0_i32, %c0_i32_0 : i32, i32, i32
  }
  func.func @transform_6(%arg0: i32) -> (i32, i32, i32) {
    %c0_i32 = arith.constant 0 : i32
    %c0_i32_0 = arith.constant 0 : i32
    %c0_i32_1 = arith.constant 0 : i32
    return %arg0, %c0_i32, %c0_i32_0 : i32, i32, i32
  }
  func.func @transform_7(%arg0: i32) -> (i32, i32, i32) {
    %c0_i32 = arith.constant 0 : i32
    %c0_i32_0 = arith.constant 0 : i32
    %c0_i32_1 = arith.constant 0 : i32
    return %arg0, %c0_i32, %c0_i32_0 : i32, i32, i32
  }
}

</mosaic_0001>

<llo_original>
// kernel: two_view_forward.1
$region0: #{two_view_forward.1}
  #allocation0 [shape = 'u32[]', space=smem, size = 0x4, offset = 0x4, fixed_abs, tag = 'smem constant byte address 0x4 - core index']
  #allocation1 [shape = 'u32[144,128]{1,0:T(1,128)}', space=vmem, size = 0x12000, scoped, tag = 'internal scratch']
  %s0 = inlined_call_operand.vmem [shape: bf16[2,32,48], index: 0, kind: input, shape index: {}]
  %s1 = inlined_call_operand.vmem [shape: f32[2,32], index: 1, kind: input, shape index: {}]
  %s2 = inlined_call_operand.hbm [shape: bf16[48,768], index: 2, kind: input, shape index: {}]
  %s3 = inlined_call_operand.hbm [shape: f32[1,768], index: 3, kind: input, shape index: {}]
  %s4 = inlined_call_operand.hbm [shape: bf16[2,768,896], index: 4, kind: input, shape index: {}]
  %s5 = inlined_call_operand.hbm [shape: f32[2,1,896], index: 5, kind: input, shape index: {}]
  %s6 = inlined_call_operand.vmem [shape: f32[2,2,768], index: 6, kind: output, shape index: {0}]
  %s7 = inlined_call_operand.vmem [shape: f32[2,2,896], index: 7, kind: output, shape index: {1}]
  %8 = xla_tuple %s6, %s7
  %s9 = sld [smem:[#allocation0]]
  $region81: #{two_view_forward.1} parent=0
    _
  %s11 = ssub.s32 1, %s9
  %s12 = scalar_select 0, %s11, %s9
  $region1: #{two_view_forward.1} parent=0
    #allocation2 [shape = 'u8[73728]{0}', space=vmem, size = 0x12000, scoped, tag = 'input window, operand 2, single buffered']
    #allocation3 [shape = 's32[2]{0}', space=sflag, size = 0x8, scoped, tag = 'scoped memory for two_view_forward.1']
    #allocation4 [shape = 'u8[3072]{0}', space=vmem, size = 0xc00, scoped, tag = 'input window, operand 3, single buffered']
    #allocation5 [shape = 's32[1]{0}', space=sflag, size = 0x4, scoped, tag = 'scoped memory for two_view_forward.1']
    #allocation6 [shape = 'u8[2752512]{0}', space=vmem, size = 0x2a0000, scoped, tag = 'input window, operand 4']
    #allocation7 [shape = 'u8[7168]{0}', space=vmem, size = 0x1c00, scoped, tag = 'input window, operand 5']
    %13 = vsyncpa [#allocation3], 0
    %14 = vsyncpa [#allocation5], 0
    loop: start=0, step=1, limit=4
    $region2: #{two_view_forward.1} parent=1 // loop_pre_header
      _
    $region3: #{two_view_forward.1} parent=1 // loop_header
      %s16 = sphi 0, %s20
      %p17 = scmp.ge.s32.totalorder %s16, 4
      %s26 = sphi 0, %s28
      %s29 = sphi 0, %s26
      %s30 = sphi 0, %s29
      %s46 = sphi 0, %s30
      %s50 = sphi 0, %s50
      %s52 = sphi 0, %s50
      %s53 = sphi 0, %s52
      %s67 = sphi 0, %s53
      %s71 = sphi 0, %s71
      %s73 = sphi 0, %s71
      %s74 = sphi 0, %s73
      %s88 = sphi 0, %s74
      %s92 = sphi 0, %s92
      %s94 = sphi 0, %s92
      %s95 = sphi 0, %s94
      %s109 = sphi 0, %s95
      %s115 = sphi 0, %s117
      %s118 = sphi 0, %s115
      %s119 = sphi 0, %s118
      %s135 = sphi 0, %s119
      %s141 = sphi 0, %s143
      %s144 = sphi 0, %s141
      %s145 = sphi 0, %s144
      %s161 = sphi 0, %s145
      %s167 = sphi 0, %s169
      %s170 = sphi 0, %s167
      %s171 = sphi 0, %s170
      %s187 = sphi 0, %s171
      %s193 = sphi 0, %s195
      %s196 = sphi 0, %s193
      %s197 = sphi 0, %s196
      %s213 = sphi 0, %s197
    $region4: #{two_view_forward.1} parent=1 // loop_header_branch
      %19 = sbr.rel (%p17) target = $region8
    $region5: #{two_view_forward.1} parent=1 // loop_body
      %s21 = ssub.s32 %s16, 1
      %s22 = ssub.s32 %s16, 2
      %s23 = sadd.s32 %s16, 1
      %s24 = ssub.s32 %s16, %s23
      %p25 = scmp.eq.s32.totalorder %s24, 0
      %s27 = sadd.s32 %s26, 1
      %s28 = scalar_select %p25, %s26, %s27
      %p31 = pneg %p25
      %p32 = scmp.eq.s32.totalorder %s16, 1
      %p33 = por %p31, %p32
      %p34 = scmp.ne.s32.totalorder %s26, %s29
      %p35 = scmp.eq.s32.totalorder %s16, 0
      %p36 = por %p34, %p35
      %p37 = scmp.ne.s32.totalorder %s26, %s29
      %p38 = scmp.eq.s32.totalorder %s21, 1
      %p39 = por %p37, %p38
      %p40 = scmp.ne.s32.totalorder %s29, %s30
      %p41 = scmp.eq.s32.totalorder %s21, 0
      %p42 = por %p40, %p41
      %p43 = scmp.ne.s32.totalorder %s29, %s30
      %p44 = scmp.eq.s32.totalorder %s22, 1
      %p45 = por %p43, %p44
      %p47 = scmp.ne.s32.totalorder %s30, %s46
      %p48 = scmp.eq.s32.totalorder %s22, 0
      %p49 = por %p47, %p48
      %s51 = sadd.s32 %s50, 1
      %p54 = scmp.eq.s32.totalorder %s16, 1
      %p55 = scmp.ne.s32.totalorder %s50, %s52
      %p56 = scmp.eq.s32.totalorder %s16, 0
      %p57 = por %p55, %p56
      %p58 = scmp.ne.s32.totalorder %s50, %s52
      %p59 = scmp.eq.s32.totalorder %s21, 1
      %p60 = por %p58, %p59
      %p61 = scmp.ne.s32.totalorder %s52, %s53
      %p62 = scmp.eq.s32.totalorder %s21, 0
      %p63 = por %p61, %p62
      %p64 = scmp.ne.s32.totalorder %s52, %s53
      %p65 = scmp.eq.s32.totalorder %s22, 1
      %p66 = por %p64, %p65
      %p68 = scmp.ne.s32.totalorder %s53, %s67
      %p69 = scmp.eq.s32.totalorder %s22, 0
      %p70 = por %p68, %p69
      %s72 = sadd.s32 %s71, 1
      %p75 = scmp.eq.s32.totalorder %s16, 1
      %p76 = scmp.ne.s32.totalorder %s71, %s73
      %p77 = scmp.eq.s32.totalorder %s16, 0
      %p78 = por %p76, %p77
      %p79 = scmp.ne.s32.totalorder %s71, %s73
      %p80 = scmp.eq.s32.totalorder %s21, 1
      %p81 = por %p79, %p80
      %p82 = scmp.ne.s32.totalorder %s73, %s74
      %p83 = scmp.eq.s32.totalorder %s21, 0
      %p84 = por %p82, %p83
      %p85 = scmp.ne.s32.totalorder %s73, %s74
      %p86 = scmp.eq.s32.totalorder %s22, 1
      %p87 = por %p85, %p86
      %p89 = scmp.ne.s32.totalorder %s74, %s88
      %p90 = scmp.eq.s32.totalorder %s22, 0
      %p91 = por %p89, %p90
      %s93 = sadd.s32 %s92, 1
      %p96 = scmp.eq.s32.totalorder %s16, 1
      %p97 = scmp.ne.s32.totalorder %s92, %s94
      %p98 = scmp.eq.s32.totalorder %s16, 0
      %p99 = por %p97, %p98
      %p100 = scmp.ne.s32.totalorder %s92, %s94
      %p101 = scmp.eq.s32.totalorder %s21, 1
      %p102 = por %p100, %p101
      %p103 = scmp.ne.s32.totalorder %s94, %s95
      %p104 = scmp.eq.s32.totalorder %s21, 0
      %p105 = por %p103, %p104
      %p106 = scmp.ne.s32.totalorder %s94, %s95
      %p107 = scmp.eq.s32.totalorder %s22, 1
      %p108 = por %p106, %p107
      %p110 = scmp.ne.s32.totalorder %s95, %s109
      %p111 = scmp.eq.s32.totalorder %s22, 0
      %p112 = por %p110, %p111
      %s113 = ssub.s32 %s16, %s23
      %p114 = scmp.eq.s32.totalorder %s113, 0
      %s116 = sadd.s32 %s115, 1
      %s117 = scalar_select %p114, %s115, %s116
      %p120 = pneg %p114
      %p121 = scmp.eq.s32.totalorder %s16, 1
      %p122 = por %p120, %p121
      %p123 = scmp.ne.s32.totalorder %s115, %s118
      %p124 = scmp.eq.s32.totalorder %s16, 0
      %p125 = por %p123, %p124
      %p126 = scmp.ne.s32.totalorder %s115, %s118
      %p127 = scmp.eq.s32.totalorder %s21, 1
      %p128 = por %p126, %p127
      %p129 = scmp.ne.s32.totalorder %s118, %s119
      %p130 = scmp.eq.s32.totalorder %s21, 0
      %p131 = por %p129, %p130
      %p132 = scmp.ne.s32.totalorder %s118, %s119
      %p133 = scmp.eq.s32.totalorder %s22, 1
      %p134 = por %p132, %p133
      %p136 = scmp.ne.s32.totalorder %s119, %s135
      %p137 = scmp.eq.s32.totalorder %s22, 0
      %p138 = por %p136, %p137
      %s139 = ssub.s32 %s16, %s23
      %p140 = scmp.eq.s32.totalorder %s139, 0
      %s142 = sadd.s32 %s141, 1
      %s143 = scalar_select %p140, %s141, %s142
      %p146 = pneg %p140
      %p147 = scmp.eq.s32.totalorder %s16, 1
      %p148 = por %p146, %p147
      %p149 = scmp.ne.s32.totalorder %s141, %s144
      %p150 = scmp.eq.s32.totalorder %s16, 0
      %p151 = por %p149, %p150
      %p152 = scmp.ne.s32.totalorder %s141, %s144
      %p153 = scmp.eq.s32.totalorder %s21, 1
      %p154 = por %p152, %p153
      %p155 = scmp.ne.s32.totalorder %s144, %s145
      %p156 = scmp.eq.s32.totalorder %s21, 0
      %p157 = por %p155, %p156
      %p158 = scmp.ne.s32.totalorder %s144, %s145
      %p159 = scmp.eq.s32.totalorder %s22, 1
      %p160 = por %p158, %p159
      %p162 = scmp.ne.s32.totalorder %s145, %s161
      %p163 = scmp.eq.s32.totalorder %s22, 0
      %p164 = por %p162, %p163
      %s165 = ssub.s32 %s16, %s23
      %p166 = scmp.eq.s32.totalorder %s165, 0
      %s168 = sadd.s32 %s167, 1
      %s169 = scalar_select %p166, %s167, %s168
      %p172 = pneg %p166
      %p173 = scmp.eq.s32.totalorder %s16, 1
      %p174 = por %p172, %p173
      %p175 = scmp.ne.s32.totalorder %s167, %s170
      %p176 = scmp.eq.s32.totalorder %s16, 0
      %p177 = por %p175, %p176
      %p178 = scmp.ne.s32.totalorder %s167, %s170
      %p179 = scmp.eq.s32.totalorder %s21, 1
      %p180 = por %p178, %p179
      %p181 = scmp.ne.s32.totalorder %s170, %s171
      %p182 = scmp.eq.s32.totalorder %s21, 0
      %p183 = por %p181, %p182
      %p184 = scmp.ne.s32.totalorder %s170, %s171
      %p185 = scmp.eq.s32.totalorder %s22, 1
      %p186 = por %p184, %p185
      %p188 = scmp.ne.s32.totalorder %s171, %s187
      %p189 = scmp.eq.s32.totalorder %s22, 0
      %p190 = por %p188, %p189
      %s191 = ssub.s32 %s16, %s23
      %p192 = scmp.eq.s32.totalorder %s191, 0
      %s194 = sadd.s32 %s193, 1
      %s195 = scalar_select %p192, %s193, %s194
      %p198 = pneg %p192
      %p199 = scmp.eq.s32.totalorder %s16, 1
      %p200 = por %p198, %p199
      %p201 = scmp.ne.s32.totalorder %s193, %s196
      %p202 = scmp.eq.s32.totalorder %s16, 0
      %p203 = por %p201, %p202
      %p204 = scmp.ne.s32.totalorder %s193, %s196
      %p205 = scmp.eq.s32.totalorder %s21, 1
      %p206 = por %p204, %p205
      %p207 = scmp.ne.s32.totalorder %s196, %s197
      %p208 = scmp.eq.s32.totalorder %s21, 0
      %p209 = por %p207, %p208
      %p210 = scmp.ne.s32.totalorder %s196, %s197
      %p211 = scmp.eq.s32.totalorder %s22, 1
      %p212 = por %p210, %p211
      %p214 = scmp.ne.s32.totalorder %s197, %s213
      %p215 = scmp.eq.s32.totalorder %s22, 0
      %p216 = por %p214, %p215
      %p217 = scmp.le.s32.totalorder 1, %s16
      %p218 = scmp.lt.s32.totalorder %s16, 3
      %p219 = pnand %p217, %p218
      %p220 = pneg %p219
      // Predicated region
      $region9: #{two_view_forward.1} parent=5 // pred_check
        _
      $region10: #{two_view_forward.1} parent=5 // pred_check_branch
        %222 = sbr.rel (%p219) target = $region12
      $region11: #{two_view_forward.1} parent=5 // pred_region
        %s223 = ssub.s32 %s16, 1
        // Predicated region
        $region13: #{two_view_forward.1} parent=11 // pred_check
          %p224 = pneg %p63
        $region14: #{two_view_forward.1} parent=11 // pred_check_branch
          %226 = sbr.rel (%p224) target = $region16
        $region15: #{two_view_forward.1} parent=11 // pred_region
          _
        $region16: #{two_view_forward.1} parent=11 // pred_fallthru
          _
        // Predicated region
        $region17: #{two_view_forward.1} parent=11 // pred_check
          %p227 = pneg %p84
        $region18: #{two_view_forward.1} parent=11 // pred_check_branch
          %229 = sbr.rel (%p227) target = $region20
        $region19: #{two_view_forward.1} parent=11 // pred_region
          %s231 = ssub.s32 2304, 2304
          %232 = vsyncadd [#allocation3], %s231
          %s233 = sshll.u32 [#allocation2], 4
          %s234 = int_to_ptr.vmem [resolvable:$true] %s233
          %239 = dma.hbm_to_vmem [thread:$0]  %s2, 2304, %s234, [#allocation3], 384, 384, 24
        $region20: #{two_view_forward.1} parent=11 // pred_fallthru
          _
        // Predicated region
        $region21: #{two_view_forward.1} parent=11 // pred_check
          %p240 = pneg %p105
        $region22: #{two_view_forward.1} parent=11 // pred_check_branch
          %242 = sbr.rel (%p240) target = $region24
        $region23: #{two_view_forward.1} parent=11 // pred_region
          %s244 = ssub.s32 96, 96
          %245 = vsyncadd [#allocation5], %s244
          %s247 = sshll.u32 [#allocation4], 4
          %s248 = int_to_ptr.vmem [resolvable:$true] %s247
          %250 = dma.hbm_to_vmem [thread:$0]  %s3, 96, %s248, [#allocation5]
        $region24: #{two_view_forward.1} parent=11 // pred_fallthru
          _
      $region12: #{two_view_forward.1} parent=5 // pred_fallthru
        _
      %p251 = scmp.lt.s32.totalorder %s16, 2
      // Predicated region
      $region25: #{two_view_forward.1} parent=5 // pred_check
        %p252 = pneg %p251
      $region26: #{two_view_forward.1} parent=5 // pred_check_branch
        %254 = sbr.rel (%p252) target = $region28
      $region27: #{two_view_forward.1} parent=5 // pred_region
        // Predicated region
        $region29: #{two_view_forward.1} parent=27 // pred_check
          %p255 = pneg %p36
        $region30: #{two_view_forward.1} parent=27 // pred_check_branch
          %257 = sbr.rel (%p255) target = $region32
        $region31: #{two_view_forward.1} parent=27 // pred_region
          %p258 = scmp.lt.s32.totalorder %s16, 1
          %s259 = scalar_select %p258, %s16, 1
          %s260 = smul.addr %s259, 4
          %s261 = smul.addr %s260, 4
          %s262 = scalar_lea.vmem %s0, %s261
        $region32: #{two_view_forward.1} parent=27 // pred_fallthru
          _
        // Predicated region
        $region33: #{two_view_forward.1} parent=27 // pred_check
          %p263 = pneg %p125
        $region34: #{two_view_forward.1} parent=27 // pred_check_branch
          %265 = sbr.rel (%p263) target = $region36
        $region35: #{two_view_forward.1} parent=27 // pred_region
          %s266 = sand.u32 %s16, 1
          %s267 = scalar_lea.sflag [#allocation3], %s266
          %s268 = sand.u32 %s115, 1
          %s269 = smul.addr %s268, 2688
          %s270 = scalar_lea.vmem [#allocation6], %s269
          %s272 = ssub.s32 43008, 43008
          %273 = vsyncadd %s267, %s272
          %s274 = smul.addr %s16, 672
          %s275 = smul.addr %s274, 64
          %s276 = scalar_lea.hbm %s4, %s275
          %s277 = sshll.u32 %s270, 4
          %s278 = int_to_ptr.vmem [resolvable:$true] %s277
          %283 = dma.hbm_to_vmem [thread:$0]  %s276, 43008, %s278, %s267, 448, 448, 28
        $region36: #{two_view_forward.1} parent=27 // pred_fallthru
          _
        // Predicated region
        $region37: #{two_view_forward.1} parent=27 // pred_check
          %p284 = pneg %p151
        $region38: #{two_view_forward.1} parent=27 // pred_check_branch
          %286 = sbr.rel (%p284) target = $region40
        $region39: #{two_view_forward.1} parent=27 // pred_region
          %s287 = sand.u32 %s16, 1
          %s288 = scalar_lea.sflag [#allocation3], %s287
          %s289 = sand.u32 %s141, 1
          %s290 = smul.addr %s289, 7
          %s291 = scalar_lea.vmem [#allocation7], %s290
          %s293 = ssub.s32 112, 112
          %294 = vsyncadd %s288, %s293
          %s295 = smul.addr %s16, 7
          %s296 = smul.addr %s295, 16
          %s297 = scalar_lea.hbm %s5, %s296
          %s299 = sshll.u32 %s291, 4
          %s300 = int_to_ptr.vmem [resolvable:$true] %s299
          %302 = dma.hbm_to_vmem [thread:$0]  %s297, 112, %s300, %s288
        $region40: #{two_view_forward.1} parent=27 // pred_fallthru
          _
      $region28: #{two_view_forward.1} parent=5 // pred_fallthru
        _
      %p303 = scmp.le.s32.totalorder 1, %s16
      %p304 = scmp.lt.s32.totalorder %s16, 3
      %p305 = pnand %p303, %p304
      %p306 = pneg %p305
      // Predicated region
      $region41: #{two_view_forward.1} parent=5 // pred_check
        _
      $region42: #{two_view_forward.1} parent=5 // pred_check_branch
        %308 = sbr.rel (%p305) target = $region44
      $region43: #{two_view_forward.1} parent=5 // pred_region
        %s309 = ssub.s32 %s16, 1
        // Predicated region
        $region45: #{two_view_forward.1} parent=43 // pred_check
          %p310 = pneg %p84
        $region46: #{two_view_forward.1} parent=43 // pred_check_branch
          %312 = sbr.rel (%p310) target = $region48
        $region47: #{two_view_forward.1} parent=43 // pred_region
          %313 = dma.done [#allocation3], 2304
        $region48: #{two_view_forward.1} parent=43 // pred_fallthru
          _
        // Predicated region
        $region49: #{two_view_forward.1} parent=43 // pred_check
          %p314 = pneg %p105
        $region50: #{two_view_forward.1} parent=43 // pred_check_branch
          %316 = sbr.rel (%p314) target = $region52
        $region51: #{two_view_forward.1} parent=43 // pred_region
          %317 = dma.done [#allocation5], 96
        $region52: #{two_view_forward.1} parent=43 // pred_fallthru
          _
        %s318 = sand.u32 %s21, 1
        %s319 = scalar_lea.sflag [#allocation3], %s318
        %s320 = sand.u32 %s118, 1
        %s321 = smul.addr %s320, 2688
        %s322 = scalar_lea.vmem [#allocation6], %s321
        // Predicated region
        $region53: #{two_view_forward.1} parent=43 // pred_check
          %p323 = pneg %p131
        $region54: #{two_view_forward.1} parent=43 // pred_check_branch
          %325 = sbr.rel (%p323) target = $region56
        $region55: #{two_view_forward.1} parent=43 // pred_region
          %326 = dma.done %s319, 43008
        $region56: #{two_view_forward.1} parent=43 // pred_fallthru
          _
        %s327 = sand.u32 %s21, 1
        %s328 = scalar_lea.sflag [#allocation3], %s327
        %s329 = sand.u32 %s144, 1
        %s330 = smul.addr %s329, 7
        %s331 = scalar_lea.vmem [#allocation7], %s330
        // Predicated region
        $region57: #{two_view_forward.1} parent=43 // pred_check
          %p332 = pneg %p157
        $region58: #{two_view_forward.1} parent=43 // pred_check_branch
          %334 = sbr.rel (%p332) target = $region60
        $region59: #{two_view_forward.1} parent=43 // pred_region
          %335 = dma.done %s328, 112
        $region60: #{two_view_forward.1} parent=43 // pred_fallthru
          _
        %p336 = scmp.lt.s32.totalorder %s21, 1
        %s337 = scalar_select %p336, %s21, 1
        %s338 = smul.addr %s337, 4
        %s339 = smul.addr %s338, 4
        %s340 = scalar_lea.vmem %s0, %s339
        %p341 = pneg %p42
        %p342 = pneg %p39
        %p343 = pneg %p63
        %p344 = pneg %p60
        %p345 = pneg %p84
        %p346 = pneg %p81
        %p347 = pneg %p105
        %p348 = pneg %p102
        %s349 = sand.u32 %s21, 1
        %s350 = scalar_lea.sflag [#allocation3], %s349
        %s351 = sand.u32 %s118, 1
        %s352 = smul.addr %s351, 2688
        %s353 = scalar_lea.vmem [#allocation6], %s352
        %p354 = pneg %p131
        %p355 = pneg %p128
        %s356 = sand.u32 %s21, 1
        %s357 = scalar_lea.sflag [#allocation3], %s356
        %s358 = sand.u32 %s144, 1
        %s359 = smul.addr %s358, 7
        %s360 = scalar_lea.vmem [#allocation7], %s359
        %p361 = pneg %p157
        %p362 = pneg %p154
        %p363 = pneg %p183
        %p364 = pneg %p180
        %p365 = scmp.lt.s32.totalorder %s21, 1
        %s366 = scalar_select %p365, %s21, 1
        %s367 = smul.addr %s366, 6
        %s368 = smul.addr %s367, 2
        %s369 = scalar_lea.vmem %s6, %s368
        %p370 = pneg %p209
        %p371 = pneg %p206
        %p372 = scmp.lt.s32.totalorder %s21, 1
        %s373 = scalar_select %p372, %s21, 1
        %s374 = smul.addr %s373, 7
        %s375 = smul.addr %s374, 2
        %s376 = scalar_lea.vmem %s7, %s375
        %p377 = scmp.lt.s32.totalorder %s21, 1
        %s378 = scalar_select %p377, %s21, 1
        %s379 = smul.addr %s378, 4
        %s380 = smul.addr %s379, 4
        %s381 = scalar_lea.vmem %s0, %s380
        %p382 = scmp.lt.s32.totalorder %s21, 1
        %s383 = scalar_select %p382, %s21, 1
        %s384 = smul.addr %s383, 6
        %s385 = smul.addr %s384, 2
        %s386 = scalar_lea.vmem %s6, %s385
        %p387 = scmp.lt.s32.totalorder %s21, 1
        %s388 = scalar_select %p387, %s21, 1
        %s389 = smul.addr %s388, 7
        %s390 = smul.addr %s389, 2
        %s391 = scalar_lea.vmem %s7, %s390
        %v393 = vld [vmem:[%s381] sm:$0xf]
        %v394 = vld [vmem:[%s381 + $0x4] sm:$0xf]
        %v395 = vld [vmem:[%s381 + $0x8] sm:$0xf]
        %v396 = vld [vmem:[%s381 + $0xc] sm:$0xf]
        %v397 = vld [vmem:[#allocation2] sm:$0xff]
        %v398 = vld [vmem:[#allocation2 + $0x8] sm:$0xff]
        %v399 = vld [vmem:[#allocation2 + $0x10] sm:$0xff]
        %v400 = vld [vmem:[#allocation2 + $0x18] sm:$0xff]
        %v401 = vld [vmem:[#allocation2 + $0x20] sm:$0xff]
        %v402 = vld [vmem:[#allocation2 + $0x28] sm:$0xff]
        %v403 = vld [vmem:[#allocation2 + $0x30] sm:$0xff]
        %v404 = vld [vmem:[#allocation2 + $0x38] sm:$0xff]
        %v405 = vld [vmem:[#allocation2 + $0x40] sm:$0xff]
        %v406 = vld [vmem:[#allocation2 + $0x48] sm:$0xff]
        %v407 = vld [vmem:[#allocation2 + $0x50] sm:$0xff]
        %v408 = vld [vmem:[#allocation2 + $0x58] sm:$0xff]
        %v409 = vld [vmem:[#allocation2 + $0x60] sm:$0xff]
        %v410 = vld [vmem:[#allocation2 + $0x68] sm:$0xff]
        %v411 = vld [vmem:[#allocation2 + $0x70] sm:$0xff]
        %v412 = vld [vmem:[#allocation2 + $0x78] sm:$0xff]
        %v413 = vld [vmem:[#allocation2 + $0x80] sm:$0xff]
        %v414 = vld [vmem:[#allocation2 + $0x88] sm:$0xff]
        %v415 = vld [vmem:[#allocation4] sm:$0x3f]
        %v417 = vlaneseq
        %v418 = vshrl.u32 %v417, 7
        %v419 = vsub.s32 0, %v418
        %v420 = vrot.slane %v415, %v419
        %v421 = vlaneseq
        %v422 = vshrl.u32 %v421, 7
        %v423 = vsub.s32 1, %v422
        %v424 = vrot.slane %v415, %v423
        %v425 = vlaneseq
        %v426 = vshrl.u32 %v425, 7
        %v427 = vsub.s32 2, %v426
        %v428 = vrot.slane %v415, %v427
        %v429 = vlaneseq
        %v430 = vshrl.u32 %v429, 7
        %v431 = vsub.s32 3, %v430
        %v432 = vrot.slane %v415, %v431
        %v433 = vlaneseq
        %v434 = vshrl.u32 %v433, 7
        %v435 = vsub.s32 4, %v434
        %v436 = vrot.slane %v415, %v435
        %v437 = vlaneseq
        %v438 = vshrl.u32 %v437, 7
        %v439 = vsub.s32 5, %v438
        %v440 = vrot.slane %v415, %v439
        %v451 = vunpack.c.l.b16 %v393
        %v452 = vunpack.c.l.b16 %v394
        %v453 = vunpack.c.l.b16 %v395
        %v454 = vunpack.c.l.b16 %v396
        %v455 = vpack.c.b16 %v452, %v451
        %v456 = vpack.c.b16 %v454, %v453
        %v475 = vunpack.c.l.b16 %v397
        %v476 = vunpack.c.h.b16 %v397
        %v477 = vunpack.c.l.b16 %v398
        %v478 = vunpack.c.h.b16 %v398
        %v479 = vunpack.c.l.b16 %v399
        %v480 = vunpack.c.h.b16 %v399
        %v481 = vunpack.c.l.b16 %v400
        %v482 = vunpack.c.h.b16 %v400
        %v483 = vunpack.c.l.b16 %v401
        %v484 = vunpack.c.h.b16 %v401
        %v485 = vunpack.c.l.b16 %v402
        %v486 = vunpack.c.h.b16 %v402
        %v487 = vunpack.c.l.b16 %v403
        %v488 = vunpack.c.h.b16 %v403
        %v489 = vunpack.c.l.b16 %v404
        %v490 = vunpack.c.h.b16 %v404
        %v491 = vunpack.c.l.b16 %v405
        %v492 = vunpack.c.h.b16 %v405
        %v493 = vunpack.c.l.b16 %v406
        %v494 = vunpack.c.h.b16 %v406
        %v495 = vunpack.c.l.b16 %v407
        %v496 = vunpack.c.h.b16 %v407
        %v497 = vunpack.c.l.b16 %v408
        %v498 = vunpack.c.h.b16 %v408
        %v499 = vunpack.c.l.b16 %v409
        %v500 = vunpack.c.h.b16 %v409
        %v501 = vunpack.c.l.b16 %v410
        %v502 = vunpack.c.h.b16 %v410
        %v503 = vunpack.c.l.b16 %v411
        %v504 = vunpack.c.h.b16 %v411
        %v505 = vunpack.c.l.b16 %v412
        %v506 = vunpack.c.h.b16 %v412
        %v507 = vunpack.c.l.b16 %v413
        %v508 = vunpack.c.h.b16 %v413
        %v509 = vunpack.c.l.b16 %v414
        %v510 = vunpack.c.h.b16 %v414
        %v511 = vpack.c.b16 %v481, %v475
        %v512 = vpack.c.b16 %v482, %v476
        %v513 = vpack.c.b16 %v483, %v477
        %v514 = vpack.c.b16 %v484, %v478
        %v515 = vpack.c.b16 %v485, %v479
        %v516 = vpack.c.b16 %v486, %v480
        %v517 = vpack.c.b16 %v493, %v487
        %v518 = vpack.c.b16 %v494, %v488
        %v519 = vpack.c.b16 %v495, %v489
        %v520 = vpack.c.b16 %v496, %v490
        %v521 = vpack.c.b16 %v497, %v491
        %v522 = vpack.c.b16 %v498, %v492
        %v523 = vpack.c.b16 %v505, %v499
        %v524 = vpack.c.b16 %v506, %v500
        %v525 = vpack.c.b16 %v507, %v501
        %v526 = vpack.c.b16 %v508, %v502
        %v527 = vpack.c.b16 %v509, %v503
        %v528 = vpack.c.b16 %v510, %v504
        %vm547 = vcmask 392192
        %v549 = vsel %vm547, %v455, 0
        %v552 = vsel %vm547, %v456, 0
        %554 = vmatprep.subr.bf16.mxu0 %v512
        %555 = vmatpush1.bf16.msra.mxu0 %v511
        %556 = vmatprep.subr.bf16.mxu0 %v518
        %557 = vmatpush1.bf16.msra.mxu0 %v517
        %558 = vmatprep.subr.bf16.mxu0 %v524
        %559 = vmatpush1.bf16.msra.mxu0 %v523
        %560 = vmatprep.subr.bf16.mxu0 0
        %561 = vmatpush1.bf16.msra.mxu0 0
        %562 = vmatprep.subr.bf16.mxu0 0
        %563 = vmatpush1.bf16.msra.mxu0 0
        %564 = vmatprep.subr.bf16.mxu0 0
        %565 = vmatpush1.bf16.msra.mxu0 0
        %566 = vmatprep.subr.bf16.mxu0 0
        %567 = vmatpush1.bf16.msra.mxu0 0
        %568 = vmatprep.subr.bf16.mxu0 0
        %569 = vmatpush1.bf16.msra.mxu0 0
        %570 = vmatprep.subr.bf16.mxu0 0
        %571 = vmatpush1.bf16.msra.mxu0 0
        %572 = vmatprep.subr.bf16.mxu0 0
        %573 = vmatpush1.bf16.msra.mxu0 0
        %574 = vmatprep.subr.bf16.mxu0 0
        %575 = vmatpush1.bf16.msra.mxu0 0
        %576 = vmatprep.subr.bf16.mxu0 0
        %577 = vmatpush1.bf16.msra.mxu0 0
        %578 = vmatprep.subr.bf16.mxu0 0
        %579 = vmatpush1.bf16.msra.mxu0 0
        %580 = vmatprep.subr.bf16.mxu0 0
        %581 = vmatpush1.bf16.msra.mxu0 0
        %582 = vmatprep.subr.bf16.mxu0 0
        %583 = vmatpush1.bf16.msra.mxu0 0
        %584 = vmatprep.subr.bf16.mxu0 0
        %585 = vmatpush1.bf16.msra.mxu0 0
        %586 = vmatprep.mubr.bf16.mxu0 0
        %587 = vmatmul.mubr.bf16.gmra.mrb[0].mxu0 %v549
        %v588 = vpop.f32.mrb[0].mxu0
        %v589 = vadd.f32 %v420, %v588
        %v590 = vpop.f32.mrb[0].mxu0
        %v591 = vadd.f32 %v424, %v590
        %v592 = vpop.f32.mrb[0].mxu0
        %v593 = vadd.f32 %v420, %v592
        %v594 = vpop.f32.mrb[0].mxu0
        %v595 = vadd.f32 %v424, %v594
        %596 = vmatprep.mubr.bf16.mxu0 0
        %597 = vmatmul.mubr.bf16.gmra.mrb[0].mxu0 %v552
        %v598 = vpop.f32.mrb[0].mxu0
        %v599 = vadd.f32 %v420, %v598
        %v600 = vpop.f32.mrb[0].mxu0
        %v601 = vadd.f32 %v424, %v600
        %v602 = vpop.f32.mrb[0].mxu0
        %v603 = vadd.f32 %v420, %v602
        %v604 = vpop.f32.mrb[0].mxu0
        %v605 = vadd.f32 %v424, %v604
        %606 = vdwg.mxu0
        %607 = vmatprep.subr.bf16.mxu0 %v514
        %608 = vmatpush1.bf16.msra.mxu0 %v513
        %609 = vmatprep.subr.bf16.mxu0 %v520
        %610 = vmatpush1.bf16.msra.mxu0 %v519
        %611 = vmatprep.subr.bf16.mxu0 %v526
        %612 = vmatpush1.bf16.msra.mxu0 %v525
        %613 = vmatprep.subr.bf16.mxu0 0
        %614 = vmatpush1.bf16.msra.mxu0 0
        %615 = vmatprep.subr.bf16.mxu0 0
        %616 = vmatpush1.bf16.msra.mxu0 0
        %617 = vmatprep.subr.bf16.mxu0 0
        %618 = vmatpush1.bf16.msra.mxu0 0
        %619 = vmatprep.subr.bf16.mxu0 0
        %620 = vmatpush1.bf16.msra.mxu0 0
        %621 = vmatprep.subr.bf16.mxu0 0
        %622 = vmatpush1.bf16.msra.mxu0 0
        %623 = vmatprep.subr.bf16.mxu0 0
        %624 = vmatpush1.bf16.msra.mxu0 0
        %625 = vmatprep.subr.bf16.mxu0 0
        %626 = vmatpush1.bf16.msra.mxu0 0
        %627 = vmatprep.subr.bf16.mxu0 0
        %628 = vmatpush1.bf16.msra.mxu0 0
        %629 = vmatprep.subr.bf16.mxu0 0
        %630 = vmatpush1.bf16.msra.mxu0 0
        %631 = vmatprep.subr.bf16.mxu0 0
        %632 = vmatpush1.bf16.msra.mxu0 0
        %633 = vmatprep.subr.bf16.mxu0 0
        %634 = vmatpush1.bf16.msra.mxu0 0
        %635 = vmatprep.subr.bf16.mxu0 0
        %636 = vmatpush1.bf16.msra.mxu0 0
        %637 = vmatprep.subr.bf16.mxu0 0
        %638 = vmatpush1.bf16.msra.mxu0 0
        %639 = vmatprep.mubr.bf16.mxu0 0
        %640 = vmatmul.mubr.bf16.gmra.mrb[0].mxu0 %v549
        %v641 = vpop.f32.mrb[0].mxu0
        %v642 = vadd.f32 %v428, %v641
        %v643 = vpop.f32.mrb[0].mxu0
        %v644 = vadd.f32 %v432, %v643
        %v645 = vpop.f32.mrb[0].mxu0
        %v646 = vadd.f32 %v428, %v645
        %v647 = vpop.f32.mrb[0].mxu0
        %v648 = vadd.f32 %v432, %v647
        %649 = vmatprep.mubr.bf16.mxu0 0
        %650 = vmatmul.mubr.bf16.gmra.mrb[0].mxu0 %v552
        %v651 = vpop.f32.mrb[0].mxu0
        %v652 = vadd.f32 %v428, %v651
        %v653 = vpop.f32.mrb[0].mxu0
        %v654 = vadd.f32 %v432, %v653
        %v655 = vpop.f32.mrb[0].mxu0
        %v656 = vadd.f32 %v428, %v655
        %v657 = vpop.f32.mrb[0].mxu0
        %v658 = vadd.f32 %v432, %v657
        %659 = vdwg.mxu0
        %660 = vmatprep.subr.bf16.mxu0 %v516
        %661 = vmatpush1.bf16.msra.mxu0 %v515
        %662 = vmatprep.subr.bf16.mxu0 %v522
        %663 = vmatpush1.bf16.msra.mxu0 %v521
        %664 = vmatprep.subr.bf16.mxu0 %v528
        %665 = vmatpush1.bf16.msra.mxu0 %v527
        %666 = vmatprep.subr.bf16.mxu0 0
        %667 = vmatpush1.bf16.msra.mxu0 0
        %668 = vmatprep.subr.bf16.mxu0 0
        %669 = vmatpush1.bf16.msra.mxu0 0
        %670 = vmatprep.subr.bf16.mxu0 0
        %671 = vmatpush1.bf16.msra.mxu0 0
        %672 = vmatprep.subr.bf16.mxu0 0
        %673 = vmatpush1.bf16.msra.mxu0 0
        %674 = vmatprep.subr.bf16.mxu0 0
        %675 = vmatpush1.bf16.msra.mxu0 0
        %676 = vmatprep.subr.bf16.mxu0 0
        %677 = vmatpush1.bf16.msra.mxu0 0
        %678 = vmatprep.subr.bf16.mxu0 0
        %679 = vmatpush1.bf16.msra.mxu0 0
        %680 = vmatprep.subr.bf16.mxu0 0
        %681 = vmatpush1.bf16.msra.mxu0 0
        %682 = vmatprep.subr.bf16.mxu0 0
        %683 = vmatpush1.bf16.msra.mxu0 0
        %684 = vmatprep.subr.bf16.mxu0 0
        %685 = vmatpush1.bf16.msra.mxu0 0
        %686 = vmatprep.subr.bf16.mxu0 0
        %687 = vmatpush1.bf16.msra.mxu0 0
        %688 = vmatprep.subr.bf16.mxu0 0
        %689 = vmatpush1.bf16.msra.mxu0 0
        %690 = vmatprep.subr.bf16.mxu0 0
        %691 = vmatpush1.bf16.msra.mxu0 0
        %692 = vmatprep.mubr.bf16.mxu0 0
        %693 = vmatmul.mubr.bf16.gmra.mrb[0].mxu0 %v549
        %v694 = vpop.f32.mrb[0].mxu0
        %v695 = vadd.f32 %v436, %v694
        %v696 = vpop.f32.mrb[0].mxu0
        %v697 = vadd.f32 %v440, %v696
        %v698 = vpop.f32.mrb[0].mxu0
        %v699 = vadd.f32 %v436, %v698
        %v700 = vpop.f32.mrb[0].mxu0
        %v701 = vadd.f32 %v440, %v700
        %702 = vmatprep.mubr.bf16.mxu0 0
        %703 = vmatmul.mubr.bf16.gmra.mrb[0].mxu0 %v552
        %v704 = vpop.f32.mrb[0].mxu0
        %v705 = vadd.f32 %v436, %v704
        %v706 = vpop.f32.mrb[0].mxu0
        %v707 = vadd.f32 %v440, %v706
        %v708 = vpop.f32.mrb[0].mxu0
        %v709 = vadd.f32 %v436, %v708
        %v710 = vpop.f32.mrb[0].mxu0
        %v711 = vadd.f32 %v440, %v710
        %712 = vdwg.mxu0
        %v713 = vmul.f32 %v589, %v589
        %v714 = vmul.f32 %v591, %v591
        %v715 = vmul.f32 %v642, %v642
        %v716 = vmul.f32 %v644, %v644
        %v717 = vmul.f32 %v695, %v695
        %v718 = vmul.f32 %v697, %v697
        %v719 = vmul.f32 %v593, %v593
        %v720 = vmul.f32 %v595, %v595
        %v721 = vmul.f32 %v646, %v646
        %v722 = vmul.f32 %v648, %v648
        %v723 = vmul.f32 %v699, %v699
        %v724 = vmul.f32 %v701, %v701
        %v725 = vmul.f32 %v599, %v599
        %v726 = vmul.f32 %v601, %v601
        %v727 = vmul.f32 %v652, %v652
        %v728 = vmul.f32 %v654, %v654
        %v729 = vmul.f32 %v705, %v705
        %v730 = vmul.f32 %v707, %v707
        %v731 = vmul.f32 %v603, %v603
        %v732 = vmul.f32 %v605, %v605
        %v733 = vmul.f32 %v656, %v656
        %v734 = vmul.f32 %v658, %v658
        %v735 = vmul.f32 %v709, %v709
        %v736 = vmul.f32 %v711, %v711
        %v737 = vmul.f32 %v589, %v713
        %v738 = vmul.f32 %v591, %v714
        %v739 = vmul.f32 %v642, %v715
        %v740 = vmul.f32 %v644, %v716
        %v741 = vmul.f32 %v695, %v717
        %v742 = vmul.f32 %v697, %v718
        %v743 = vmul.f32 %v593, %v719
        %v744 = vmul.f32 %v595, %v720
        %v745 = vmul.f32 %v646, %v721
        %v746 = vmul.f32 %v648, %v722
        %v747 = vmul.f32 %v699, %v723
        %v748 = vmul.f32 %v701, %v724
        %v749 = vmul.f32 %v599, %v725
        %v750 = vmul.f32 %v601, %v726
        %v751 = vmul.f32 %v652, %v727
        %v752 = vmul.f32 %v654, %v728
        %v753 = vmul.f32 %v705, %v729
        %v754 = vmul.f32 %v707, %v730
        %v755 = vmul.f32 %v603, %v731
        %v756 = vmul.f32 %v605, %v732
        %v757 = vmul.f32 %v656, %v733
        %v758 = vmul.f32 %v658, %v734
        %v759 = vmul.f32 %v709, %v735
        %v760 = vmul.f32 %v711, %v736
        %v761 = vmul.f32 %v737, 0.044715
        %v762 = vmul.f32 %v738, 0.044715
        %v763 = vmul.f32 %v739, 0.044715
        %v764 = vmul.f32 %v740, 0.044715
        %v765 = vmul.f32 %v741, 0.044715
        %v766 = vmul.f32 %v742, 0.044715
        %v767 = vmul.f32 %v743, 0.044715
        %v768 = vmul.f32 %v744, 0.044715
        %v769 = vmul.f32 %v745, 0.044715
        %v770 = vmul.f32 %v746, 0.044715
        %v771 = vmul.f32 %v747, 0.044715
        %v772 = vmul.f32 %v748, 0.044715
        %v773 = vmul.f32 %v749, 0.044715
        %v774 = vmul.f32 %v750, 0.044715
        %v775 = vmul.f32 %v751, 0.044715
        %v776 = vmul.f32 %v752, 0.044715
        %v777 = vmul.f32 %v753, 0.044715
        %v778 = vmul.f32 %v754, 0.044715
        %v779 = vmul.f32 %v755, 0.044715
        %v780 = vmul.f32 %v756, 0.044715
        %v781 = vmul.f32 %v757, 0.044715
        %v782 = vmul.f32 %v758, 0.044715
        %v783 = vmul.f32 %v759, 0.044715
        %v784 = vmul.f32 %v760, 0.044715
        %v785 = vadd.f32 %v589, %v761
        %v786 = vadd.f32 %v591, %v762
        %v787 = vadd.f32 %v642, %v763
        %v788 = vadd.f32 %v644, %v764
        %v789 = vadd.f32 %v695, %v765
        %v790 = vadd.f32 %v697, %v766
        %v791 = vadd.f32 %v593, %v767
        %v792 = vadd.f32 %v595, %v768
        %v793 = vadd.f32 %v646, %v769
        %v794 = vadd.f32 %v648, %v770
        %v795 = vadd.f32 %v699, %v771
        %v796 = vadd.f32 %v701, %v772
        %v797 = vadd.f32 %v599, %v773
        %v798 = vadd.f32 %v601, %v774
        %v799 = vadd.f32 %v652, %v775
        %v800 = vadd.f32 %v654, %v776
        %v801 = vadd.f32 %v705, %v777
        %v802 = vadd.f32 %v707, %v778
        %v803 = vadd.f32 %v603, %v779
        %v804 = vadd.f32 %v605, %v780
        %v805 = vadd.f32 %v656, %v781
        %v806 = vadd.f32 %v658, %v782
        %v807 = vadd.f32 %v709, %v783
        %v808 = vadd.f32 %v711, %v784
        %v809 = vmul.f32 %v785, 0.7978846
        %v810 = vmul.f32 %v786, 0.7978846
        %v811 = vmul.f32 %v787, 0.7978846
        %v812 = vmul.f32 %v788, 0.7978846
        %v813 = vmul.f32 %v789, 0.7978846
        %v814 = vmul.f32 %v790, 0.7978846
        %v815 = vmul.f32 %v791, 0.7978846
        %v816 = vmul.f32 %v792, 0.7978846
        %v817 = vmul.f32 %v793, 0.7978846
        %v818 = vmul.f32 %v794, 0.7978846
        %v819 = vmul.f32 %v795, 0.7978846
        %v820 = vmul.f32 %v796, 0.7978846
        %v821 = vmul.f32 %v797, 0.7978846
        %v822 = vmul.f32 %v798, 0.7978846
        %v823 = vmul.f32 %v799, 0.7978846
        %v824 = vmul.f32 %v800, 0.7978846
        %v825 = vmul.f32 %v801, 0.7978846
        %v826 = vmul.f32 %v802, 0.7978846
        %v827 = vmul.f32 %v803, 0.7978846
        %v828 = vmul.f32 %v804, 0.7978846
        %v829 = vmul.f32 %v805, 0.7978846
        %v830 = vmul.f32 %v806, 0.7978846
        %v831 = vmul.f32 %v807, 0.7978846
        %v832 = vmul.f32 %v808, 0.7978846
        %v833 = vtanh.pop %v809
        %v834 = vtanh.pop %v810
        %v835 = vtanh.pop %v811
        %v836 = vtanh.pop %v812
        %v837 = vtanh.pop %v813
        %v838 = vtanh.pop %v814
        %v839 = vtanh.pop %v815
        %v840 = vtanh.pop %v816
        %v841 = vtanh.pop %v817
        %v842 = vtanh.pop %v818
        %v843 = vtanh.pop %v819
        %v844 = vtanh.pop %v820
        %v845 = vtanh.pop %v821
        %v846 = vtanh.pop %v822
        %v847 = vtanh.pop %v823
        %v848 = vtanh.pop %v824
        %v849 = vtanh.pop %v825
        %v850 = vtanh.pop %v826
        %v851 = vtanh.pop %v827
        %v852 = vtanh.pop %v828
        %v853 = vtanh.pop %v829
        %v854 = vtanh.pop %v830
        %v855 = vtanh.pop %v831
        %v856 = vtanh.pop %v832
        %v857 = vadd.f32 %v833, 1.0
        %v858 = vadd.f32 %v834, 1.0
        %v859 = vadd.f32 %v835, 1.0
        %v860 = vadd.f32 %v836, 1.0
        %v861 = vadd.f32 %v837, 1.0
        %v862 = vadd.f32 %v838, 1.0
        %v863 = vadd.f32 %v839, 1.0
        %v864 = vadd.f32 %v840, 1.0
        %v865 = vadd.f32 %v841, 1.0
        %v866 = vadd.f32 %v842, 1.0
        %v867 = vadd.f32 %v843, 1.0
        %v868 = vadd.f32 %v844, 1.0
        %v869 = vadd.f32 %v845, 1.0
        %v870 = vadd.f32 %v846, 1.0
        %v871 = vadd.f32 %v847, 1.0
        %v872 = vadd.f32 %v848, 1.0
        %v873 = vadd.f32 %v849, 1.0
        %v874 = vadd.f32 %v850, 1.0
        %v875 = vadd.f32 %v851, 1.0
        %v876 = vadd.f32 %v852, 1.0
        %v877 = vadd.f32 %v853, 1.0
        %v878 = vadd.f32 %v854, 1.0
        %v879 = vadd.f32 %v855, 1.0
        %v880 = vadd.f32 %v856, 1.0
        %v881 = vmul.f32 %v857, 0.5
        %v882 = vmul.f32 %v858, 0.5
        %v883 = vmul.f32 %v859, 0.5
        %v884 = vmul.f32 %v860, 0.5
        %v885 = vmul.f32 %v861, 0.5
        %v886 = vmul.f32 %v862, 0.5
        %v887 = vmul.f32 %v863, 0.5
        %v888 = vmul.f32 %v864, 0.5
        %v889 = vmul.f32 %v865, 0.5
        %v890 = vmul.f32 %v866, 0.5
        %v891 = vmul.f32 %v867, 0.5
        %v892 = vmul.f32 %v868, 0.5
        %v893 = vmul.f32 %v869, 0.5
        %v894 = vmul.f32 %v870, 0.5
        %v895 = vmul.f32 %v871, 0.5
        %v896 = vmul.f32 %v872, 0.5
        %v897 = vmul.f32 %v873, 0.5
        %v898 = vmul.f32 %v874, 0.5
        %v899 = vmul.f32 %v875, 0.5
        %v900 = vmul.f32 %v876, 0.5
        %v901 = vmul.f32 %v877, 0.5
        %v902 = vmul.f32 %v878, 0.5
        %v903 = vmul.f32 %v879, 0.5
        %v904 = vmul.f32 %v880, 0.5
        %v905 = vmul.f32 %v589, %v881
        %v906 = vmul.f32 %v591, %v882
        %v907 = vmul.f32 %v642, %v883
        %v908 = vmul.f32 %v644, %v884
        %v909 = vmul.f32 %v695, %v885
        %v910 = vmul.f32 %v697, %v886
        %v911 = vmul.f32 %v593, %v887
        %v912 = vmul.f32 %v595, %v888
        %v913 = vmul.f32 %v646, %v889
        %v914 = vmul.f32 %v648, %v890
        %v915 = vmul.f32 %v699, %v891
        %v916 = vmul.f32 %v701, %v892
        %v917 = vmul.f32 %v599, %v893
        %v918 = vmul.f32 %v601, %v894
        %v919 = vmul.f32 %v652, %v895
        %v920 = vmul.f32 %v654, %v896
        %v921 = vmul.f32 %v705, %v897
        %v922 = vmul.f32 %v707, %v898
        %v923 = vmul.f32 %v603, %v899
        %v924 = vmul.f32 %v605, %v900
        %v925 = vmul.f32 %v656, %v901
        %v926 = vmul.f32 %v658, %v902
        %v927 = vmul.f32 %v709, %v903
        %v928 = vmul.f32 %v711, %v904
        %v929 = vld [vmem:[%s1] sm:$0x3]
        %vm930 = vcmask 261120
        %v932 = vsel %vm930, %v929, 0
        %934 = vmatprep.subr.mxu0 %v906
        %935 = vmatpush1.msra.mxu0 %v905
        %936 = vmatprep.subr.mxu0 %v912
        %937 = vmatpush1.msra.mxu0 %v911
        %938 = vmatprep.subr.mxu0 %v918
        %939 = vmatpush1.msra.mxu0 %v917
        %940 = vmatprep.subr.mxu0 %v924
        %941 = vmatpush1.msra.mxu0 %v923
        %942 = vmatprep.subr.mxu0 0.0
        %943 = vmatpush1.msra.mxu0 0.0
        %944 = vmatprep.subr.mxu0 0.0
        %945 = vmatpush1.msra.mxu0 0.0
        %946 = vmatprep.subr.mxu0 0.0
        %947 = vmatpush1.msra.mxu0 0.0
        %948 = vmatprep.subr.mxu0 0.0
        %949 = vmatpush1.msra.mxu0 0.0
        %950 = vmatprep.subr.mxu0 0.0
        %951 = vmatpush1.msra.mxu0 0.0
        %952 = vmatprep.subr.mxu0 0.0
        %953 = vmatpush1.msra.mxu0 0.0
        %954 = vmatprep.subr.mxu0 0.0
        %955 = vmatpush1.msra.mxu0 0.0
        %956 = vmatprep.subr.mxu0 0.0
        %957 = vmatpush1.msra.mxu0 0.0
        %958 = vmatprep.subr.mxu0 0.0
        %959 = vmatpush1.msra.mxu0 0.0
        %960 = vmatprep.subr.mxu0 0.0
        %961 = vmatpush1.msra.mxu0 0.0
        %962 = vmatprep.subr.mxu0 0.0
        %963 = vmatpush1.msra.mxu0 0.0
        %964 = vmatprep.subr.mxu0 0.0
        %965 = vmatpush1.msra.mxu0 0.0
        %966 = vmatprep.subr.mxu0 0.0
        %967 = vmatpush1.msra.mxu0 0.0
        %968 = vmatprep.subr.mxu0 0.0
        %969 = vmatpush1.msra.mxu0 0.0
        %970 = vmatprep.subr.mxu0 0.0
        %971 = vmatpush1.msra.mxu0 0.0
        %972 = vmatprep.subr.mxu0 0.0
        %973 = vmatpush1.msra.mxu0 0.0
        %974 = vmatprep.subr.mxu0 0.0
        %975 = vmatpush1.msra.mxu0 0.0
        %976 = vmatprep.subr.mxu0 0.0
        %977 = vmatpush1.msra.mxu0 0.0
        %978 = vmatprep.subr.mxu0 0.0
        %979 = vmatpush1.msra.mxu0 0.0
        %980 = vmatprep.subr.mxu0 0.0
        %981 = vmatpush1.msra.mxu0 0.0
        %982 = vmatprep.subr.mxu0 0.0
        %983 = vmatpush1.msra.mxu0 0.0
        %984 = vmatprep.subr.mxu0 0.0
        %985 = vmatpush1.msra.mxu0 0.0
        %986 = vmatprep.subr.mxu0 0.0
        %987 = vmatpush1.msra.mxu0 0.0
        %988 = vmatprep.subr.mxu0 0.0
        %989 = vmatpush1.msra.mxu0 0.0
        %990 = vmatprep.subr.mxu0 0.0
        %991 = vmatpush1.msra.mxu0 0.0
        %992 = vmatprep.subr.mxu0 0.0
        %993 = vmatpush1.msra.mxu0 0.0
        %994 = vmatprep.subr.mxu0 0.0
        %995 = vmatpush1.msra.mxu0 0.0
        %996 = vmatprep.subr.mxu0 0.0
        %997 = vmatpush1.msra.mxu0 0.0
        %998 = vmatprep.mubr.f32.mxu0 0.0
        %999 = vmatmul.mubr.f32.gmra.mrb[0].mxu0 %v932
        %v1000 = vpop.f32.mrb[0].mxu0
        %v1001 = vadd.f32 0.0, %v1000
        %v1002 = vpop.f32.mrb[0].mxu0
        %v1003 = vadd.f32 0.0, %v1002
        %1004 = vdwg.mxu0
        %1005 = vmatprep.subr.mxu0 %v908
        %1006 = vmatpush1.msra.mxu0 %v907
        %1007 = vmatprep.subr.mxu0 %v914
        %1008 = vmatpush1.msra.mxu0 %v913
        %1009 = vmatprep.subr.mxu0 %v920
        %1010 = vmatpush1.msra.mxu0 %v919
        %1011 = vmatprep.subr.mxu0 %v926
        %1012 = vmatpush1.msra.mxu0 %v925
        %1013 = vmatprep.subr.mxu0 0.0
        %1014 = vmatpush1.msra.mxu0 0.0
        %1015 = vmatprep.subr.mxu0 0.0
        %1016 = vmatpush1.msra.mxu0 0.0
        %1017 = vmatprep.subr.mxu0 0.0
        %1018 = vmatpush1.msra.mxu0 0.0
        %1019 = vmatprep.subr.mxu0 0.0
        %1020 = vmatpush1.msra.mxu0 0.0
        %1021 = vmatprep.subr.mxu0 0.0
        %1022 = vmatpush1.msra.mxu0 0.0
        %1023 = vmatprep.subr.mxu0 0.0
        %1024 = vmatpush1.msra.mxu0 0.0
        %1025 = vmatprep.subr.mxu0 0.0
        %1026 = vmatpush1.msra.mxu0 0.0
        %1027 = vmatprep.subr.mxu0 0.0
        %1028 = vmatpush1.msra.mxu0 0.0
        %1029 = vmatprep.subr.mxu0 0.0
        %1030 = vmatpush1.msra.mxu0 0.0
        %1031 = vmatprep.subr.mxu0 0.0
        %1032 = vmatpush1.msra.mxu0 0.0
        %1033 = vmatprep.subr.mxu0 0.0
        %1034 = vmatpush1.msra.mxu0 0.0
        %1035 = vmatprep.subr.mxu0 0.0
        %1036 = vmatpush1.msra.mxu0 0.0
        %1037 = vmatprep.subr.mxu0 0.0
        %1038 = vmatpush1.msra.mxu0 0.0
        %1039 = vmatprep.subr.mxu0 0.0
        %1040 = vmatpush1.msra.mxu0 0.0
        %1041 = vmatprep.subr.mxu0 0.0
        %1042 = vmatpush1.msra.mxu0 0.0
        %1043 = vmatprep.subr.mxu0 0.0
        %1044 = vmatpush1.msra.mxu0 0.0
        %1045 = vmatprep.subr.mxu0 0.0
        %1046 = vmatpush1.msra.mxu0 0.0
        %1047 = vmatprep.subr.mxu0 0.0
        %1048 = vmatpush1.msra.mxu0 0.0
        %1049 = vmatprep.subr.mxu0 0.0
        %1050 = vmatpush1.msra.mxu0 0.0
        %1051 = vmatprep.subr.mxu0 0.0
        %1052 = vmatpush1.msra.mxu0 0.0
        %1053 = vmatprep.subr.mxu0 0.0
        %1054 = vmatpush1.msra.mxu0 0.0
        %1055 = vmatprep.subr.mxu0 0.0
        %1056 = vmatpush1.msra.mxu0 0.0
        %1057 = vmatprep.subr.mxu0 0.0
        %1058 = vmatpush1.msra.mxu0 0.0
        %1059 = vmatprep.subr.mxu0 0.0
        %1060 = vmatpush1.msra.mxu0 0.0
        %1061 = vmatprep.subr.mxu0 0.0
        %1062 = vmatpush1.msra.mxu0 0.0
        %1063 = vmatprep.subr.mxu0 0.0
        %1064 = vmatpush1.msra.mxu0 0.0
        %1065 = vmatprep.subr.mxu0 0.0
        %1066 = vmatpush1.msra.mxu0 0.0
        %1067 = vmatprep.subr.mxu0 0.0
        %1068 = vmatpush1.msra.mxu0 0.0
        %1069 = vmatprep.mubr.f32.mxu0 0.0
        %1070 = vmatmul.mubr.f32.gmra.mrb[0].mxu0 %v932
        %v1071 = vpop.f32.mrb[0].mxu0
        %v1072 = vadd.f32 0.0, %v1071
        %v1073 = vpop.f32.mrb[0].mxu0
        %v1074 = vadd.f32 0.0, %v1073
        %1075 = vdwg.mxu0
        %1076 = vmatprep.subr.mxu0 %v910
        %1077 = vmatpush1.msra.mxu0 %v909
        %1078 = vmatprep.subr.mxu0 %v916
        %1079 = vmatpush1.msra.mxu0 %v915
        %1080 = vmatprep.subr.mxu0 %v922
        %1081 = vmatpush1.msra.mxu0 %v921
        %1082 = vmatprep.subr.mxu0 %v928
        %1083 = vmatpush1.msra.mxu0 %v927
        %1084 = vmatprep.subr.mxu0 0.0
        %1085 = vmatpush1.msra.mxu0 0.0
        %1086 = vmatprep.subr.mxu0 0.0
        %1087 = vmatpush1.msra.mxu0 0.0
        %1088 = vmatprep.subr.mxu0 0.0
        %1089 = vmatpush1.msra.mxu0 0.0
        %1090 = vmatprep.subr.mxu0 0.0
        %1091 = vmatpush1.msra.mxu0 0.0
        %1092 = vmatprep.subr.mxu0 0.0
        %1093 = vmatpush1.msra.mxu0 0.0
        %1094 = vmatprep.subr.mxu0 0.0
        %1095 = vmatpush1.msra.mxu0 0.0
        %1096 = vmatprep.subr.mxu0 0.0
        %1097 = vmatpush1.msra.mxu0 0.0
        %1098 = vmatprep.subr.mxu0 0.0
        %1099 = vmatpush1.msra.mxu0 0.0
        %1100 = vmatprep.subr.mxu0 0.0
        %1101 = vmatpush1.msra.mxu0 0.0
        %1102 = vmatprep.subr.mxu0 0.0
        %1103 = vmatpush1.msra.mxu0 0.0
        %1104 = vmatprep.subr.mxu0 0.0
        %1105 = vmatpush1.msra.mxu0 0.0
        %1106 = vmatprep.subr.mxu0 0.0
        %1107 = vmatpush1.msra.mxu0 0.0
        %1108 = vmatprep.subr.mxu0 0.0
        %1109 = vmatpush1.msra.mxu0 0.0
        %1110 = vmatprep.subr.mxu0 0.0
        %1111 = vmatpush1.msra.mxu0 0.0
        %1112 = vmatprep.subr.mxu0 0.0
        %1113 = vmatpush1.msra.mxu0 0.0
        %1114 = vmatprep.subr.mxu0 0.0
        %1115 = vmatpush1.msra.mxu0 0.0
        %1116 = vmatprep.subr.mxu0 0.0
        %1117 = vmatpush1.msra.mxu0 0.0
        %1118 = vmatprep.subr.mxu0 0.0
        %1119 = vmatpush1.msra.mxu0 0.0
        %1120 = vmatprep.subr.mxu0 0.0
        %1121 = vmatpush1.msra.mxu0 0.0
        %1122 = vmatprep.subr.mxu0 0.0
        %1123 = vmatpush1.msra.mxu0 0.0
        %1124 = vmatprep.subr.mxu0 0.0
        %1125 = vmatpush1.msra.mxu0 0.0
        %1126 = vmatprep.subr.mxu0 0.0
        %1127 = vmatpush1.msra.mxu0 0.0
        %1128 = vmatprep.subr.mxu0 0.0
        %1129 = vmatpush1.msra.mxu0 0.0
        %1130 = vmatprep.subr.mxu0 0.0
        %1131 = vmatpush1.msra.mxu0 0.0
        %1132 = vmatprep.subr.mxu0 0.0
        %1133 = vmatpush1.msra.mxu0 0.0
        %1134 = vmatprep.subr.mxu0 0.0
        %1135 = vmatpush1.msra.mxu0 0.0
        %1136 = vmatprep.subr.mxu0 0.0
        %1137 = vmatpush1.msra.mxu0 0.0
        %1138 = vmatprep.subr.mxu0 0.0
        %1139 = vmatpush1.msra.mxu0 0.0
        %1140 = vmatprep.mubr.f32.mxu0 0.0
        %1141 = vmatmul.mubr.f32.gmra.mrb[0].mxu0 %v932
        %v1142 = vpop.f32.mrb[0].mxu0
        %v1143 = vadd.f32 0.0, %v1142
        %v1144 = vpop.f32.mrb[0].mxu0
        %v1145 = vadd.f32 0.0, %v1144
        %1146 = vdwg.mxu0
        %v1153 = vcombine.low %v1001, %v1003
        %v1154 = vcombine.low %v1072, %v1074
        %v1156 = vunpack.c.l.s4 1983009808
        %v1157 = vunpack.c.0.s8 %v1156
        %v1158 = vlaneseq
        %v1159 = vshrl.u32 %v1158, 7
        %v1160 = vsub.s32 %v1157, %v1159
        %v1161 = vrot.slane %v1153, %v1160
        %v1163 = vunpack.c.l.s4 1983009808
        %v1164 = vunpack.c.0.s8 %v1163
        %v1165 = vlaneseq
        %v1166 = vshrl.u32 %v1165, 7
        %v1167 = vsub.s32 %v1164, %v1166
        %v1168 = vrot.slane %v1154, %v1167
        %v1169 = vcombine.low %v1161, %v1168
        %v1170 = vcombine.low %v1143, %v1145
        %v1172 = vunpack.c.l.s4 1983009808
        %v1173 = vunpack.c.0.s8 %v1172
        %v1174 = vlaneseq
        %v1175 = vshrl.u32 %v1174, 7
        %v1176 = vsub.s32 %v1173, %v1175
        %v1177 = vrot.slane %v1170, %v1176
        %1180 = vst [vmem:[%s386] sm:$0xff] %v1169
        %1181 = vst [vmem:[%s386 + $0x8] sm:$0xf] %v1177
        %v1182 = vpack.c.bf16 %v1001, %v1001
        %v1183 = vpack.c.bf16 %v1003, %v1003
        %v1184 = vpack.c.bf16 %v1072, %v1072
        %v1185 = vpack.c.bf16 %v1074, %v1074
        %v1186 = vpack.c.bf16 %v1143, %v1143
        %v1187 = vpack.c.bf16 %v1145, %v1145
        %v1188 = vld [vmem:[%s322] sm:$0xff]
        %v1189 = vld [vmem:[%s322 + $0x8] sm:$0xff]
        %v1190 = vld [vmem:[%s322 + $0x10] sm:$0xff]
        %v1191 = vld [vmem:[%s322 + $0x18] sm:$0xf]
        %v1192 = vld [vmem:[%s322 + $0x1c] sm:$0xff]
        %v1193 = vld [vmem:[%s322 + $0x24] sm:$0xff]
        %v1194 = vld [vmem:[%s322 + $0x2c] sm:$0xff]
        %v1195 = vld [vmem:[%s322 + $0x34] sm:$0xf]
        %v1196 = vld [vmem:[%s322 + $0x38] sm:$0xff]
        %v1197 = vld [vmem:[%s322 + $0x40] sm:$0xff]
        %v1198 = vld [vmem:[%s322 + $0x48] sm:$0xff]
        %v1199 = vld [vmem:[%s322 + $0x50] sm:$0xf]
        %v1200 = vld [vmem:[%s322 + $0x54] sm:$0xff]
        %v1201 = vld [vmem:[%s322 + $0x5c] sm:$0xff]
        %v1202 = vld [vmem:[%s322 + $0x64] sm:$0xff]
        %v1203 = vld [vmem:[%s322 + $0x6c] sm:$0xf]
        %v1204 = vld [vmem:[%s322 + $0x70] sm:$0xff]
        %v1205 = vld [vmem:[%s322 + $0x78] sm:$0xff]
        %v1206 = vld [vmem:[%s322 + $0x80] sm:$0xff]
        %v1207 = vld [vmem:[%s322 + $0x88] sm:$0xf]
        %v1208 = vld [vmem:[%s322 + $0x8c] sm:$0xff]
        %v1209 = vld [vmem:[%s322 + $0x94] sm:$0xff]
        %v1210 = vld [vmem:[%s322 + $0x9c] sm:$0xff]
        %v1211 = vld [vmem:[%s322 + $0xa4] sm:$0xf]
        %v1212 = vld [vmem:[%s322 + $0xa8] sm:$0xff]
        %v1213 = vld [vmem:[%s322 + $0xb0] sm:$0xff]
        %v1214 = vld [vmem:[%s322 + $0xb8] sm:$0xff]
        %v1215 = vld [vmem:[%s322 + $0xc0] sm:$0xf]
        %v1216 = vld [vmem:[%s322 + $0xc4] sm:$0xff]
        %v1217 = vld [vmem:[%s322 + $0xcc] sm:$0xff]
        %v1218 = vld [vmem:[%s322 + $0xd4] sm:$0xff]
        %v1219 = vld [vmem:[%s322 + $0xdc] sm:$0xf]
        %v1220 = vld [vmem:[%s322 + $0xe0] sm:$0xff]
        %v1221 = vld [vmem:[%s322 + $0xe8] sm:$0xff]
        %v1222 = vld [vmem:[%s322 + $0xf0] sm:$0xff]
        %v1223 = vld [vmem:[%s322 + $0xf8] sm:$0xf]
        %v1224 = vld [vmem:[%s322 + $0xfc] sm:$0xff]
        %v1225 = vld [vmem:[%s322 + $0x104] sm:$0xff]
        %v1226 = vld [vmem:[%s322 + $0x10c] sm:$0xff]
        %v1227 = vld [vmem:[%s322 + $0x114] sm:$0xf]
        %v1228 = vld [vmem:[%s322 + $0x118] sm:$0xff]
        %v1229 = vld [vmem:[%s322 + $0x120] sm:$0xff]
        %v1230 = vld [vmem:[%s322 + $0x128] sm:$0xff]
        %v1231 = vld [vmem:[%s322 + $0x130] sm:$0xf]
        %v1232 = vld [vmem:[%s322 + $0x134] sm:$0xff]
        %v1233 = vld [vmem:[%s322 + $0x13c] sm:$0xff]
        %v1234 = vld [vmem:[%s322 + $0x144] sm:$0xff]
        %v1235 = vld [vmem:[%s322 + $0x14c] sm:$0xf]
        %v1236 = vld [vmem:[%s322 + $0x150] sm:$0xff]
        %v1237 = vld [vmem:[%s322 + $0x158] sm:$0xff]
        %v1238 = vld [vmem:[%s322 + $0x160] sm:$0xff]
        %v1239 = vld [vmem:[%s322 + $0x168] sm:$0xf]
        %v1240 = vld [vmem:[%s322 + $0x16c] sm:$0xff]
        %v1241 = vld [vmem:[%s322 + $0x174] sm:$0xff]
        %v1242 = vld [vmem:[%s322 + $0x17c] sm:$0xff]
        %v1243 = vld [vmem:[%s322 + $0x184] sm:$0xf]
        %v1244 = vld [vmem:[%s322 + $0x188] sm:$0xff]
        %v1245 = vld [vmem:[%s322 + $0x190] sm:$0xff]
        %v1246 = vld [vmem:[%s322 + $0x198] sm:$0xff]
        %v1247 = vld [vmem:[%s322 + $0x1a0] sm:$0xf]
        %v1248 = vld [vmem:[%s322 + $0x1a4] sm:$0xff]
        %v1249 = vld [vmem:[%s322 + $0x1ac] sm:$0xff]
        %v1250 = vld [vmem:[%s322 + $0x1b4] sm:$0xff]
        %v1251 = vld [vmem:[%s322 + $0x1bc] sm:$0xf]
        %v1252 = vld [vmem:[%s322 + $0x1c0] sm:$0xff]
        %v1253 = vld [vmem:[%s322 + $0x1c8] sm:$0xff]
        %v1254 = vld [vmem:[%s322 + $0x1d0] sm:$0xff]
        %v1255 = vld [vmem:[%s322 + $0x1d8] sm:$0xf]
        %v1256 = vld [vmem:[%s322 + $0x1dc] sm:$0xff]
        %v1257 = vld [vmem:[%s322 + $0x1e4] sm:$0xff]
        %v1258 = vld [vmem:[%s322 + $0x1ec] sm:$0xff]
        %v1259 = vld [vmem:[%s322 + $0x1f4] sm:$0xf]
        %v1260 = vld [vmem:[%s322 + $0x1f8] sm:$0xff]
        %v1261 = vld [vmem:[%s322 + $0x200] sm:$0xff]
        %v1262 = vld [vmem:[%s322 + $0x208] sm:$0xff]
        %v1263 = vld [vmem:[%s322 + $0x210] sm:$0xf]
        %v1264 = vld [vmem:[%s322 + $0x214] sm:$0xff]
        %v1265 = vld [vmem:[%s322 + $0x21c] sm:$0xff]
        %v1266 = vld [vmem:[%s322 + $0x224] sm:$0xff]
        %v1267 = vld [vmem:[%s322 + $0x22c] sm:$0xf]
        %v1268 = vld [vmem:[%s322 + $0x230] sm:$0xff]
        %v1269 = vld [vmem:[%s322 + $0x238] sm:$0xff]
        %v1270 = vld [vmem:[%s322 + $0x240] sm:$0xff]
        %v1271 = vld [vmem:[%s322 + $0x248] sm:$0xf]
        %v1272 = vld [vmem:[%s322 + $0x24c] sm:$0xff]
        %v1273 = vld [vmem:[%s322 + $0x254] sm:$0xff]
        %v1274 = vld [vmem:[%s322 + $0x25c] sm:$0xff]
        %v1275 = vld [vmem:[%s322 + $0x264] sm:$0xf]
        %v1276 = vld [vmem:[%s322 + $0x268] sm:$0xff]
        %v1277 = vld [vmem:[%s322 + $0x270] sm:$0xff]
        %v1278 = vld [vmem:[%s322 + $0x278] sm:$0xff]
        %v1279 = vld [vmem:[%s322 + $0x280] sm:$0xf]
        %v1280 = vld [vmem:[%s322 + $0x284] sm:$0xff]
        %v1281 = vld [vmem:[%s322 + $0x28c] sm:$0xff]
        %v1282 = vld [vmem:[%s322 + $0x294] sm:$0xff]
        %v1283 = vld [vmem:[%s322 + $0x29c] sm:$0xf]
        %v1284 = vld [vmem:[%s322 + $0x2a0] sm:$0xff]
        %v1285 = vld [vmem:[%s322 + $0x2a8] sm:$0xff]
        %v1286 = vld [vmem:[%s322 + $0x2b0] sm:$0xff]
        %v1287 = vld [vmem:[%s322 + $0x2b8] sm:$0xf]
        %v1288 = vld [vmem:[%s322 + $0x2bc] sm:$0xff]
        %v1289 = vld [vmem:[%s322 + $0x2c4] sm:$0xff]
        %v1290 = vld [vmem:[%s322 + $0x2cc] sm:$0xff]
        %v1291 = vld [vmem:[%s322 + $0x2d4] sm:$0xf]
        %v1292 = vld [vmem:[%s322 + $0x2d8] sm:$0xff]
        %v1293 = vld [vmem:[%s322 + $0x2e0] sm:$0xff]
        %v1294 = vld [vmem:[%s322 + $0x2e8] sm:$0xff]
        %v1295 = vld [vmem:[%s322 + $0x2f0] sm:$0xf]
        %v1296 = vld [vmem:[%s322 + $0x2f4] sm:$0xff]
        %v1297 = vld [vmem:[%s322 + $0x2fc] sm:$0xff]
        %v1298 = vld [vmem:[%s322 + $0x304] sm:$0xff]
        %v1299 = vld [vmem:[%s322 + $0x30c] sm:$0xf]
        %v1300 = vld [vmem:[%s322 + $0x310] sm:$0xff]
        %v1301 = vld [vmem:[%s322 + $0x318] sm:$0xff]
        %v1302 = vld [vmem:[%s322 + $0x320] sm:$0xff]
        %v1303 = vld [vmem:[%s322 + $0x328] sm:$0xf]
        %v1304 = vld [vmem:[%s322 + $0x32c] sm:$0xff]
        %v1305 = vld [vmem:[%s322 + $0x334] sm:$0xff]
        %v1306 = vld [vmem:[%s322 + $0x33c] sm:$0xff]
        %v1307 = vld [vmem:[%s322 + $0x344] sm:$0xf]
        %v1308 = vld [vmem:[%s322 + $0x348] sm:$0xff]
        %v1309 = vld [vmem:[%s322 + $0x350] sm:$0xff]
        %v1310 = vld [vmem:[%s322 + $0x358] sm:$0xff]
        %v1311 = vld [vmem:[%s322 + $0x360] sm:$0xf]
        %v1312 = vld [vmem:[%s322 + $0x364] sm:$0xff]
        %v1313 = vld [vmem:[%s322 + $0x36c] sm:$0xff]
        %v1314 = vld [vmem:[%s322 + $0x374] sm:$0xff]
        %v1315 = vld [vmem:[%s322 + $0x37c] sm:$0xf]
        %v1316 = vld [vmem:[%s322 + $0x380] sm:$0xff]
        %v1317 = vld [vmem:[%s322 + $0x388] sm:$0xff]
        %v1318 = vld [vmem:[%s322 + $0x390] sm:$0xff]
        %v1319 = vld [vmem:[%s322 + $0x398] sm:$0xf]
        %v1320 = vld [vmem:[%s322 + $0x39c] sm:$0xff]
        %v1321 = vld [vmem:[%s322 + $0x3a4] sm:$0xff]
        %v1322 = vld [vmem:[%s322 + $0x3ac] sm:$0xff]
        %v1323 = vld [vmem:[%s322 + $0x3b4] sm:$0xf]
        %v1324 = vld [vmem:[%s322 + $0x3b8] sm:$0xff]
        %v1325 = vld [vmem:[%s322 + $0x3c0] sm:$0xff]
        %v1326 = vld [vmem:[%s322 + $0x3c8] sm:$0xff]
        %v1327 = vld [vmem:[%s322 + $0x3d0] sm:$0xf]
        %v1328 = vld [vmem:[%s322 + $0x3d4] sm:$0xff]
        %v1329 = vld [vmem:[%s322 + $0x3dc] sm:$0xff]
        %v1330 = vld [vmem:[%s322 + $0x3e4] sm:$0xff]
        %v1331 = vld [vmem:[%s322 + $0x3ec] sm:$0xf]
        %v1332 = vld [vmem:[%s322 + $0x3f0] sm:$0xff]
        %v1333 = vld [vmem:[%s322 + $0x3f8] sm:$0xff]
        %v1334 = vld [vmem:[%s322 + $0x400] sm:$0xff]
        %v1335 = vld [vmem:[%s322 + $0x408] sm:$0xf]
        %v1336 = vld [vmem:[%s322 + $0x40c] sm:$0xff]
        %v1337 = vld [vmem:[%s322 + $0x414] sm:$0xff]
        %v1338 = vld [vmem:[%s322 + $0x41c] sm:$0xff]
        %v1339 = vld [vmem:[%s322 + $0x424] sm:$0xf]
        %v1340 = vld [vmem:[%s322 + $0x428] sm:$0xff]
        %v1341 = vld [vmem:[%s322 + $0x430] sm:$0xff]
        %v1342 = vld [vmem:[%s322 + $0x438] sm:$0xff]
        %v1343 = vld [vmem:[%s322 + $0x440] sm:$0xf]
        %v1344 = vld [vmem:[%s322 + $0x444] sm:$0xff]
        %v1345 = vld [vmem:[%s322 + $0x44c] sm:$0xff]
        %v1346 = vld [vmem:[%s322 + $0x454] sm:$0xff]
        %v1347 = vld [vmem:[%s322 + $0x45c] sm:$0xf]
        %v1348 = vld [vmem:[%s322 + $0x460] sm:$0xff]
        %v1349 = vld [vmem:[%s322 + $0x468] sm:$0xff]
        %v1350 = vld [vmem:[%s322 + $0x470] sm:$0xff]
        %v1351 = vld [vmem:[%s322 + $0x478] sm:$0xf]
        %v1352 = vld [vmem:[%s322 + $0x47c] sm:$0xff]
        %v1353 = vld [vmem:[%s322 + $0x484] sm:$0xff]
        %v1354 = vld [vmem:[%s322 + $0x48c] sm:$0xff]
        %v1355 = vld [vmem:[%s322 + $0x494] sm:$0xf]
        %v1356 = vld [vmem:[%s322 + $0x498] sm:$0xff]
        %v1357 = vld [vmem:[%s322 + $0x4a0] sm:$0xff]
        %v1358 = vld [vmem:[%s322 + $0x4a8] sm:$0xff]
        %v1359 = vld [vmem:[%s322 + $0x4b0] sm:$0xf]
        %v1360 = vld [vmem:[%s322 + $0x4b4] sm:$0xff]
        %v1361 = vld [vmem:[%s322 + $0x4bc] sm:$0xff]
        %v1362 = vld [vmem:[%s322 + $0x4c4] sm:$0xff]
        %v1363 = vld [vmem:[%s322 + $0x4cc] sm:$0xf]
        %v1364 = vld [vmem:[%s322 + $0x4d0] sm:$0xff]
        %v1365 = vld [vmem:[%s322 + $0x4d8] sm:$0xff]
        %v1366 = vld [vmem:[%s322 + $0x4e0] sm:$0xff]
        %v1367 = vld [vmem:[%s322 + $0x4e8] sm:$0xf]
        %v1368 = vld [vmem:[%s322 + $0x4ec] sm:$0xff]
        %v1369 = vld [vmem:[%s322 + $0x4f4] sm:$0xff]
        %v1370 = vld [vmem:[%s322 + $0x4fc] sm:$0xff]
        %v1371 = vld [vmem:[%s322 + $0x504] sm:$0xf]
        %v1372 = vld [vmem:[%s322 + $0x508] sm:$0xff]
        %v1373 = vld [vmem:[%s322 + $0x510] sm:$0xff]
        %v1374 = vld [vmem:[%s322 + $0x518] sm:$0xff]
        %v1375 = vld [vmem:[%s322 + $0x520] sm:$0xf]
        %v1376 = vld [vmem:[%s322 + $0x524] sm:$0xff]
        %v1377 = vld [vmem:[%s322 + $0x52c] sm:$0xff]
        %v1378 = vld [vmem:[%s322 + $0x534] sm:$0xff]
        %v1379 = vld [vmem:[%s322 + $0x53c] sm:$0xf]
        %v1380 = vld [vmem:[%s322 + $0x540] sm:$0xff]
        %v1381 = vld [vmem:[%s322 + $0x548] sm:$0xff]
        %v1382 = vld [vmem:[%s322 + $0x550] sm:$0xff]
        %v1383 = vld [vmem:[%s322 + $0x558] sm:$0xf]
        %v1384 = vld [vmem:[%s322 + $0x55c] sm:$0xff]
        %v1385 = vld [vmem:[%s322 + $0x564] sm:$0xff]
        %v1386 = vld [vmem:[%s322 + $0x56c] sm:$0xff]
        %v1387 = vld [vmem:[%s322 + $0x574] sm:$0xf]
        %v1388 = vld [vmem:[%s322 + $0x578] sm:$0xff]
        %v1389 = vld [vmem:[%s322 + $0x580] sm:$0xff]
        %v1390 = vld [vmem:[%s322 + $0x588] sm:$0xff]
        %v1391 = vld [vmem:[%s322 + $0x590] sm:$0xf]
        %v1392 = vld [vmem:[%s322 + $0x594] sm:$0xff]
        %v1393 = vld [vmem:[%s322 + $0x59c] sm:$0xff]
        %v1394 = vld [vmem:[%s322 + $0x5a4] sm:$0xff]
        %v1395 = vld [vmem:[%s322 + $0x5ac] sm:$0xf]
        %v1396 = vld [vmem:[%s322 + $0x5b0] sm:$0xff]
        %v1397 = vld [vmem:[%s322 + $0x5b8] sm:$0xff]
        %v1398 = vld [vmem:[%s322 + $0x5c0] sm:$0xff]
        %v1399 = vld [vmem:[%s322 + $0x5c8] sm:$0xf]
        %v1400 = vld [vmem:[%s322 + $0x5cc] sm:$0xff]
        %v1401 = vld [vmem:[%s322 + $0x5d4] sm:$0xff]
        %v1402 = vld [vmem:[%s322 + $0x5dc] sm:$0xff]
        %v1403 = vld [vmem:[%s322 + $0x5e4] sm:$0xf]
        %v1404 = vld [vmem:[%s322 + $0x5e8] sm:$0xff]
        %v1405 = vld [vmem:[%s322 + $0x5f0] sm:$0xff]
        %v1406 = vld [vmem:[%s322 + $0x5f8] sm:$0xff]
        %v1407 = vld [vmem:[%s322 + $0x600] sm:$0xf]
        %v1408 = vld [vmem:[%s322 + $0x604] sm:$0xff]
        %v1409 = vld [vmem:[%s322 + $0x60c] sm:$0xff]
        %v1410 = vld [vmem:[%s322 + $0x614] sm:$0xff]
        %v1411 = vld [vmem:[%s322 + $0x61c] sm:$0xf]
        %v1412 = vld [vmem:[%s322 + $0x620] sm:$0xff]
        %v1413 = vld [vmem:[%s322 + $0x628] sm:$0xff]
        %v1414 = vld [vmem:[%s322 + $0x630] sm:$0xff]
        %v1415 = vld [vmem:[%s322 + $0x638] sm:$0xf]
        %v1416 = vld [vmem:[%s322 + $0x63c] sm:$0xff]
        %v1417 = vld [vmem:[%s322 + $0x644] sm:$0xff]
        %v1418 = vld [vmem:[%s322 + $0x64c] sm:$0xff]
        %v1419 = vld [vmem:[%s322 + $0x654] sm:$0xf]
        %v1420 = vld [vmem:[%s322 + $0x658] sm:$0xff]
        %v1421 = vld [vmem:[%s322 + $0x660] sm:$0xff]
        %v1422 = vld [vmem:[%s322 + $0x668] sm:$0xff]
        %v1423 = vld [vmem:[%s322 + $0x670] sm:$0xf]
        %v1424 = vld [vmem:[%s322 + $0x674] sm:$0xff]
        %v1425 = vld [vmem:[%s322 + $0x67c] sm:$0xff]
        %v1426 = vld [vmem:[%s322 + $0x684] sm:$0xff]
        %v1427 = vld [vmem:[%s322 + $0x68c] sm:$0xf]
        %v1428 = vld [vmem:[%s322 + $0x690] sm:$0xff]
        %v1429 = vld [vmem:[%s322 + $0x698] sm:$0xff]
        %v1430 = vld [vmem:[%s322 + $0x6a0] sm:$0xff]
        %v1431 = vld [vmem:[%s322 + $0x6a8] sm:$0xf]
        %v1432 = vld [vmem:[%s322 + $0x6ac] sm:$0xff]
        %v1433 = vld [vmem:[%s322 + $0x6b4] sm:$0xff]
        %v1434 = vld [vmem:[%s322 + $0x6bc] sm:$0xff]
        %v1435 = vld [vmem:[%s322 + $0x6c4] sm:$0xf]
        %v1436 = vld [vmem:[%s322 + $0x6c8] sm:$0xff]
        %v1437 = vld [vmem:[%s322 + $0x6d0] sm:$0xff]
        %v1438 = vld [vmem:[%s322 + $0x6d8] sm:$0xff]
        %v1439 = vld [vmem:[%s322 + $0x6e0] sm:$0xf]
        %v1440 = vld [vmem:[%s322 + $0x6e4] sm:$0xff]
        %v1441 = vld [vmem:[%s322 + $0x6ec] sm:$0xff]
        %v1442 = vld [vmem:[%s322 + $0x6f4] sm:$0xff]
        %v1443 = vld [vmem:[%s322 + $0x6fc] sm:$0xf]
        %v1444 = vld [vmem:[%s322 + $0x700] sm:$0xff]
        %v1445 = vld [vmem:[%s322 + $0x708] sm:$0xff]
        %v1446 = vld [vmem:[%s322 + $0x710] sm:$0xff]
        %v1447 = vld [vmem:[%s322 + $0x718] sm:$0xf]
        %v1448 = vld [vmem:[%s322 + $0x71c] sm:$0xff]
        %v1449 = vld [vmem:[%s322 + $0x724] sm:$0xff]
        %v1450 = vld [vmem:[%s322 + $0x72c] sm:$0xff]
        %v1451 = vld [vmem:[%s322 + $0x734] sm:$0xf]
        %v1452 = vld [vmem:[%s322 + $0x738] sm:$0xff]
        %v1453 = vld [vmem:[%s322 + $0x740] sm:$0xff]
        %v1454 = vld [vmem:[%s322 + $0x748] sm:$0xff]
        %v1455 = vld [vmem:[%s322 + $0x750] sm:$0xf]
        %v1456 = vld [vmem:[%s322 + $0x754] sm:$0xff]
        %v1457 = vld [vmem:[%s322 + $0x75c] sm:$0xff]
        %v1458 = vld [vmem:[%s322 + $0x764] sm:$0xff]
        %v1459 = vld [vmem:[%s322 + $0x76c] sm:$0xf]
        %v1460 = vld [vmem:[%s322 + $0x770] sm:$0xff]
        %v1461 = vld [vmem:[%s322 + $0x778] sm:$0xff]
        %v1462 = vld [vmem:[%s322 + $0x780] sm:$0xff]
        %v1463 = vld [vmem:[%s322 + $0x788] sm:$0xf]
        %v1464 = vld [vmem:[%s322 + $0x78c] sm:$0xff]
        %v1465 = vld [vmem:[%s322 + $0x794] sm:$0xff]
        %v1466 = vld [vmem:[%s322 + $0x79c] sm:$0xff]
        %v1467 = vld [vmem:[%s322 + $0x7a4] sm:$0xf]
        %v1468 = vld [vmem:[%s322 + $0x7a8] sm:$0xff]
        %v1469 = vld [vmem:[%s322 + $0x7b0] sm:$0xff]
        %v1470 = vld [vmem:[%s322 + $0x7b8] sm:$0xff]
        %v1471 = vld [vmem:[%s322 + $0x7c0] sm:$0xf]
        %v1472 = vld [vmem:[%s322 + $0x7c4] sm:$0xff]
        %v1473 = vld [vmem:[%s322 + $0x7cc] sm:$0xff]
        %v1474 = vld [vmem:[%s322 + $0x7d4] sm:$0xff]
        %v1475 = vld [vmem:[%s322 + $0x7dc] sm:$0xf]
        %v1476 = vld [vmem:[%s322 + $0x7e0] sm:$0xff]
        %v1477 = vld [vmem:[%s322 + $0x7e8] sm:$0xff]
        %v1478 = vld [vmem:[%s322 + $0x7f0] sm:$0xff]
        %v1479 = vld [vmem:[%s322 + $0x7f8] sm:$0xf]
        %v1480 = vld [vmem:[%s322 + $0x7fc] sm:$0xff]
        %v1481 = vld [vmem:[%s322 + $0x804] sm:$0xff]
        %v1482 = vld [vmem:[%s322 + $0x80c] sm:$0xff]
        %v1483 = vld [vmem:[%s322 + $0x814] sm:$0xf]
        %v1484 = vld [vmem:[%s322 + $0x818] sm:$0xff]
        %v1485 = vld [vmem:[%s322 + $0x820] sm:$0xff]
        %v1486 = vld [vmem:[%s322 + $0x828] sm:$0xff]
        %v1487 = vld [vmem:[%s322 + $0x830] sm:$0xf]
        %v1488 = vld [vmem:[%s322 + $0x834] sm:$0xff]
        %v1489 = vld [vmem:[%s322 + $0x83c] sm:$0xff]
        %v1490 = vld [vmem:[%s322 + $0x844] sm:$0xff]
        %v1491 = vld [vmem:[%s322 + $0x84c] sm:$0xf]
        %v1492 = vld [vmem:[%s322 + $0x850] sm:$0xff]
        %v1493 = vld [vmem:[%s322 + $0x858] sm:$0xff]
        %v1494 = vld [vmem:[%s322 + $0x860] sm:$0xff]
        %v1495 = vld [vmem:[%s322 + $0x868] sm:$0xf]
        %v1496 = vld [vmem:[%s322 + $0x86c] sm:$0xff]
        %v1497 = vld [vmem:[%s322 + $0x874] sm:$0xff]
        %v1498 = vld [vmem:[%s322 + $0x87c] sm:$0xff]
        %v1499 = vld [vmem:[%s322 + $0x884] sm:$0xf]
        %v1500 = vld [vmem:[%s322 + $0x888] sm:$0xff]
        %v1501 = vld [vmem:[%s322 + $0x890] sm:$0xff]
        %v1502 = vld [vmem:[%s322 + $0x898] sm:$0xff]
        %v1503 = vld [vmem:[%s322 + $0x8a0] sm:$0xf]
        %v1504 = vld [vmem:[%s322 + $0x8a4] sm:$0xff]
        %v1505 = vld [vmem:[%s322 + $0x8ac] sm:$0xff]
        %v1506 = vld [vmem:[%s322 + $0x8b4] sm:$0xff]
        %v1507 = vld [vmem:[%s322 + $0x8bc] sm:$0xf]
        %v1508 = vld [vmem:[%s322 + $0x8c0] sm:$0xff]
        %v1509 = vld [vmem:[%s322 + $0x8c8] sm:$0xff]
        %v1510 = vld [vmem:[%s322 + $0x8d0] sm:$0xff]
        %v1511 = vld [vmem:[%s322 + $0x8d8] sm:$0xf]
        %v1512 = vld [vmem:[%s322 + $0x8dc] sm:$0xff]
        %v1513 = vld [vmem:[%s322 + $0x8e4] sm:$0xff]
        %v1514 = vld [vmem:[%s322 + $0x8ec] sm:$0xff]
        %v1515 = vld [vmem:[%s322 + $0x8f4] sm:$0xf]
        %v1516 = vld [vmem:[%s322 + $0x8f8] sm:$0xff]
        %v1517 = vld [vmem:[%s322 + $0x900] sm:$0xff]
        %v1518 = vld [vmem:[%s322 + $0x908] sm:$0xff]
        %v1519 = vld [vmem:[%s322 + $0x910] sm:$0xf]
        %v1520 = vld [vmem:[%s322 + $0x914] sm:$0xff]
        %v1521 = vld [vmem:[%s322 + $0x91c] sm:$0xff]
        %v1522 = vld [vmem:[%s322 + $0x924] sm:$0xff]
        %v1523 = vld [vmem:[%s322 + $0x92c] sm:$0xf]
        %v1524 = vld [vmem:[%s322 + $0x930] sm:$0xff]
        %v1525 = vld [vmem:[%s322 + $0x938] sm:$0xff]
        %v1526 = vld [vmem:[%s322 + $0x940] sm:$0xff]
        %v1527 = vld [vmem:[%s322 + $0x948] sm:$0xf]
        %v1528 = vld [vmem:[%s322 + $0x94c] sm:$0xff]
        %v1529 = vld [vmem:[%s322 + $0x954] sm:$0xff]
        %v1530 = vld [vmem:[%s322 + $0x95c] sm:$0xff]
        %v1531 = vld [vmem:[%s322 + $0x964] sm:$0xf]
        %v1532 = vld [vmem:[%s322 + $0x968] sm:$0xff]
        %v1533 = vld [vmem:[%s322 + $0x970] sm:$0xff]
        %v1534 = vld [vmem:[%s322 + $0x978] sm:$0xff]
        %v1535 = vld [vmem:[%s322 + $0x980] sm:$0xf]
        %v1536 = vld [vmem:[%s322 + $0x984] sm:$0xff]
        %v1537 = vld [vmem:[%s322 + $0x98c] sm:$0xff]
        %v1538 = vld [vmem:[%s322 + $0x994] sm:$0xff]
        %v1539 = vld [vmem:[%s322 + $0x99c] sm:$0xf]
        %v1540 = vld [vmem:[%s322 + $0x9a0] sm:$0xff]
        %v1541 = vld [vmem:[%s322 + $0x9a8] sm:$0xff]
        %v1542 = vld [vmem:[%s322 + $0x9b0] sm:$0xff]
        %v1543 = vld [vmem:[%s322 + $0x9b8] sm:$0xf]
        %v1544 = vld [vmem:[%s322 + $0x9bc] sm:$0xff]
        %v1545 = vld [vmem:[%s322 + $0x9c4] sm:$0xff]
        %v1546 = vld [vmem:[%s322 + $0x9cc] sm:$0xff]
        %v1547 = vld [vmem:[%s322 + $0x9d4] sm:$0xf]
        %v1548 = vld [vmem:[%s322 + $0x9d8] sm:$0xff]
        %v1549 = vld [vmem:[%s322 + $0x9e0] sm:$0xff]
        %v1550 = vld [vmem:[%s322 + $0x9e8] sm:$0xff]
        %v1551 = vld [vmem:[%s322 + $0x9f0] sm:$0xf]
        %v1552 = vld [vmem:[%s322 + $0x9f4] sm:$0xff]
        %v1553 = vld [vmem:[%s322 + $0x9fc] sm:$0xff]
        %v1554 = vld [vmem:[%s322 + $0xa04] sm:$0xff]
        %v1555 = vld [vmem:[%s322 + $0xa0c] sm:$0xf]
        %v1556 = vld [vmem:[%s322 + $0xa10] sm:$0xff]
        %v1557 = vld [vmem:[%s322 + $0xa18] sm:$0xff]
        %v1558 = vld [vmem:[%s322 + $0xa20] sm:$0xff]
        %v1559 = vld [vmem:[%s322 + $0xa28] sm:$0xf]
        %v1560 = vld [vmem:[%s322 + $0xa2c] sm:$0xff]
        %v1561 = vld [vmem:[%s322 + $0xa34] sm:$0xff]
        %v1562 = vld [vmem:[%s322 + $0xa3c] sm:$0xff]
        %v1563 = vld [vmem:[%s322 + $0xa44] sm:$0xf]
        %v1564 = vld [vmem:[%s322 + $0xa48] sm:$0xff]
        %v1565 = vld [vmem:[%s322 + $0xa50] sm:$0xff]
        %v1566 = vld [vmem:[%s322 + $0xa58] sm:$0xff]
        %v1567 = vld [vmem:[%s322 + $0xa60] sm:$0xf]
        %v1568 = vld [vmem:[%s322 + $0xa64] sm:$0xff]
        %v1569 = vld [vmem:[%s322 + $0xa6c] sm:$0xff]
        %v1570 = vld [vmem:[%s322 + $0xa74] sm:$0xff]
        %v1571 = vld [vmem:[%s322 + $0xa7c] sm:$0xf]
        %v1572 = vld [vmem:[%s331] sm:$0xff]
        %v1574 = vlaneseq
        %v1575 = vshrl.u32 %v1574, 7
        %v1576 = vsub.s32 0, %v1575
        %v1577 = vrot.slane %v1572, %v1576
        %v1578 = vlaneseq
        %v1579 = vshrl.u32 %v1578, 7
        %v1580 = vsub.s32 1, %v1579
        %v1581 = vrot.slane %v1572, %v1580
        %v1582 = vlaneseq
        %v1583 = vshrl.u32 %v1582, 7
        %v1584 = vsub.s32 2, %v1583
        %v1585 = vrot.slane %v1572, %v1584
        %v1586 = vlaneseq
        %v1587 = vshrl.u32 %v1586, 7
        %v1588 = vsub.s32 3, %v1587
        %v1589 = vrot.slane %v1572, %v1588
        %v1590 = vlaneseq
        %v1591 = vshrl.u32 %v1590, 7
        %v1592 = vsub.s32 4, %v1591
        %v1593 = vrot.slane %v1572, %v1592
        %v1594 = vlaneseq
        %v1595 = vshrl.u32 %v1594, 7
        %v1596 = vsub.s32 5, %v1595
        %v1597 = vrot.slane %v1572, %v1596
        %v1598 = vlaneseq
        %v1599 = vshrl.u32 %v1598, 7
        %v1600 = vsub.s32 6, %v1599
        %v1601 = vrot.slane %v1572, %v1600
        %v1993 = vunpack.c.l.b16 %v1188
        %v1994 = vunpack.c.h.b16 %v1188
        %v1995 = vunpack.c.l.b16 %v1189
        %v1996 = vunpack.c.h.b16 %v1189
        %v1997 = vunpack.c.l.b16 %v1190
        %v1998 = vunpack.c.h.b16 %v1190
        %v1999 = vunpack.c.l.b16 %v1191
        %v2000 = vunpack.c.l.b16 %v1192
        %v2001 = vunpack.c.h.b16 %v1192
        %v2002 = vunpack.c.l.b16 %v1193
        %v2003 = vunpack.c.h.b16 %v1193
        %v2004 = vunpack.c.l.b16 %v1194
        %v2005 = vunpack.c.h.b16 %v1194
        %v2006 = vunpack.c.l.b16 %v1195
        %v2007 = vunpack.c.l.b16 %v1196
        %v2008 = vunpack.c.h.b16 %v1196
        %v2009 = vunpack.c.l.b16 %v1197
        %v2010 = vunpack.c.h.b16 %v1197
        %v2011 = vunpack.c.l.b16 %v1198
        %v2012 = vunpack.c.h.b16 %v1198
        %v2013 = vunpack.c.l.b16 %v1199
        %v2014 = vunpack.c.l.b16 %v1200
        %v2015 = vunpack.c.h.b16 %v1200
        %v2016 = vunpack.c.l.b16 %v1201
        %v2017 = vunpack.c.h.b16 %v1201
        %v2018 = vunpack.c.l.b16 %v1202
        %v2019 = vunpack.c.h.b16 %v1202
        %v2020 = vunpack.c.l.b16 %v1203
        %v2021 = vunpack.c.l.b16 %v1204
        %v2022 = vunpack.c.h.b16 %v1204
        %v2023 = vunpack.c.l.b16 %v1205
        %v2024 = vunpack.c.h.b16 %v1205
        %v2025 = vunpack.c.l.b16 %v1206
        %v2026 = vunpack.c.h.b16 %v1206
        %v2027 = vunpack.c.l.b16 %v1207
        %v2028 = vunpack.c.l.b16 %v1208
        %v2029 = vunpack.c.h.b16 %v1208
        %v2030 = vunpack.c.l.b16 %v1209
        %v2031 = vunpack.c.h.b16 %v1209
        %v2032 = vunpack.c.l.b16 %v1210
        %v2033 = vunpack.c.h.b16 %v1210
        %v2034 = vunpack.c.l.b16 %v1211
        %v2035 = vunpack.c.l.b16 %v1212
        %v2036 = vunpack.c.h.b16 %v1212
        %v2037 = vunpack.c.l.b16 %v1213
        %v2038 = vunpack.c.h.b16 %v1213
        %v2039 = vunpack.c.l.b16 %v1214
        %v2040 = vunpack.c.h.b16 %v1214
        %v2041 = vunpack.c.l.b16 %v1215
        %v2042 = vunpack.c.l.b16 %v1216
        %v2043 = vunpack.c.h.b16 %v1216
        %v2044 = vunpack.c.l.b16 %v1217
        %v2045 = vunpack.c.h.b16 %v1217
        %v2046 = vunpack.c.l.b16 %v1218
        %v2047 = vunpack.c.h.b16 %v1218
        %v2048 = vunpack.c.l.b16 %v1219
        %v2049 = vunpack.c.l.b16 %v1220
        %v2050 = vunpack.c.h.b16 %v1220
        %v2051 = vunpack.c.l.b16 %v1221
        %v2052 = vunpack.c.h.b16 %v1221
        %v2053 = vunpack.c.l.b16 %v1222
        %v2054 = vunpack.c.h.b16 %v1222
        %v2055 = vunpack.c.l.b16 %v1223
        %v2056 = vunpack.c.l.b16 %v1224
        %v2057 = vunpack.c.h.b16 %v1224
        %v2058 = vunpack.c.l.b16 %v1225
        %v2059 = vunpack.c.h.b16 %v1225
        %v2060 = vunpack.c.l.b16 %v1226
        %v2061 = vunpack.c.h.b16 %v1226
        %v2062 = vunpack.c.l.b16 %v1227
        %v2063 = vunpack.c.l.b16 %v1228
        %v2064 = vunpack.c.h.b16 %v1228
        %v2065 = vunpack.c.l.b16 %v1229
        %v2066 = vunpack.c.h.b16 %v1229
        %v2067 = vunpack.c.l.b16 %v1230
        %v2068 = vunpack.c.h.b16 %v1230
        %v2069 = vunpack.c.l.b16 %v1231
        %v2070 = vunpack.c.l.b16 %v1232
        %v2071 = vunpack.c.h.b16 %v1232
        %v2072 = vunpack.c.l.b16 %v1233
        %v2073 = vunpack.c.h.b16 %v1233
        %v2074 = vunpack.c.l.b16 %v1234
        %v2075 = vunpack.c.h.b16 %v1234
        %v2076 = vunpack.c.l.b16 %v1235
        %v2077 = vunpack.c.l.b16 %v1236
        %v2078 = vunpack.c.h.b16 %v1236
        %v2079 = vunpack.c.l.b16 %v1237
        %v2080 = vunpack.c.h.b16 %v1237
        %v2081 = vunpack.c.l.b16 %v1238
        %v2082 = vunpack.c.h.b16 %v1238
        %v2083 = vunpack.c.l.b16 %v1239
        %v2084 = vunpack.c.l.b16 %v1240
        %v2085 = vunpack.c.h.b16 %v1240
        %v2086 = vunpack.c.l.b16 %v1241
        %v2087 = vunpack.c.h.b16 %v1241
        %v2088 = vunpack.c.l.b16 %v1242
        %v2089 = vunpack.c.h.b16 %v1242
        %v2090 = vunpack.c.l.b16 %v1243
        %v2091 = vunpack.c.l.b16 %v1244
        %v2092 = vunpack.c.h.b16 %v1244
        %v2093 = vunpack.c.l.b16 %v1245
        %v2094 = vunpack.c.h.b16 %v1245
        %v2095 = vunpack.c.l.b16 %v1246
        %v2096 = vunpack.c.h.b16 %v1246
        %v2097 = vunpack.c.l.b16 %v1247
        %v2098 = vunpack.c.l.b16 %v1248
        %v2099 = vunpack.c.h.b16 %v1248
        %v2100 = vunpack.c.l.b16 %v1249
        %v2101 = vunpack.c.h.b16 %v1249
        %v2102 = vunpack.c.l.b16 %v1250
        %v2103 = vunpack.c.h.b16 %v1250
        %v2104 = vunpack.c.l.b16 %v1251
        %v2105 = vunpack.c.l.b16 %v1252
        %v2106 = vunpack.c.h.b16 %v1252
        %v2107 = vunpack.c.l.b16 %v1253
        %v2108 = vunpack.c.h.b16 %v1253
        %v2109 = vunpack.c.l.b16 %v1254
        %v2110 = vunpack.c.h.b16 %v1254
        %v2111 = vunpack.c.l.b16 %v1255
        %v2112 = vunpack.c.l.b16 %v1256
        %v2113 = vunpack.c.h.b16 %v1256
        %v2114 = vunpack.c.l.b16 %v1257
        %v2115 = vunpack.c.h.b16 %v1257
        %v2116 = vunpack.c.l.b16 %v1258
        %v2117 = vunpack.c.h.b16 %v1258
        %v2118 = vunpack.c.l.b16 %v1259
        %v2119 = vunpack.c.l.b16 %v1260
        %v2120 = vunpack.c.h.b16 %v1260
        %v2121 = vunpack.c.l.b16 %v1261
        %v2122 = vunpack.c.h.b16 %v1261
        %v2123 = vunpack.c.l.b16 %v1262
        %v2124 = vunpack.c.h.b16 %v1262
        %v2125 = vunpack.c.l.b16 %v1263
        %v2126 = vunpack.c.l.b16 %v1264
        %v2127 = vunpack.c.h.b16 %v1264
        %v2128 = vunpack.c.l.b16 %v1265
        %v2129 = vunpack.c.h.b16 %v1265
        %v2130 = vunpack.c.l.b16 %v1266
        %v2131 = vunpack.c.h.b16 %v1266
        %v2132 = vunpack.c.l.b16 %v1267
        %v2133 = vunpack.c.l.b16 %v1268
        %v2134 = vunpack.c.h.b16 %v1268
        %v2135 = vunpack.c.l.b16 %v1269
        %v2136 = vunpack.c.h.b16 %v1269
        %v2137 = vunpack.c.l.b16 %v1270
        %v2138 = vunpack.c.h.b16 %v1270
        %v2139 = vunpack.c.l.b16 %v1271
        %v2140 = vunpack.c.l.b16 %v1272
        %v2141 = vunpack.c.h.b16 %v1272
        %v2142 = vunpack.c.l.b16 %v1273
        %v2143 = vunpack.c.h.b16 %v1273
        %v2144 = vunpack.c.l.b16 %v1274
        %v2145 = vunpack.c.h.b16 %v1274
        %v2146 = vunpack.c.l.b16 %v1275
        %v2147 = vunpack.c.l.b16 %v1276
        %v2148 = vunpack.c.h.b16 %v1276
        %v2149 = vunpack.c.l.b16 %v1277
        %v2150 = vunpack.c.h.b16 %v1277
        %v2151 = vunpack.c.l.b16 %v1278
        %v2152 = vunpack.c.h.b16 %v1278
        %v2153 = vunpack.c.l.b16 %v1279
        %v2154 = vunpack.c.l.b16 %v1280
        %v2155 = vunpack.c.h.b16 %v1280
        %v2156 = vunpack.c.l.b16 %v1281
        %v2157 = vunpack.c.h.b16 %v1281
        %v2158 = vunpack.c.l.b16 %v1282
        %v2159 = vunpack.c.h.b16 %v1282
        %v2160 = vunpack.c.l.b16 %v1283
        %v2161 = vunpack.c.l.b16 %v1284
        %v2162 = vunpack.c.h.b16 %v1284
        %v2163 = vunpack.c.l.b16 %v1285
        %v2164 = vunpack.c.h.b16 %v1285
        %v2165 = vunpack.c.l.b16 %v1286
        %v2166 = vunpack.c.h.b16 %v1286
        %v2167 = vunpack.c.l.b16 %v1287
        %v2168 = vunpack.c.l.b16 %v1288
        %v2169 = vunpack.c.h.b16 %v1288
        %v2170 = vunpack.c.l.b16 %v1289
        %v2171 = vunpack.c.h.b16 %v1289
        %v2172 = vunpack.c.l.b16 %v1290
        %v2173 = vunpack.c.h.b16 %v1290
        %v2174 = vunpack.c.l.b16 %v1291
        %v2175 = vunpack.c.l.b16 %v1292
        %v2176 = vunpack.c.h.b16 %v1292
        %v2177 = vunpack.c.l.b16 %v1293
        %v2178 = vunpack.c.h.b16 %v1293
        %v2179 = vunpack.c.l.b16 %v1294
        %v2180 = vunpack.c.h.b16 %v1294
        %v2181 = vunpack.c.l.b16 %v1295
        %v2182 = vunpack.c.l.b16 %v1296
        %v2183 = vunpack.c.h.b16 %v1296
        %v2184 = vunpack.c.l.b16 %v1297
        %v2185 = vunpack.c.h.b16 %v1297
        %v2186 = vunpack.c.l.b16 %v1298
        %v2187 = vunpack.c.h.b16 %v1298
        %v2188 = vunpack.c.l.b16 %v1299
        %v2189 = vunpack.c.l.b16 %v1300
        %v2190 = vunpack.c.h.b16 %v1300
        %v2191 = vunpack.c.l.b16 %v1301
        %v2192 = vunpack.c.h.b16 %v1301
        %v2193 = vunpack.c.l.b16 %v1302
        %v2194 = vunpack.c.h.b16 %v1302
        %v2195 = vunpack.c.l.b16 %v1303
        %v2196 = vunpack.c.l.b16 %v1304
        %v2197 = vunpack.c.h.b16 %v1304
        %v2198 = vunpack.c.l.b16 %v1305
        %v2199 = vunpack.c.h.b16 %v1305
        %v2200 = vunpack.c.l.b16 %v1306
        %v2201 = vunpack.c.h.b16 %v1306
        %v2202 = vunpack.c.l.b16 %v1307
        %v2203 = vunpack.c.l.b16 %v1308
        %v2204 = vunpack.c.h.b16 %v1308
        %v2205 = vunpack.c.l.b16 %v1309
        %v2206 = vunpack.c.h.b16 %v1309
        %v2207 = vunpack.c.l.b16 %v1310
        %v2208 = vunpack.c.h.b16 %v1310
        %v2209 = vunpack.c.l.b16 %v1311
        %v2210 = vunpack.c.l.b16 %v1312
        %v2211 = vunpack.c.h.b16 %v1312
        %v2212 = vunpack.c.l.b16 %v1313
        %v2213 = vunpack.c.h.b16 %v1313
        %v2214 = vunpack.c.l.b16 %v1314
        %v2215 = vunpack.c.h.b16 %v1314
        %v2216 = vunpack.c.l.b16 %v1315
        %v2217 = vunpack.c.l.b16 %v1316
        %v2218 = vunpack.c.h.b16 %v1316
        %v2219 = vunpack.c.l.b16 %v1317
        %v2220 = vunpack.c.h.b16 %v1317
        %v2221 = vunpack.c.l.b16 %v1318
        %v2222 = vunpack.c.h.b16 %v1318
        %v2223 = vunpack.c.l.b16 %v1319
        %v2224 = vunpack.c.l.b16 %v1320
        %v2225 = vunpack.c.h.b16 %v1320
        %v2226 = vunpack.c.l.b16 %v1321
        %v2227 = vunpack.c.h.b16 %v1321
        %v2228 = vunpack.c.l.b16 %v1322
        %v2229 = vunpack.c.h.b16 %v1322
        %v2230 = vunpack.c.l.b16 %v1323
        %v2231 = vunpack.c.l.b16 %v1324
        %v2232 = vunpack.c.h.b16 %v1324
        %v2233 = vunpack.c.l.b16 %v1325
        %v2234 = vunpack.c.h.b16 %v1325
        %v2235 = vunpack.c.l.b16 %v1326
        %v2236 = vunpack.c.h.b16 %v1326
        %v2237 = vunpack.c.l.b16 %v1327
        %v2238 = vunpack.c.l.b16 %v1328
        %v2239 = vunpack.c.h.b16 %v1328
        %v2240 = vunpack.c.l.b16 %v1329
        %v2241 = vunpack.c.h.b16 %v1329
        %v2242 = vunpack.c.l.b16 %v1330
        %v2243 = vunpack.c.h.b16 %v1330
        %v2244 = vunpack.c.l.b16 %v1331
        %v2245 = vunpack.c.l.b16 %v1332
        %v2246 = vunpack.c.h.b16 %v1332
        %v2247 = vunpack.c.l.b16 %v1333
        %v2248 = vunpack.c.h.b16 %v1333
        %v2249 = vunpack.c.l.b16 %v1334
        %v2250 = vunpack.c.h.b16 %v1334
        %v2251 = vunpack.c.l.b16 %v1335
        %v2252 = vunpack.c.l.b16 %v1336
        %v2253 = vunpack.c.h.b16 %v1336
        %v2254 = vunpack.c.l.b16 %v1337
        %v2255 = vunpack.c.h.b16 %v1337
        %v2256 = vunpack.c.l.b16 %v1338
        %v2257 = vunpack.c.h.b16 %v1338
        %v2258 = vunpack.c.l.b16 %v1339
        %v2259 = vunpack.c.l.b16 %v1340
        %v2260 = vunpack.c.h.b16 %v1340
        %v2261 = vunpack.c.l.b16 %v1341
        %v2262 = vunpack.c.h.b16 %v1341
        %v2263 = vunpack.c.l.b16 %v1342
        %v2264 = vunpack.c.h.b16 %v1342
        %v2265 = vunpack.c.l.b16 %v1343
        %v2266 = vunpack.c.l.b16 %v1344
        %v2267 = vunpack.c.h.b16 %v1344
        %v2268 = vunpack.c.l.b16 %v1345
        %v2269 = vunpack.c.h.b16 %v1345
        %v2270 = vunpack.c.l.b16 %v1346
        %v2271 = vunpack.c.h.b16 %v1346
        %v2272 = vunpack.c.l.b16 %v1347
        %v2273 = vunpack.c.l.b16 %v1348
        %v2274 = vunpack.c.h.b16 %v1348
        %v2275 = vunpack.c.l.b16 %v1349
        %v2276 = vunpack.c.h.b16 %v1349
        %v2277 = vunpack.c.l.b16 %v1350
        %v2278 = vunpack.c.h.b16 %v1350
        %v2279 = vunpack.c.l.b16 %v1351
        %v2280 = vunpack.c.l.b16 %v1352
        %v2281 = vunpack.c.h.b16 %v1352
        %v2282 = vunpack.c.l.b16 %v1353
        %v2283 = vunpack.c.h.b16 %v1353
        %v2284 = vunpack.c.l.b16 %v1354
        %v2285 = vunpack.c.h.b16 %v1354
        %v2286 = vunpack.c.l.b16 %v1355
        %v2287 = vunpack.c.l.b16 %v1356
        %v2288 = vunpack.c.h.b16 %v1356
        %v2289 = vunpack.c.l.b16 %v1357
        %v2290 = vunpack.c.h.b16 %v1357
        %v2291 = vunpack.c.l.b16 %v1358
        %v2292 = vunpack.c.h.b16 %v1358
        %v2293 = vunpack.c.l.b16 %v1359
        %v2294 = vunpack.c.l.b16 %v1360
        %v2295 = vunpack.c.h.b16 %v1360
        %v2296 = vunpack.c.l.b16 %v1361
        %v2297 = vunpack.c.h.b16 %v1361
        %v2298 = vunpack.c.l.b16 %v1362
        %v2299 = vunpack.c.h.b16 %v1362
        %v2300 = vunpack.c.l.b16 %v1363
        %v2301 = vunpack.c.l.b16 %v1364
        %v2302 = vunpack.c.h.b16 %v1364
        %v2303 = vunpack.c.l.b16 %v1365
        %v2304 = vunpack.c.h.b16 %v1365
        %v2305 = vunpack.c.l.b16 %v1366
        %v2306 = vunpack.c.h.b16 %v1366
        %v2307 = vunpack.c.l.b16 %v1367
        %v2308 = vunpack.c.l.b16 %v1368
        %v2309 = vunpack.c.h.b16 %v1368
        %v2310 = vunpack.c.l.b16 %v1369
        %v2311 = vunpack.c.h.b16 %v1369
        %v2312 = vunpack.c.l.b16 %v1370
        %v2313 = vunpack.c.h.b16 %v1370
        %v2314 = vunpack.c.l.b16 %v1371
        %v2315 = vunpack.c.l.b16 %v1372
        %v2316 = vunpack.c.h.b16 %v1372
        %v2317 = vunpack.c.l.b16 %v1373
        %v2318 = vunpack.c.h.b16 %v1373
        %v2319 = vunpack.c.l.b16 %v1374
        %v2320 = vunpack.c.h.b16 %v1374
        %v2321 = vunpack.c.l.b16 %v1375
        %v2322 = vunpack.c.l.b16 %v1376
        %v2323 = vunpack.c.h.b16 %v1376
        %v2324 = vunpack.c.l.b16 %v1377
        %v2325 = vunpack.c.h.b16 %v1377
        %v2326 = vunpack.c.l.b16 %v1378
        %v2327 = vunpack.c.h.b16 %v1378
        %v2328 = vunpack.c.l.b16 %v1379
        %v2329 = vunpack.c.l.b16 %v1380
        %v2330 = vunpack.c.h.b16 %v1380
        %v2331 = vunpack.c.l.b16 %v1381
        %v2332 = vunpack.c.h.b16 %v1381
        %v2333 = vunpack.c.l.b16 %v1382
        %v2334 = vunpack.c.h.b16 %v1382
        %v2335 = vunpack.c.l.b16 %v1383
        %v2336 = vunpack.c.l.b16 %v1384
        %v2337 = vunpack.c.h.b16 %v1384
        %v2338 = vunpack.c.l.b16 %v1385
        %v2339 = vunpack.c.h.b16 %v1385
        %v2340 = vunpack.c.l.b16 %v1386
        %v2341 = vunpack.c.h.b16 %v1386
        %v2342 = vunpack.c.l.b16 %v1387
        %v2343 = vunpack.c.l.b16 %v1388
        %v2344 = vunpack.c.h.b16 %v1388
        %v2345 = vunpack.c.l.b16 %v1389
        %v2346 = vunpack.c.h.b16 %v1389
        %v2347 = vunpack.c.l.b16 %v1390
        %v2348 = vunpack.c.h.b16 %v1390
        %v2349 = vunpack.c.l.b16 %v1391
        %v2350 = vunpack.c.l.b16 %v1392
        %v2351 = vunpack.c.h.b16 %v1392
        %v2352 = vunpack.c.l.b16 %v1393
        %v2353 = vunpack.c.h.b16 %v1393
        %v2354 = vunpack.c.l.b16 %v1394
        %v2355 = vunpack.c.h.b16 %v1394
        %v2356 = vunpack.c.l.b16 %v1395
        %v2357 = vunpack.c.l.b16 %v1396
        %v2358 = vunpack.c.h.b16 %v1396
        %v2359 = vunpack.c.l.b16 %v1397
        %v2360 = vunpack.c.h.b16 %v1397
        %v2361 = vunpack.c.l.b16 %v1398
        %v2362 = vunpack.c.h.b16 %v1398
        %v2363 = vunpack.c.l.b16 %v1399
        %v2364 = vunpack.c.l.b16 %v1400
        %v2365 = vunpack.c.h.b16 %v1400
        %v2366 = vunpack.c.l.b16 %v1401
        %v2367 = vunpack.c.h.b16 %v1401
        %v2368 = vunpack.c.l.b16 %v1402
        %v2369 = vunpack.c.h.b16 %v1402
        %v2370 = vunpack.c.l.b16 %v1403
        %v2371 = vunpack.c.l.b16 %v1404
        %v2372 = vunpack.c.h.b16 %v1404
        %v2373 = vunpack.c.l.b16 %v1405
        %v2374 = vunpack.c.h.b16 %v1405
        %v2375 = vunpack.c.l.b16 %v1406
        %v2376 = vunpack.c.h.b16 %v1406
        %v2377 = vunpack.c.l.b16 %v1407
        %v2378 = vunpack.c.l.b16 %v1408
        %v2379 = vunpack.c.h.b16 %v1408
        %v2380 = vunpack.c.l.b16 %v1409
        %v2381 = vunpack.c.h.b16 %v1409
        %v2382 = vunpack.c.l.b16 %v1410
        %v2383 = vunpack.c.h.b16 %v1410
        %v2384 = vunpack.c.l.b16 %v1411
        %v2385 = vunpack.c.l.b16 %v1412
        %v2386 = vunpack.c.h.b16 %v1412
        %v2387 = vunpack.c.l.b16 %v1413
        %v2388 = vunpack.c.h.b16 %v1413
        %v2389 = vunpack.c.l.b16 %v1414
        %v2390 = vunpack.c.h.b16 %v1414
        %v2391 = vunpack.c.l.b16 %v1415
        %v2392 = vunpack.c.l.b16 %v1416
        %v2393 = vunpack.c.h.b16 %v1416
        %v2394 = vunpack.c.l.b16 %v1417
        %v2395 = vunpack.c.h.b16 %v1417
        %v2396 = vunpack.c.l.b16 %v1418
        %v2397 = vunpack.c.h.b16 %v1418
        %v2398 = vunpack.c.l.b16 %v1419
        %v2399 = vunpack.c.l.b16 %v1420
        %v2400 = vunpack.c.h.b16 %v1420
        %v2401 = vunpack.c.l.b16 %v1421
        %v2402 = vunpack.c.h.b16 %v1421
        %v2403 = vunpack.c.l.b16 %v1422
        %v2404 = vunpack.c.h.b16 %v1422
        %v2405 = vunpack.c.l.b16 %v1423
        %v2406 = vunpack.c.l.b16 %v1424
        %v2407 = vunpack.c.h.b16 %v1424
        %v2408 = vunpack.c.l.b16 %v1425
        %v2409 = vunpack.c.h.b16 %v1425
        %v2410 = vunpack.c.l.b16 %v1426
        %v2411 = vunpack.c.h.b16 %v1426
        %v2412 = vunpack.c.l.b16 %v1427
        %v2413 = vunpack.c.l.b16 %v1428
        %v2414 = vunpack.c.h.b16 %v1428
        %v2415 = vunpack.c.l.b16 %v1429
        %v2416 = vunpack.c.h.b16 %v1429
        %v2417 = vunpack.c.l.b16 %v1430
        %v2418 = vunpack.c.h.b16 %v1430
        %v2419 = vunpack.c.l.b16 %v1431
        %v2420 = vunpack.c.l.b16 %v1432
        %v2421 = vunpack.c.h.b16 %v1432
        %v2422 = vunpack.c.l.b16 %v1433
        %v2423 = vunpack.c.h.b16 %v1433
        %v2424 = vunpack.c.l.b16 %v1434
        %v2425 = vunpack.c.h.b16 %v1434
        %v2426 = vunpack.c.l.b16 %v1435
        %v2427 = vunpack.c.l.b16 %v1436
        %v2428 = vunpack.c.h.b16 %v1436
        %v2429 = vunpack.c.l.b16 %v1437
        %v2430 = vunpack.c.h.b16 %v1437
        %v2431 = vunpack.c.l.b16 %v1438
        %v2432 = vunpack.c.h.b16 %v1438
        %v2433 = vunpack.c.l.b16 %v1439
        %v2434 = vunpack.c.l.b16 %v1440
        %v2435 = vunpack.c.h.b16 %v1440
        %v2436 = vunpack.c.l.b16 %v1441
        %v2437 = vunpack.c.h.b16 %v1441
        %v2438 = vunpack.c.l.b16 %v1442
        %v2439 = vunpack.c.h.b16 %v1442
        %v2440 = vunpack.c.l.b16 %v1443
        %v2441 = vunpack.c.l.b16 %v1444
        %v2442 = vunpack.c.h.b16 %v1444
        %v2443 = vunpack.c.l.b16 %v1445
        %v2444 = vunpack.c.h.b16 %v1445
        %v2445 = vunpack.c.l.b16 %v1446
        %v2446 = vunpack.c.h.b16 %v1446
        %v2447 = vunpack.c.l.b16 %v1447
        %v2448 = vunpack.c.l.b16 %v1448
        %v2449 = vunpack.c.h.b16 %v1448
        %v2450 = vunpack.c.l.b16 %v1449
        %v2451 = vunpack.c.h.b16 %v1449
        %v2452 = vunpack.c.l.b16 %v1450
        %v2453 = vunpack.c.h.b16 %v1450
        %v2454 = vunpack.c.l.b16 %v1451
        %v2455 = vunpack.c.l.b16 %v1452
        %v2456 = vunpack.c.h.b16 %v1452
        %v2457 = vunpack.c.l.b16 %v1453
        %v2458 = vunpack.c.h.b16 %v1453
        %v2459 = vunpack.c.l.b16 %v1454
        %v2460 = vunpack.c.h.b16 %v1454
        %v2461 = vunpack.c.l.b16 %v1455
        %v2462 = vunpack.c.l.b16 %v1456
        %v2463 = vunpack.c.h.b16 %v1456
        %v2464 = vunpack.c.l.b16 %v1457
        %v2465 = vunpack.c.h.b16 %v1457
        %v2466 = vunpack.c.l.b16 %v1458
        %v2467 = vunpack.c.h.b16 %v1458
        %v2468 = vunpack.c.l.b16 %v1459
        %v2469 = vunpack.c.l.b16 %v1460
        %v2470 = vunpack.c.h.b16 %v1460
        %v2471 = vunpack.c.l.b16 %v1461
        %v2472 = vunpack.c.h.b16 %v1461
        %v2473 = vunpack.c.l.b16 %v1462
        %v2474 = vunpack.c.h.b16 %v1462
        %v2475 = vunpack.c.l.b16 %v1463
        %v2476 = vunpack.c.l.b16 %v1464
        %v2477 = vunpack.c.h.b16 %v1464
        %v2478 = vunpack.c.l.b16 %v1465
        %v2479 = vunpack.c.h.b16 %v1465
        %v2480 = vunpack.c.l.b16 %v1466
        %v2481 = vunpack.c.h.b16 %v1466
        %v2482 = vunpack.c.l.b16 %v1467
        %v2483 = vunpack.c.l.b16 %v1468
        %v2484 = vunpack.c.h.b16 %v1468
        %v2485 = vunpack.c.l.b16 %v1469
        %v2486 = vunpack.c.h.b16 %v1469
        %v2487 = vunpack.c.l.b16 %v1470
        %v2488 = vunpack.c.h.b16 %v1470
        %v2489 = vunpack.c.l.b16 %v1471
        %v2490 = vunpack.c.l.b16 %v1472
        %v2491 = vunpack.c.h.b16 %v1472
        %v2492 = vunpack.c.l.b16 %v1473
        %v2493 = vunpack.c.h.b16 %v1473
        %v2494 = vunpack.c.l.b16 %v1474
        %v2495 = vunpack.c.h.b16 %v1474
        %v2496 = vunpack.c.l.b16 %v1475
        %v2497 = vunpack.c.l.b16 %v1476
        %v2498 = vunpack.c.h.b16 %v1476
        %v2499 = vunpack.c.l.b16 %v1477
        %v2500 = vunpack.c.h.b16 %v1477
        %v2501 = vunpack.c.l.b16 %v1478
        %v2502 = vunpack.c.h.b16 %v1478
        %v2503 = vunpack.c.l.b16 %v1479
        %v2504 = vunpack.c.l.b16 %v1480
        %v2505 = vunpack.c.h.b16 %v1480
        %v2506 = vunpack.c.l.b16 %v1481
        %v2507 = vunpack.c.h.b16 %v1481
        %v2508 = vunpack.c.l.b16 %v1482
        %v2509 = vunpack.c.h.b16 %v1482
        %v2510 = vunpack.c.l.b16 %v1483
        %v2511 = vunpack.c.l.b16 %v1484
        %v2512 = vunpack.c.h.b16 %v1484
        %v2513 = vunpack.c.l.b16 %v1485
        %v2514 = vunpack.c.h.b16 %v1485
        %v2515 = vunpack.c.l.b16 %v1486
        %v2516 = vunpack.c.h.b16 %v1486
        %v2517 = vunpack.c.l.b16 %v1487
        %v2518 = vunpack.c.l.b16 %v1488
        %v2519 = vunpack.c.h.b16 %v1488
        %v2520 = vunpack.c.l.b16 %v1489
        %v2521 = vunpack.c.h.b16 %v1489
        %v2522 = vunpack.c.l.b16 %v1490
        %v2523 = vunpack.c.h.b16 %v1490
        %v2524 = vunpack.c.l.b16 %v1491
        %v2525 = vunpack.c.l.b16 %v1492
        %v2526 = vunpack.c.h.b16 %v1492
        %v2527 = vunpack.c.l.b16 %v1493
        %v2528 = vunpack.c.h.b16 %v1493
        %v2529 = vunpack.c.l.b16 %v1494
        %v2530 = vunpack.c.h.b16 %v1494
        %v2531 = vunpack.c.l.b16 %v1495
        %v2532 = vunpack.c.l.b16 %v1496
        %v2533 = vunpack.c.h.b16 %v1496
        %v2534 = vunpack.c.l.b16 %v1497
        %v2535 = vunpack.c.h.b16 %v1497
        %v2536 = vunpack.c.l.b16 %v1498
        %v2537 = vunpack.c.h.b16 %v1498
        %v2538 = vunpack.c.l.b16 %v1499
        %v2539 = vunpack.c.l.b16 %v1500
        %v2540 = vunpack.c.h.b16 %v1500
        %v2541 = vunpack.c.l.b16 %v1501
        %v2542 = vunpack.c.h.b16 %v1501
        %v2543 = vunpack.c.l.b16 %v1502
        %v2544 = vunpack.c.h.b16 %v1502
        %v2545 = vunpack.c.l.b16 %v1503
        %v2546 = vunpack.c.l.b16 %v1504
        %v2547 = vunpack.c.h.b16 %v1504
        %v2548 = vunpack.c.l.b16 %v1505
        %v2549 = vunpack.c.h.b16 %v1505
        %v2550 = vunpack.c.l.b16 %v1506
        %v2551 = vunpack.c.h.b16 %v1506
        %v2552 = vunpack.c.l.b16 %v1507
        %v2553 = vunpack.c.l.b16 %v1508
        %v2554 = vunpack.c.h.b16 %v1508
        %v2555 = vunpack.c.l.b16 %v1509
        %v2556 = vunpack.c.h.b16 %v1509
        %v2557 = vunpack.c.l.b16 %v1510
        %v2558 = vunpack.c.h.b16 %v1510
        %v2559 = vunpack.c.l.b16 %v1511
        %v2560 = vunpack.c.l.b16 %v1512
        %v2561 = vunpack.c.h.b16 %v1512
        %v2562 = vunpack.c.l.b16 %v1513
        %v2563 = vunpack.c.h.b16 %v1513
        %v2564 = vunpack.c.l.b16 %v1514
        %v2565 = vunpack.c.h.b16 %v1514
        %v2566 = vunpack.c.l.b16 %v1515
        %v2567 = vunpack.c.l.b16 %v1516
        %v2568 = vunpack.c.h.b16 %v1516
        %v2569 = vunpack.c.l.b16 %v1517
        %v2570 = vunpack.c.h.b16 %v1517
        %v2571 = vunpack.c.l.b16 %v1518
        %v2572 = vunpack.c.h.b16 %v1518
        %v2573 = vunpack.c.l.b16 %v1519
        %v2574 = vunpack.c.l.b16 %v1520
        %v2575 = vunpack.c.h.b16 %v1520
        %v2576 = vunpack.c.l.b16 %v1521
        %v2577 = vunpack.c.h.b16 %v1521
        %v2578 = vunpack.c.l.b16 %v1522
        %v2579 = vunpack.c.h.b16 %v1522
        %v2580 = vunpack.c.l.b16 %v1523
        %v2581 = vunpack.c.l.b16 %v1524
        %v2582 = vunpack.c.h.b16 %v1524
        %v2583 = vunpack.c.l.b16 %v1525
        %v2584 = vunpack.c.h.b16 %v1525
        %v2585 = vunpack.c.l.b16 %v1526
        %v2586 = vunpack.c.h.b16 %v1526
        %v2587 = vunpack.c.l.b16 %v1527
        %v2588 = vunpack.c.l.b16 %v1528
        %v2589 = vunpack.c.h.b16 %v1528
        %v2590 = vunpack.c.l.b16 %v1529
        %v2591 = vunpack.c.h.b16 %v1529
        %v2592 = vunpack.c.l.b16 %v1530
        %v2593 = vunpack.c.h.b16 %v1530
        %v2594 = vunpack.c.l.b16 %v1531
        %v2595 = vunpack.c.l.b16 %v1532
        %v2596 = vunpack.c.h.b16 %v1532
        %v2597 = vunpack.c.l.b16 %v1533
        %v2598 = vunpack.c.h.b16 %v1533
        %v2599 = vunpack.c.l.b16 %v1534
        %v2600 = vunpack.c.h.b16 %v1534
        %v2601 = vunpack.c.l.b16 %v1535
        %v2602 = vunpack.c.l.b16 %v1536
        %v2603 = vunpack.c.h.b16 %v1536
        %v2604 = vunpack.c.l.b16 %v1537
        %v2605 = vunpack.c.h.b16 %v1537
        %v2606 = vunpack.c.l.b16 %v1538
        %v2607 = vunpack.c.h.b16 %v1538
        %v2608 = vunpack.c.l.b16 %v1539
        %v2609 = vunpack.c.l.b16 %v1540
        %v2610 = vunpack.c.h.b16 %v1540
        %v2611 = vunpack.c.l.b16 %v1541
        %v2612 = vunpack.c.h.b16 %v1541
        %v2613 = vunpack.c.l.b16 %v1542
        %v2614 = vunpack.c.h.b16 %v1542
        %v2615 = vunpack.c.l.b16 %v1543
        %v2616 = vunpack.c.l.b16 %v1544
        %v2617 = vunpack.c.h.b16 %v1544
        %v2618 = vunpack.c.l.b16 %v1545
        %v2619 = vunpack.c.h.b16 %v1545
        %v2620 = vunpack.c.l.b16 %v1546
        %v2621 = vunpack.c.h.b16 %v1546
        %v2622 = vunpack.c.l.b16 %v1547
        %v2623 = vunpack.c.l.b16 %v1548
        %v2624 = vunpack.c.h.b16 %v1548
        %v2625 = vunpack.c.l.b16 %v1549
        %v2626 = vunpack.c.h.b16 %v1549
        %v2627 = vunpack.c.l.b16 %v1550
        %v2628 = vunpack.c.h.b16 %v1550
        %v2629 = vunpack.c.l.b16 %v1551
        %v2630 = vunpack.c.l.b16 %v1552
        %v2631 = vunpack.c.h.b16 %v1552
        %v2632 = vunpack.c.l.b16 %v1553
        %v2633 = vunpack.c.h.b16 %v1553
        %v2634 = vunpack.c.l.b16 %v1554
        %v2635 = vunpack.c.h.b16 %v1554
        %v2636 = vunpack.c.l.b16 %v1555
        %v2637 = vunpack.c.l.b16 %v1556
        %v2638 = vunpack.c.h.b16 %v1556
        %v2639 = vunpack.c.l.b16 %v1557
        %v2640 = vunpack.c.h.b16 %v1557
        %v2641 = vunpack.c.l.b16 %v1558
        %v2642 = vunpack.c.h.b16 %v1558
        %v2643 = vunpack.c.l.b16 %v1559
        %v2644 = vunpack.c.l.b16 %v1560
        %v2645 = vunpack.c.h.b16 %v1560
        %v2646 = vunpack.c.l.b16 %v1561
        %v2647 = vunpack.c.h.b16 %v1561
        %v2648 = vunpack.c.l.b16 %v1562
        %v2649 = vunpack.c.h.b16 %v1562
        %v2650 = vunpack.c.l.b16 %v1563
        %v2651 = vunpack.c.l.b16 %v1564
        %v2652 = vunpack.c.h.b16 %v1564
        %v2653 = vunpack.c.l.b16 %v1565
        %v2654 = vunpack.c.h.b16 %v1565
        %v2655 = vunpack.c.l.b16 %v1566
        %v2656 = vunpack.c.h.b16 %v1566
        %v2657 = vunpack.c.l.b16 %v1567
        %v2658 = vunpack.c.l.b16 %v1568
        %v2659 = vunpack.c.h.b16 %v1568
        %v2660 = vunpack.c.l.b16 %v1569
        %v2661 = vunpack.c.h.b16 %v1569
        %v2662 = vunpack.c.l.b16 %v1570
        %v2663 = vunpack.c.h.b16 %v1570
        %v2664 = vunpack.c.l.b16 %v1571
        %v2665 = vpack.c.b16 %v2000, %v1993
        %v2666 = vpack.c.b16 %v2001, %v1994
        %v2667 = vpack.c.b16 %v2002, %v1995
        %v2668 = vpack.c.b16 %v2003, %v1996
        %v2669 = vpack.c.b16 %v2004, %v1997
        %v2670 = vpack.c.b16 %v2005, %v1998
        %v2671 = vpack.c.b16 %v2006, %v1999
        %v2672 = vpack.c.b16 %v2014, %v2007
        %v2673 = vpack.c.b16 %v2015, %v2008
        %v2674 = vpack.c.b16 %v2016, %v2009
        %v2675 = vpack.c.b16 %v2017, %v2010
        %v2676 = vpack.c.b16 %v2018, %v2011
        %v2677 = vpack.c.b16 %v2019, %v2012
        %v2678 = vpack.c.b16 %v2020, %v2013
        %v2679 = vpack.c.b16 %v2028, %v2021
        %v2680 = vpack.c.b16 %v2029, %v2022
        %v2681 = vpack.c.b16 %v2030, %v2023
        %v2682 = vpack.c.b16 %v2031, %v2024
        %v2683 = vpack.c.b16 %v2032, %v2025
        %v2684 = vpack.c.b16 %v2033, %v2026
        %v2685 = vpack.c.b16 %v2034, %v2027
        %v2686 = vpack.c.b16 %v2042, %v2035
        %v2687 = vpack.c.b16 %v2043, %v2036
        %v2688 = vpack.c.b16 %v2044, %v2037
        %v2689 = vpack.c.b16 %v2045, %v2038
        %v2690 = vpack.c.b16 %v2046, %v2039
        %v2691 = vpack.c.b16 %v2047, %v2040
        %v2692 = vpack.c.b16 %v2048, %v2041
        %v2693 = vpack.c.b16 %v2056, %v2049
        %v2694 = vpack.c.b16 %v2057, %v2050
        %v2695 = vpack.c.b16 %v2058, %v2051
        %v2696 = vpack.c.b16 %v2059, %v2052
        %v2697 = vpack.c.b16 %v2060, %v2053
        %v2698 = vpack.c.b16 %v2061, %v2054
        %v2699 = vpack.c.b16 %v2062, %v2055
        %v2700 = vpack.c.b16 %v2070, %v2063
        %v2701 = vpack.c.b16 %v2071, %v2064
        %v2702 = vpack.c.b16 %v2072, %v2065
        %v2703 = vpack.c.b16 %v2073, %v2066
        %v2704 = vpack.c.b16 %v2074, %v2067
        %v2705 = vpack.c.b16 %v2075, %v2068
        %v2706 = vpack.c.b16 %v2076, %v2069
        %v2707 = vpack.c.b16 %v2084, %v2077
        %v2708 = vpack.c.b16 %v2085, %v2078
        %v2709 = vpack.c.b16 %v2086, %v2079
        %v2710 = vpack.c.b16 %v2087, %v2080
        %v2711 = vpack.c.b16 %v2088, %v2081
        %v2712 = vpack.c.b16 %v2089, %v2082
        %v2713 = vpack.c.b16 %v2090, %v2083
        %v2714 = vpack.c.b16 %v2098, %v2091
        %v2715 = vpack.c.b16 %v2099, %v2092
        %v2716 = vpack.c.b16 %v2100, %v2093
        %v2717 = vpack.c.b16 %v2101, %v2094
        %v2718 = vpack.c.b16 %v2102, %v2095
        %v2719 = vpack.c.b16 %v2103, %v2096
        %v2720 = vpack.c.b16 %v2104, %v2097
        %v2721 = vpack.c.b16 %v2112, %v2105
        %v2722 = vpack.c.b16 %v2113, %v2106
        %v2723 = vpack.c.b16 %v2114, %v2107
        %v2724 = vpack.c.b16 %v2115, %v2108
        %v2725 = vpack.c.b16 %v2116, %v2109
        %v2726 = vpack.c.b16 %v2117, %v2110
        %v2727 = vpack.c.b16 %v2118, %v2111
        %v2728 = vpack.c.b16 %v2126, %v2119
        %v2729 = vpack.c.b16 %v2127, %v2120
        %v2730 = vpack.c.b16 %v2128, %v2121
        %v2731 = vpack.c.b16 %v2129, %v2122
        %v2732 = vpack.c.b16 %v2130, %v2123
        %v2733 = vpack.c.b16 %v2131, %v2124
        %v2734 = vpack.c.b16 %v2132, %v2125
        %v2735 = vpack.c.b16 %v2140, %v2133
        %v2736 = vpack.c.b16 %v2141, %v2134
        %v2737 = vpack.c.b16 %v2142, %v2135
        %v2738 = vpack.c.b16 %v2143, %v2136
        %v2739 = vpack.c.b16 %v2144, %v2137
        %v2740 = vpack.c.b16 %v2145, %v2138
        %v2741 = vpack.c.b16 %v2146, %v2139
        %v2742 = vpack.c.b16 %v2154, %v2147
        %v2743 = vpack.c.b16 %v2155, %v2148
        %v2744 = vpack.c.b16 %v2156, %v2149
        %v2745 = vpack.c.b16 %v2157, %v2150
        %v2746 = vpack.c.b16 %v2158, %v2151
        %v2747 = vpack.c.b16 %v2159, %v2152
        %v2748 = vpack.c.b16 %v2160, %v2153
        %v2749 = vpack.c.b16 %v2168, %v2161
        %v2750 = vpack.c.b16 %v2169, %v2162
        %v2751 = vpack.c.b16 %v2170, %v2163
        %v2752 = vpack.c.b16 %v2171, %v2164
        %v2753 = vpack.c.b16 %v2172, %v2165
        %v2754 = vpack.c.b16 %v2173, %v2166
        %v2755 = vpack.c.b16 %v2174, %v2167
        %v2756 = vpack.c.b16 %v2182, %v2175
        %v2757 = vpack.c.b16 %v2183, %v2176
        %v2758 = vpack.c.b16 %v2184, %v2177
        %v2759 = vpack.c.b16 %v2185, %v2178
        %v2760 = vpack.c.b16 %v2186, %v2179
        %v2761 = vpack.c.b16 %v2187, %v2180
        %v2762 = vpack.c.b16 %v2188, %v2181
        %v2763 = vpack.c.b16 %v2196, %v2189
        %v2764 = vpack.c.b16 %v2197, %v2190
        %v2765 = vpack.c.b16 %v2198, %v2191
        %v2766 = vpack.c.b16 %v2199, %v2192
        %v2767 = vpack.c.b16 %v2200, %v2193
        %v2768 = vpack.c.b16 %v2201, %v2194
        %v2769 = vpack.c.b16 %v2202, %v2195
        %v2770 = vpack.c.b16 %v2210, %v2203
        %v2771 = vpack.c.b16 %v2211, %v2204
        %v2772 = vpack.c.b16 %v2212, %v2205
        %v2773 = vpack.c.b16 %v2213, %v2206
        %v2774 = vpack.c.b16 %v2214, %v2207
        %v2775 = vpack.c.b16 %v2215, %v2208
        %v2776 = vpack.c.b16 %v2216, %v2209
        %v2777 = vpack.c.b16 %v2224, %v2217
        %v2778 = vpack.c.b16 %v2225, %v2218
        %v2779 = vpack.c.b16 %v2226, %v2219
        %v2780 = vpack.c.b16 %v2227, %v2220
        %v2781 = vpack.c.b16 %v2228, %v2221
        %v2782 = vpack.c.b16 %v2229, %v2222
        %v2783 = vpack.c.b16 %v2230, %v2223
        %v2784 = vpack.c.b16 %v2238, %v2231
        %v2785 = vpack.c.b16 %v2239, %v2232
        %v2786 = vpack.c.b16 %v2240, %v2233
        %v2787 = vpack.c.b16 %v2241, %v2234
        %v2788 = vpack.c.b16 %v2242, %v2235
        %v2789 = vpack.c.b16 %v2243, %v2236
        %v2790 = vpack.c.b16 %v2244, %v2237
        %v2791 = vpack.c.b16 %v2252, %v2245
        %v2792 = vpack.c.b16 %v2253, %v2246
        %v2793 = vpack.c.b16 %v2254, %v2247
        %v2794 = vpack.c.b16 %v2255, %v2248
        %v2795 = vpack.c.b16 %v2256, %v2249
        %v2796 = vpack.c.b16 %v2257, %v2250
        %v2797 = vpack.c.b16 %v2258, %v2251
        %v2798 = vpack.c.b16 %v2266, %v2259
        %v2799 = vpack.c.b16 %v2267, %v2260
        %v2800 = vpack.c.b16 %v2268, %v2261
        %v2801 = vpack.c.b16 %v2269, %v2262
        %v2802 = vpack.c.b16 %v2270, %v2263
        %v2803 = vpack.c.b16 %v2271, %v2264
        %v2804 = vpack.c.b16 %v2272, %v2265
        %v2805 = vpack.c.b16 %v2280, %v2273
        %v2806 = vpack.c.b16 %v2281, %v2274
        %v2807 = vpack.c.b16 %v2282, %v2275
        %v2808 = vpack.c.b16 %v2283, %v2276
        %v2809 = vpack.c.b16 %v2284, %v2277
        %v2810 = vpack.c.b16 %v2285, %v2278
        %v2811 = vpack.c.b16 %v2286, %v2279
        %v2812 = vpack.c.b16 %v2294, %v2287
        %v2813 = vpack.c.b16 %v2295, %v2288
        %v2814 = vpack.c.b16 %v2296, %v2289
        %v2815 = vpack.c.b16 %v2297, %v2290
        %v2816 = vpack.c.b16 %v2298, %v2291
        %v2817 = vpack.c.b16 %v2299, %v2292
        %v2818 = vpack.c.b16 %v2300, %v2293
        %v2819 = vpack.c.b16 %v2308, %v2301
        %v2820 = vpack.c.b16 %v2309, %v2302
        %v2821 = vpack.c.b16 %v2310, %v2303
        %v2822 = vpack.c.b16 %v2311, %v2304
        %v2823 = vpack.c.b16 %v2312, %v2305
        %v2824 = vpack.c.b16 %v2313, %v2306
        %v2825 = vpack.c.b16 %v2314, %v2307
        %v2826 = vpack.c.b16 %v2322, %v2315
        %v2827 = vpack.c.b16 %v2323, %v2316
        %v2828 = vpack.c.b16 %v2324, %v2317
        %v2829 = vpack.c.b16 %v2325, %v2318
        %v2830 = vpack.c.b16 %v2326, %v2319
        %v2831 = vpack.c.b16 %v2327, %v2320
        %v2832 = vpack.c.b16 %v2328, %v2321
        %v2833 = vpack.c.b16 %v2336, %v2329
        %v2834 = vpack.c.b16 %v2337, %v2330
        %v2835 = vpack.c.b16 %v2338, %v2331
        %v2836 = vpack.c.b16 %v2339, %v2332
        %v2837 = vpack.c.b16 %v2340, %v2333
        %v2838 = vpack.c.b16 %v2341, %v2334
        %v2839 = vpack.c.b16 %v2342, %v2335
        %v2840 = vpack.c.b16 %v2350, %v2343
        %v2841 = vpack.c.b16 %v2351, %v2344
        %v2842 = vpack.c.b16 %v2352, %v2345
        %v2843 = vpack.c.b16 %v2353, %v2346
        %v2844 = vpack.c.b16 %v2354, %v2347
        %v2845 = vpack.c.b16 %v2355, %v2348
        %v2846 = vpack.c.b16 %v2356, %v2349
        %v2847 = vpack.c.b16 %v2364, %v2357
        %v2848 = vpack.c.b16 %v2365, %v2358
        %v2849 = vpack.c.b16 %v2366, %v2359
        %v2850 = vpack.c.b16 %v2367, %v2360
        %v2851 = vpack.c.b16 %v2368, %v2361
        %v2852 = vpack.c.b16 %v2369, %v2362
        %v2853 = vpack.c.b16 %v2370, %v2363
        %v2854 = vpack.c.b16 %v2378, %v2371
        %v2855 = vpack.c.b16 %v2379, %v2372
        %v2856 = vpack.c.b16 %v2380, %v2373
        %v2857 = vpack.c.b16 %v2381, %v2374
        %v2858 = vpack.c.b16 %v2382, %v2375
        %v2859 = vpack.c.b16 %v2383, %v2376
        %v2860 = vpack.c.b16 %v2384, %v2377
        %v2861 = vpack.c.b16 %v2392, %v2385
        %v2862 = vpack.c.b16 %v2393, %v2386
        %v2863 = vpack.c.b16 %v2394, %v2387
        %v2864 = vpack.c.b16 %v2395, %v2388
        %v2865 = vpack.c.b16 %v2396, %v2389
        %v2866 = vpack.c.b16 %v2397, %v2390
        %v2867 = vpack.c.b16 %v2398, %v2391
        %v2868 = vpack.c.b16 %v2406, %v2399
        %v2869 = vpack.c.b16 %v2407, %v2400
        %v2870 = vpack.c.b16 %v2408, %v2401
        %v2871 = vpack.c.b16 %v2409, %v2402
        %v2872 = vpack.c.b16 %v2410, %v2403
        %v2873 = vpack.c.b16 %v2411, %v2404
        %v2874 = vpack.c.b16 %v2412, %v2405
        %v2875 = vpack.c.b16 %v2420, %v2413
        %v2876 = vpack.c.b16 %v2421, %v2414
        %v2877 = vpack.c.b16 %v2422, %v2415
        %v2878 = vpack.c.b16 %v2423, %v2416
        %v2879 = vpack.c.b16 %v2424, %v2417
        %v2880 = vpack.c.b16 %v2425, %v2418
        %v2881 = vpack.c.b16 %v2426, %v2419
        %v2882 = vpack.c.b16 %v2434, %v2427
        %v2883 = vpack.c.b16 %v2435, %v2428
        %v2884 = vpack.c.b16 %v2436, %v2429
        %v2885 = vpack.c.b16 %v2437, %v2430
        %v2886 = vpack.c.b16 %v2438, %v2431
        %v2887 = vpack.c.b16 %v2439, %v2432
        %v2888 = vpack.c.b16 %v2440, %v2433
        %v2889 = vpack.c.b16 %v2448, %v2441
        %v2890 = vpack.c.b16 %v2449, %v2442
        %v2891 = vpack.c.b16 %v2450, %v2443
        %v2892 = vpack.c.b16 %v2451, %v2444
        %v2893 = vpack.c.b16 %v2452, %v2445
        %v2894 = vpack.c.b16 %v2453, %v2446
        %v2895 = vpack.c.b16 %v2454, %v2447
        %v2896 = vpack.c.b16 %v2462, %v2455
        %v2897 = vpack.c.b16 %v2463, %v2456
        %v2898 = vpack.c.b16 %v2464, %v2457
        %v2899 = vpack.c.b16 %v2465, %v2458
        %v2900 = vpack.c.b16 %v2466, %v2459
        %v2901 = vpack.c.b16 %v2467, %v2460
        %v2902 = vpack.c.b16 %v2468, %v2461
        %v2903 = vpack.c.b16 %v2476, %v2469
        %v2904 = vpack.c.b16 %v2477, %v2470
        %v2905 = vpack.c.b16 %v2478, %v2471
        %v2906 = vpack.c.b16 %v2479, %v2472
        %v2907 = vpack.c.b16 %v2480, %v2473
        %v2908 = vpack.c.b16 %v2481, %v2474
        %v2909 = vpack.c.b16 %v2482, %v2475
        %v2910 = vpack.c.b16 %v2490, %v2483
        %v2911 = vpack.c.b16 %v2491, %v2484
        %v2912 = vpack.c.b16 %v2492, %v2485
        %v2913 = vpack.c.b16 %v2493, %v2486
        %v2914 = vpack.c.b16 %v2494, %v2487
        %v2915 = vpack.c.b16 %v2495, %v2488
        %v2916 = vpack.c.b16 %v2496, %v2489
        %v2917 = vpack.c.b16 %v2504, %v2497
        %v2918 = vpack.c.b16 %v2505, %v2498
        %v2919 = vpack.c.b16 %v2506, %v2499
        %v2920 = vpack.c.b16 %v2507, %v2500
        %v2921 = vpack.c.b16 %v2508, %v2501
        %v2922 = vpack.c.b16 %v2509, %v2502
        %v2923 = vpack.c.b16 %v2510, %v2503
        %v2924 = vpack.c.b16 %v2518, %v2511
        %v2925 = vpack.c.b16 %v2519, %v2512
        %v2926 = vpack.c.b16 %v2520, %v2513
        %v2927 = vpack.c.b16 %v2521, %v2514
        %v2928 = vpack.c.b16 %v2522, %v2515
        %v2929 = vpack.c.b16 %v2523, %v2516
        %v2930 = vpack.c.b16 %v2524, %v2517
        %v2931 = vpack.c.b16 %v2532, %v2525
        %v2932 = vpack.c.b16 %v2533, %v2526
        %v2933 = vpack.c.b16 %v2534, %v2527
        %v2934 = vpack.c.b16 %v2535, %v2528
        %v2935 = vpack.c.b16 %v2536, %v2529
        %v2936 = vpack.c.b16 %v2537, %v2530
        %v2937 = vpack.c.b16 %v2538, %v2531
        %v2938 = vpack.c.b16 %v2546, %v2539
        %v2939 = vpack.c.b16 %v2547, %v2540
        %v2940 = vpack.c.b16 %v2548, %v2541
        %v2941 = vpack.c.b16 %v2549, %v2542
        %v2942 = vpack.c.b16 %v2550, %v2543
        %v2943 = vpack.c.b16 %v2551, %v2544
        %v2944 = vpack.c.b16 %v2552, %v2545
        %v2945 = vpack.c.b16 %v2560, %v2553
        %v2946 = vpack.c.b16 %v2561, %v2554
        %v2947 = vpack.c.b16 %v2562, %v2555
        %v2948 = vpack.c.b16 %v2563, %v2556
        %v2949 = vpack.c.b16 %v2564, %v2557
        %v2950 = vpack.c.b16 %v2565, %v2558
        %v2951 = vpack.c.b16 %v2566, %v2559
        %v2952 = vpack.c.b16 %v2574, %v2567
        %v2953 = vpack.c.b16 %v2575, %v2568
        %v2954 = vpack.c.b16 %v2576, %v2569
        %v2955 = vpack.c.b16 %v2577, %v2570
        %v2956 = vpack.c.b16 %v2578, %v2571
        %v2957 = vpack.c.b16 %v2579, %v2572
        %v2958 = vpack.c.b16 %v2580, %v2573
        %v2959 = vpack.c.b16 %v2588, %v2581
        %v2960 = vpack.c.b16 %v2589, %v2582
        %v2961 = vpack.c.b16 %v2590, %v2583
        %v2962 = vpack.c.b16 %v2591, %v2584
        %v2963 = vpack.c.b16 %v2592, %v2585
        %v2964 = vpack.c.b16 %v2593, %v2586
        %v2965 = vpack.c.b16 %v2594, %v2587
        %v2966 = vpack.c.b16 %v2602, %v2595
        %v2967 = vpack.c.b16 %v2603, %v2596
        %v2968 = vpack.c.b16 %v2604, %v2597
        %v2969 = vpack.c.b16 %v2605, %v2598
        %v2970 = vpack.c.b16 %v2606, %v2599
        %v2971 = vpack.c.b16 %v2607, %v2600
        %v2972 = vpack.c.b16 %v2608, %v2601
        %v2973 = vpack.c.b16 %v2616, %v2609
        %v2974 = vpack.c.b16 %v2617, %v2610
        %v2975 = vpack.c.b16 %v2618, %v2611
        %v2976 = vpack.c.b16 %v2619, %v2612
        %v2977 = vpack.c.b16 %v2620, %v2613
        %v2978 = vpack.c.b16 %v2621, %v2614
        %v2979 = vpack.c.b16 %v2622, %v2615
        %v2980 = vpack.c.b16 %v2630, %v2623
        %v2981 = vpack.c.b16 %v2631, %v2624
        %v2982 = vpack.c.b16 %v2632, %v2625
        %v2983 = vpack.c.b16 %v2633, %v2626
        %v2984 = vpack.c.b16 %v2634, %v2627
        %v2985 = vpack.c.b16 %v2635, %v2628
        %v2986 = vpack.c.b16 %v2636, %v2629
        %v2987 = vpack.c.b16 %v2644, %v2637
        %v2988 = vpack.c.b16 %v2645, %v2638
        %v2989 = vpack.c.b16 %v2646, %v2639
        %v2990 = vpack.c.b16 %v2647, %v2640
        %v2991 = vpack.c.b16 %v2648, %v2641
        %v2992 = vpack.c.b16 %v2649, %v2642
        %v2993 = vpack.c.b16 %v2650, %v2643
        %v2994 = vpack.c.b16 %v2658, %v2651
        %v2995 = vpack.c.b16 %v2659, %v2652
        %v2996 = vpack.c.b16 %v2660, %v2653
        %v2997 = vpack.c.b16 %v2661, %v2654
        %v2998 = vpack.c.b16 %v2662, %v2655
        %v2999 = vpack.c.b16 %v2663, %v2656
        %v3000 = vpack.c.b16 %v2664, %v2657
        %3337 = vmatprep.subr.bf16.mxu0 %v2666
        %3338 = vmatpush1.bf16.msra.mxu0 %v2665
        %3339 = vmatprep.subr.bf16.mxu0 %v2673
        %3340 = vmatpush1.bf16.msra.mxu0 %v2672
        %3341 = vmatprep.subr.bf16.mxu0 %v2680
        %3342 = vmatpush1.bf16.msra.mxu0 %v2679
        %3343 = vmatprep.subr.bf16.mxu0 %v2687
        %3344 = vmatpush1.bf16.msra.mxu0 %v2686
        %3345 = vmatprep.subr.bf16.mxu0 %v2694
        %3346 = vmatpush1.bf16.msra.mxu0 %v2693
        %3347 = vmatprep.subr.bf16.mxu0 %v2701
        %3348 = vmatpush1.bf16.msra.mxu0 %v2700
        %3349 = vmatprep.subr.bf16.mxu0 %v2708
        %3350 = vmatpush1.bf16.msra.mxu0 %v2707
        %3351 = vmatprep.subr.bf16.mxu0 %v2715
        %3352 = vmatpush1.bf16.msra.mxu0 %v2714
        %3353 = vmatprep.subr.bf16.mxu0 %v2722
        %3354 = vmatpush1.bf16.msra.mxu0 %v2721
        %3355 = vmatprep.subr.bf16.mxu0 %v2729
        %3356 = vmatpush1.bf16.msra.mxu0 %v2728
        %3357 = vmatprep.subr.bf16.mxu0 %v2736
        %3358 = vmatpush1.bf16.msra.mxu0 %v2735
        %3359 = vmatprep.subr.bf16.mxu0 %v2743
        %3360 = vmatpush1.bf16.msra.mxu0 %v2742
        %3361 = vmatprep.subr.bf16.mxu0 %v2750
        %3362 = vmatpush1.bf16.msra.mxu0 %v2749
        %3363 = vmatprep.subr.bf16.mxu0 %v2757
        %3364 = vmatpush1.bf16.msra.mxu0 %v2756
        %3365 = vmatprep.subr.bf16.mxu0 %v2764
        %3366 = vmatpush1.bf16.msra.mxu0 %v2763
        %3367 = vmatprep.subr.bf16.mxu0 %v2771
        %3368 = vmatpush1.bf16.msra.mxu0 %v2770
        %3369 = vmatprep.mubr.bf16.mxu0 %v1183
        %3370 = vmatmul.mubr.bf16.gmra.mrb[0].mxu0 %v1182
        %v3371 = vpop.f32.mrb[0].mxu0
        %v3372 = vadd.f32 %v1577, %v3371
        %v3373 = vpop.f32.mrb[0].mxu0
        %v3374 = vadd.f32 %v1581, %v3373
        %v3375 = vpop.f32.mrb[0].mxu0
        %v3376 = vpop.f32.mrb[0].mxu0
        %3377 = vdwg.mxu0
        %3378 = vmatprep.subr.bf16.mxu0 %v2778
        %3379 = vmatpush1.bf16.msra.mxu0 %v2777
        %3380 = vmatprep.subr.bf16.mxu0 %v2785
        %3381 = vmatpush1.bf16.msra.mxu0 %v2784
        %3382 = vmatprep.subr.bf16.mxu0 %v2792
        %3383 = vmatpush1.bf16.msra.mxu0 %v2791
        %3384 = vmatprep.subr.bf16.mxu0 %v2799
        %3385 = vmatpush1.bf16.msra.mxu0 %v2798
        %3386 = vmatprep.subr.bf16.mxu0 %v2806
        %3387 = vmatpush1.bf16.msra.mxu0 %v2805
        %3388 = vmatprep.subr.bf16.mxu0 %v2813
        %3389 = vmatpush1.bf16.msra.mxu0 %v2812
        %3390 = vmatprep.subr.bf16.mxu0 %v2820
        %3391 = vmatpush1.bf16.msra.mxu0 %v2819
        %3392 = vmatprep.subr.bf16.mxu0 %v2827
        %3393 = vmatpush1.bf16.msra.mxu0 %v2826
        %3394 = vmatprep.subr.bf16.mxu0 %v2834
        %3395 = vmatpush1.bf16.msra.mxu0 %v2833
        %3396 = vmatprep.subr.bf16.mxu0 %v2841
        %3397 = vmatpush1.bf16.msra.mxu0 %v2840
        %3398 = vmatprep.subr.bf16.mxu0 %v2848
        %3399 = vmatpush1.bf16.msra.mxu0 %v2847
        %3400 = vmatprep.subr.bf16.mxu0 %v2855
        %3401 = vmatpush1.bf16.msra.mxu0 %v2854
        %3402 = vmatprep.subr.bf16.mxu0 %v2862
        %3403 = vmatpush1.bf16.msra.mxu0 %v2861
        %3404 = vmatprep.subr.bf16.mxu0 %v2869
        %3405 = vmatpush1.bf16.msra.mxu0 %v2868
        %3406 = vmatprep.subr.bf16.mxu0 %v2876
        %3407 = vmatpush1.bf16.msra.mxu0 %v2875
        %3408 = vmatprep.subr.bf16.mxu0 %v2883
        %3409 = vmatpush1.bf16.msra.mxu0 %v2882
        %3410 = vmatprep.mubr.bf16.mxu0 %v1185
        %3411 = vmatmul.mubr.bf16.gmra.mrb[0].mxu0 %v1184
        %v3412 = vpop.f32.mrb[0].mxu0
        %v3413 = vadd.f32 %v3372, %v3412
        %v3414 = vpop.f32.mrb[0].mxu0
        %v3415 = vadd.f32 %v3374, %v3414
        %v3416 = vpop.f32.mrb[0].mxu0
        %v3417 = vpop.f32.mrb[0].mxu0
        %3418 = vdwg.mxu0
        %3419 = vmatprep.subr.bf16.mxu0 %v2890
        %3420 = vmatpush1.bf16.msra.mxu0 %v2889
        %3421 = vmatprep.subr.bf16.mxu0 %v2897
        %3422 = vmatpush1.bf16.msra.mxu0 %v2896
        %3423 = vmatprep.subr.bf16.mxu0 %v2904
        %3424 = vmatpush1.bf16.msra.mxu0 %v2903
        %3425 = vmatprep.subr.bf16.mxu0 %v2911
        %3426 = vmatpush1.bf16.msra.mxu0 %v2910
        %3427 = vmatprep.subr.bf16.mxu0 %v2918
        %3428 = vmatpush1.bf16.msra.mxu0 %v2917
        %3429 = vmatprep.subr.bf16.mxu0 %v2925
        %3430 = vmatpush1.bf16.msra.mxu0 %v2924
        %3431 = vmatprep.subr.bf16.mxu0 %v2932
        %3432 = vmatpush1.bf16.msra.mxu0 %v2931
        %3433 = vmatprep.subr.bf16.mxu0 %v2939
        %3434 = vmatpush1.bf16.msra.mxu0 %v2938
        %3435 = vmatprep.subr.bf16.mxu0 %v2946
        %3436 = vmatpush1.bf16.msra.mxu0 %v2945
        %3437 = vmatprep.subr.bf16.mxu0 %v2953
        %3438 = vmatpush1.bf16.msra.mxu0 %v2952
        %3439 = vmatprep.subr.bf16.mxu0 %v2960
        %3440 = vmatpush1.bf16.msra.mxu0 %v2959
        %3441 = vmatprep.subr.bf16.mxu0 %v2967
        %3442 = vmatpush1.bf16.msra.mxu0 %v2966
        %3443 = vmatprep.subr.bf16.mxu0 %v2974
        %3444 = vmatpush1.bf16.msra.mxu0 %v2973
        %3445 = vmatprep.subr.bf16.mxu0 %v2981
        %3446 = vmatpush1.bf16.msra.mxu0 %v2980
        %3447 = vmatprep.subr.bf16.mxu0 %v2988
        %3448 = vmatpush1.bf16.msra.mxu0 %v2987
        %3449 = vmatprep.subr.bf16.mxu0 %v2995
        %3450 = vmatpush1.bf16.msra.mxu0 %v2994
        %3451 = vmatprep.mubr.bf16.mxu0 %v1187
        %3452 = vmatmul.mubr.bf16.gmra.mrb[0].mxu0 %v1186
        %v3453 = vpop.f32.mrb[0].mxu0
        %v3454 = vadd.f32 %v3413, %v3453
        %v3455 = vpop.f32.mrb[0].mxu0
        %v3456 = vadd.f32 %v3415, %v3455
        %v3457 = vpop.f32.mrb[0].mxu0
        %v3458 = vpop.f32.mrb[0].mxu0
        %3459 = vdwg.mxu0
        %3460 = vmatprep.subr.bf16.mxu0 %v2668
        %3461 = vmatpush1.bf16.msra.mxu0 %v2667
        %3462 = vmatprep.subr.bf16.mxu0 %v2675
        %3463 = vmatpush1.bf16.msra.mxu0 %v2674
        %3464 = vmatprep.subr.bf16.mxu0 %v2682
        %3465 = vmatpush1.bf16.msra.mxu0 %v2681
        %3466 = vmatprep.subr.bf16.mxu0 %v2689
        %3467 = vmatpush1.bf16.msra.mxu0 %v2688
        %3468 = vmatprep.subr.bf16.mxu0 %v2696
        %3469 = vmatpush1.bf16.msra.mxu0 %v2695
        %3470 = vmatprep.subr.bf16.mxu0 %v2703
        %3471 = vmatpush1.bf16.msra.mxu0 %v2702
        %3472 = vmatprep.subr.bf16.mxu0 %v2710
        %3473 = vmatpush1.bf16.msra.mxu0 %v2709
        %3474 = vmatprep.subr.bf16.mxu0 %v2717
        %3475 = vmatpush1.bf16.msra.mxu0 %v2716
        %3476 = vmatprep.subr.bf16.mxu0 %v2724
        %3477 = vmatpush1.bf16.msra.mxu0 %v2723
        %3478 = vmatprep.subr.bf16.mxu0 %v2731
        %3479 = vmatpush1.bf16.msra.mxu0 %v2730
        %3480 = vmatprep.subr.bf16.mxu0 %v2738
        %3481 = vmatpush1.bf16.msra.mxu0 %v2737
        %3482 = vmatprep.subr.bf16.mxu0 %v2745
        %3483 = vmatpush1.bf16.msra.mxu0 %v2744
        %3484 = vmatprep.subr.bf16.mxu0 %v2752
        %3485 = vmatpush1.bf16.msra.mxu0 %v2751
        %3486 = vmatprep.subr.bf16.mxu0 %v2759
        %3487 = vmatpush1.bf16.msra.mxu0 %v2758
        %3488 = vmatprep.subr.bf16.mxu0 %v2766
        %3489 = vmatpush1.bf16.msra.mxu0 %v2765
        %3490 = vmatprep.subr.bf16.mxu0 %v2773
        %3491 = vmatpush1.bf16.msra.mxu0 %v2772
        %3492 = vmatprep.mubr.bf16.mxu0 %v1183
        %3493 = vmatmul.mubr.bf16.gmra.mrb[0].mxu0 %v1182
        %v3494 = vpop.f32.mrb[0].mxu0
        %v3495 = vadd.f32 %v1585, %v3494
        %v3496 = vpop.f32.mrb[0].mxu0
        %v3497 = vadd.f32 %v1589, %v3496
        %v3498 = vpop.f32.mrb[0].mxu0
        %v3499 = vpop.f32.mrb[0].mxu0
        %3500 = vdwg.mxu0
        %3501 = vmatprep.subr.bf16.mxu0 %v2780
        %3502 = vmatpush1.bf16.msra.mxu0 %v2779
        %3503 = vmatprep.subr.bf16.mxu0 %v2787
        %3504 = vmatpush1.bf16.msra.mxu0 %v2786
        %3505 = vmatprep.subr.bf16.mxu0 %v2794
        %3506 = vmatpush1.bf16.msra.mxu0 %v2793
        %3507 = vmatprep.subr.bf16.mxu0 %v2801
        %3508 = vmatpush1.bf16.msra.mxu0 %v2800
        %3509 = vmatprep.subr.bf16.mxu0 %v2808
        %3510 = vmatpush1.bf16.msra.mxu0 %v2807
        %3511 = vmatprep.subr.bf16.mxu0 %v2815
        %3512 = vmatpush1.bf16.msra.mxu0 %v2814
        %3513 = vmatprep.subr.bf16.mxu0 %v2822
        %3514 = vmatpush1.bf16.msra.mxu0 %v2821
        %3515 = vmatprep.subr.bf16.mxu0 %v2829
        %3516 = vmatpush1.bf16.msra.mxu0 %v2828
        %3517 = vmatprep.subr.bf16.mxu0 %v2836
        %3518 = vmatpush1.bf16.msra.mxu0 %v2835
        %3519 = vmatprep.subr.bf16.mxu0 %v2843
        %3520 = vmatpush1.bf16.msra.mxu0 %v2842
        %3521 = vmatprep.subr.bf16.mxu0 %v2850
        %3522 = vmatpush1.bf16.msra.mxu0 %v2849
        %3523 = vmatprep.subr.bf16.mxu0 %v2857
        %3524 = vmatpush1.bf16.msra.mxu0 %v2856
        %3525 = vmatprep.subr.bf16.mxu0 %v2864
        %3526 = vmatpush1.bf16.msra.mxu0 %v2863
        %3527 = vmatprep.subr.bf16.mxu0 %v2871
        %3528 = vmatpush1.bf16.msra.mxu0 %v2870
        %3529 = vmatprep.subr.bf16.mxu0 %v2878
        %3530 = vmatpush1.bf16.msra.mxu0 %v2877
        %3531 = vmatprep.subr.bf16.mxu0 %v2885
        %3532 = vmatpush1.bf16.msra.mxu0 %v2884
        %3533 = vmatprep.mubr.bf16.mxu0 %v1185
        %3534 = vmatmul.mubr.bf16.gmra.mrb[0].mxu0 %v1184
        %v3535 = vpop.f32.mrb[0].mxu0
        %v3536 = vadd.f32 %v3495, %v3535
        %v3537 = vpop.f32.mrb[0].mxu0
        %v3538 = vadd.f32 %v3497, %v3537
        %v3539 = vpop.f32.mrb[0].mxu0
        %v3540 = vpop.f32.mrb[0].mxu0
        %3541 = vdwg.mxu0
        %3542 = vmatprep.subr.bf16.mxu0 %v2892
        %3543 = vmatpush1.bf16.msra.mxu0 %v2891
        %3544 = vmatprep.subr.bf16.mxu0 %v2899
        %3545 = vmatpush1.bf16.msra.mxu0 %v2898
        %3546 = vmatprep.subr.bf16.mxu0 %v2906
        %3547 = vmatpush1.bf16.msra.mxu0 %v2905
        %3548 = vmatprep.subr.bf16.mxu0 %v2913
        %3549 = vmatpush1.bf16.msra.mxu0 %v2912
        %3550 = vmatprep.subr.bf16.mxu0 %v2920
        %3551 = vmatpush1.bf16.msra.mxu0 %v2919
        %3552 = vmatprep.subr.bf16.mxu0 %v2927
        %3553 = vmatpush1.bf16.msra.mxu0 %v2926
        %3554 = vmatprep.subr.bf16.mxu0 %v2934
        %3555 = vmatpush1.bf16.msra.mxu0 %v2933
        %3556 = vmatprep.subr.bf16.mxu0 %v2941
        %3557 = vmatpush1.bf16.msra.mxu0 %v2940
        %3558 = vmatprep.subr.bf16.mxu0 %v2948
        %3559 = vmatpush1.bf16.msra.mxu0 %v2947
        %3560 = vmatprep.subr.bf16.mxu0 %v2955
        %3561 = vmatpush1.bf16.msra.mxu0 %v2954
        %3562 = vmatprep.subr.bf16.mxu0 %v2962
        %3563 = vmatpush1.bf16.msra.mxu0 %v2961
        %3564 = vmatprep.subr.bf16.mxu0 %v2969
        %3565 = vmatpush1.bf16.msra.mxu0 %v2968
        %3566 = vmatprep.subr.bf16.mxu0 %v2976
        %3567 = vmatpush1.bf16.msra.mxu0 %v2975
        %3568 = vmatprep.subr.bf16.mxu0 %v2983
        %3569 = vmatpush1.bf16.msra.mxu0 %v2982
        %3570 = vmatprep.subr.bf16.mxu0 %v2990
        %3571 = vmatpush1.bf16.msra.mxu0 %v2989
        %3572 = vmatprep.subr.bf16.mxu0 %v2997
        %3573 = vmatpush1.bf16.msra.mxu0 %v2996
        %3574 = vmatprep.mubr.bf16.mxu0 %v1187
        %3575 = vmatmul.mubr.bf16.gmra.mrb[0].mxu0 %v1186
        %v3576 = vpop.f32.mrb[0].mxu0
        %v3577 = vadd.f32 %v3536, %v3576
        %v3578 = vpop.f32.mrb[0].mxu0
        %v3579 = vadd.f32 %v3538, %v3578
        %v3580 = vpop.f32.mrb[0].mxu0
        %v3581 = vpop.f32.mrb[0].mxu0
        %3582 = vdwg.mxu0
        %3583 = vmatprep.subr.bf16.mxu0 %v2670
        %3584 = vmatpush1.bf16.msra.mxu0 %v2669
        %3585 = vmatprep.subr.bf16.mxu0 %v2677
        %3586 = vmatpush1.bf16.msra.mxu0 %v2676
        %3587 = vmatprep.subr.bf16.mxu0 %v2684
        %3588 = vmatpush1.bf16.msra.mxu0 %v2683
        %3589 = vmatprep.subr.bf16.mxu0 %v2691
        %3590 = vmatpush1.bf16.msra.mxu0 %v2690
        %3591 = vmatprep.subr.bf16.mxu0 %v2698
        %3592 = vmatpush1.bf16.msra.mxu0 %v2697
        %3593 = vmatprep.subr.bf16.mxu0 %v2705
        %3594 = vmatpush1.bf16.msra.mxu0 %v2704
        %3595 = vmatprep.subr.bf16.mxu0 %v2712
        %3596 = vmatpush1.bf16.msra.mxu0 %v2711
        %3597 = vmatprep.subr.bf16.mxu0 %v2719
        %3598 = vmatpush1.bf16.msra.mxu0 %v2718
        %3599 = vmatprep.subr.bf16.mxu0 %v2726
        %3600 = vmatpush1.bf16.msra.mxu0 %v2725
        %3601 = vmatprep.subr.bf16.mxu0 %v2733
        %3602 = vmatpush1.bf16.msra.mxu0 %v2732
        %3603 = vmatprep.subr.bf16.mxu0 %v2740
        %3604 = vmatpush1.bf16.msra.mxu0 %v2739
        %3605 = vmatprep.subr.bf16.mxu0 %v2747
        %3606 = vmatpush1.bf16.msra.mxu0 %v2746
        %3607 = vmatprep.subr.bf16.mxu0 %v2754
        %3608 = vmatpush1.bf16.msra.mxu0 %v2753
        %3609 = vmatprep.subr.bf16.mxu0 %v2761
        %3610 = vmatpush1.bf16.msra.mxu0 %v2760
        %3611 = vmatprep.subr.bf16.mxu0 %v2768
        %3612 = vmatpush1.bf16.msra.mxu0 %v2767
        %3613 = vmatprep.subr.bf16.mxu0 %v2775
        %3614 = vmatpush1.bf16.msra.mxu0 %v2774
        %3615 = vmatprep.mubr.bf16.mxu0 %v1183
        %3616 = vmatmul.mubr.bf16.gmra.mrb[0].mxu0 %v1182
        %v3617 = vpop.f32.mrb[0].mxu0
        %v3618 = vadd.f32 %v1593, %v3617
        %v3619 = vpop.f32.mrb[0].mxu0
        %v3620 = vadd.f32 %v1597, %v3619
        %v3621 = vpop.f32.mrb[0].mxu0
        %v3622 = vpop.f32.mrb[0].mxu0
        %3623 = vdwg.mxu0
        %3624 = vmatprep.subr.bf16.mxu0 %v2782
        %3625 = vmatpush1.bf16.msra.mxu0 %v2781
        %3626 = vmatprep.subr.bf16.mxu0 %v2789
        %3627 = vmatpush1.bf16.msra.mxu0 %v2788
        %3628 = vmatprep.subr.bf16.mxu0 %v2796
        %3629 = vmatpush1.bf16.msra.mxu0 %v2795
        %3630 = vmatprep.subr.bf16.mxu0 %v2803
        %3631 = vmatpush1.bf16.msra.mxu0 %v2802
        %3632 = vmatprep.subr.bf16.mxu0 %v2810
        %3633 = vmatpush1.bf16.msra.mxu0 %v2809
        %3634 = vmatprep.subr.bf16.mxu0 %v2817
        %3635 = vmatpush1.bf16.msra.mxu0 %v2816
        %3636 = vmatprep.subr.bf16.mxu0 %v2824
        %3637 = vmatpush1.bf16.msra.mxu0 %v2823
        %3638 = vmatprep.subr.bf16.mxu0 %v2831
        %3639 = vmatpush1.bf16.msra.mxu0 %v2830
        %3640 = vmatprep.subr.bf16.mxu0 %v2838
        %3641 = vmatpush1.bf16.msra.mxu0 %v2837
        %3642 = vmatprep.subr.bf16.mxu0 %v2845
        %3643 = vmatpush1.bf16.msra.mxu0 %v2844
        %3644 = vmatprep.subr.bf16.mxu0 %v2852
        %3645 = vmatpush1.bf16.msra.mxu0 %v2851
        %3646 = vmatprep.subr.bf16.mxu0 %v2859
        %3647 = vmatpush1.bf16.msra.mxu0 %v2858
        %3648 = vmatprep.subr.bf16.mxu0 %v2866
        %3649 = vmatpush1.bf16.msra.mxu0 %v2865
        %3650 = vmatprep.subr.bf16.mxu0 %v2873
        %3651 = vmatpush1.bf16.msra.mxu0 %v2872
        %3652 = vmatprep.subr.bf16.mxu0 %v2880
        %3653 = vmatpush1.bf16.msra.mxu0 %v2879
        %3654 = vmatprep.subr.bf16.mxu0 %v2887
        %3655 = vmatpush1.bf16.msra.mxu0 %v2886
        %3656 = vmatprep.mubr.bf16.mxu0 %v1185
        %3657 = vmatmul.mubr.bf16.gmra.mrb[0].mxu0 %v1184
        %v3658 = vpop.f32.mrb[0].mxu0
        %v3659 = vadd.f32 %v3618, %v3658
        %v3660 = vpop.f32.mrb[0].mxu0
        %v3661 = vadd.f32 %v3620, %v3660
        %v3662 = vpop.f32.mrb[0].mxu0
        %v3663 = vpop.f32.mrb[0].mxu0
        %3664 = vdwg.mxu0
        %3665 = vmatprep.subr.bf16.mxu0 %v2894
        %3666 = vmatpush1.bf16.msra.mxu0 %v2893
        %3667 = vmatprep.subr.bf16.mxu0 %v2901
        %3668 = vmatpush1.bf16.msra.mxu0 %v2900
        %3669 = vmatprep.subr.bf16.mxu0 %v2908
        %3670 = vmatpush1.bf16.msra.mxu0 %v2907
        %3671 = vmatprep.subr.bf16.mxu0 %v2915
        %3672 = vmatpush1.bf16.msra.mxu0 %v2914
        %3673 = vmatprep.subr.bf16.mxu0 %v2922
        %3674 = vmatpush1.bf16.msra.mxu0 %v2921
        %3675 = vmatprep.subr.bf16.mxu0 %v2929
        %3676 = vmatpush1.bf16.msra.mxu0 %v2928
        %3677 = vmatprep.subr.bf16.mxu0 %v2936
        %3678 = vmatpush1.bf16.msra.mxu0 %v2935
        %3679 = vmatprep.subr.bf16.mxu0 %v2943
        %3680 = vmatpush1.bf16.msra.mxu0 %v2942
        %3681 = vmatprep.subr.bf16.mxu0 %v2950
        %3682 = vmatpush1.bf16.msra.mxu0 %v2949
        %3683 = vmatprep.subr.bf16.mxu0 %v2957
        %3684 = vmatpush1.bf16.msra.mxu0 %v2956
        %3685 = vmatprep.subr.bf16.mxu0 %v2964
        %3686 = vmatpush1.bf16.msra.mxu0 %v2963
        %3687 = vmatprep.subr.bf16.mxu0 %v2971
        %3688 = vmatpush1.bf16.msra.mxu0 %v2970
        %3689 = vmatprep.subr.bf16.mxu0 %v2978
        %3690 = vmatpush1.bf16.msra.mxu0 %v2977
        %3691 = vmatprep.subr.bf16.mxu0 %v2985
        %3692 = vmatpush1.bf16.msra.mxu0 %v2984
        %3693 = vmatprep.subr.bf16.mxu0 %v2992
        %3694 = vmatpush1.bf16.msra.mxu0 %v2991
        %3695 = vmatprep.subr.bf16.mxu0 %v2999
        %3696 = vmatpush1.bf16.msra.mxu0 %v2998
        %3697 = vmatprep.mubr.bf16.mxu0 %v1187
        %3698 = vmatmul.mubr.bf16.gmra.mrb[0].mxu0 %v1186
        %v3699 = vpop.f32.mrb[0].mxu0
        %v3700 = vadd.f32 %v3659, %v3699
        %v3701 = vpop.f32.mrb[0].mxu0
        %v3702 = vadd.f32 %v3661, %v3701
        %v3703 = vpop.f32.mrb[0].mxu0
        %v3704 = vpop.f32.mrb[0].mxu0
        %3705 = vdwg.mxu0
        %3706 = vmatprep.subr.bf16.mxu0 0
        %3707 = vmatpush1.bf16.msra.mxu0 %v2671
        %3708 = vmatprep.subr.bf16.mxu0 0
        %3709 = vmatpush1.bf16.msra.mxu0 %v2678
        %3710 = vmatprep.subr.bf16.mxu0 0
        %3711 = vmatpush1.bf16.msra.mxu0 %v2685
        %3712 = vmatprep.subr.bf16.mxu0 0
        %3713 = vmatpush1.bf16.msra.mxu0 %v2692
        %3714 = vmatprep.subr.bf16.mxu0 0
        %3715 = vmatpush1.bf16.msra.mxu0 %v2699
        %3716 = vmatprep.subr.bf16.mxu0 0
        %3717 = vmatpush1.bf16.msra.mxu0 %v2706
        %3718 = vmatprep.subr.bf16.mxu0 0
        %3719 = vmatpush1.bf16.msra.mxu0 %v2713
        %3720 = vmatprep.subr.bf16.mxu0 0
        %3721 = vmatpush1.bf16.msra.mxu0 %v2720
        %3722 = vmatprep.subr.bf16.mxu0 0
        %3723 = vmatpush1.bf16.msra.mxu0 %v2727
        %3724 = vmatprep.subr.bf16.mxu0 0
        %3725 = vmatpush1.bf16.msra.mxu0 %v2734
        %3726 = vmatprep.subr.bf16.mxu0 0
        %3727 = vmatpush1.bf16.msra.mxu0 %v2741
        %3728 = vmatprep.subr.bf16.mxu0 0
        %3729 = vmatpush1.bf16.msra.mxu0 %v2748
        %3730 = vmatprep.subr.bf16.mxu0 0
        %3731 = vmatpush1.bf16.msra.mxu0 %v2755
        %3732 = vmatprep.subr.bf16.mxu0 0
        %3733 = vmatpush1.bf16.msra.mxu0 %v2762
        %3734 = vmatprep.subr.bf16.mxu0 0
        %3735 = vmatpush1.bf16.msra.mxu0 %v2769
        %3736 = vmatprep.subr.bf16.mxu0 0
        %3737 = vmatpush1.bf16.msra.mxu0 %v2776
        %3738 = vmatprep.mubr.bf16.mxu0 %v1183
        %3739 = vmatmul.mubr.bf16.gmra.mrb[0].mxu0 %v1182
        %v3740 = vpop.f32.mrb[0].mxu0
        %v3741 = vadd.f32 %v1601, %v3740
        %v3742 = vpop.f32.mrb[0].mxu0
        %v3743 = vpop.f32.mrb[0].mxu0
        %v3744 = vpop.f32.mrb[0].mxu0
        %3745 = vdwg.mxu0
        %3746 = vmatprep.subr.bf16.mxu0 0
        %3747 = vmatpush1.bf16.msra.mxu0 %v2783
        %3748 = vmatprep.subr.bf16.mxu0 0
        %3749 = vmatpush1.bf16.msra.mxu0 %v2790
        %3750 = vmatprep.subr.bf16.mxu0 0
        %3751 = vmatpush1.bf16.msra.mxu0 %v2797
        %3752 = vmatprep.subr.bf16.mxu0 0
        %3753 = vmatpush1.bf16.msra.mxu0 %v2804
        %3754 = vmatprep.subr.bf16.mxu0 0
        %3755 = vmatpush1.bf16.msra.mxu0 %v2811
        %3756 = vmatprep.subr.bf16.mxu0 0
        %3757 = vmatpush1.bf16.msra.mxu0 %v2818
        %3758 = vmatprep.subr.bf16.mxu0 0
        %3759 = vmatpush1.bf16.msra.mxu0 %v2825
        %3760 = vmatprep.subr.bf16.mxu0 0
        %3761 = vmatpush1.bf16.msra.mxu0 %v2832
        %3762 = vmatprep.subr.bf16.mxu0 0
        %3763 = vmatpush1.bf16.msra.mxu0 %v2839
        %3764 = vmatprep.subr.bf16.mxu0 0
        %3765 = vmatpush1.bf16.msra.mxu0 %v2846
        %3766 = vmatprep.subr.bf16.mxu0 0
        %3767 = vmatpush1.bf16.msra.mxu0 %v2853
        %3768 = vmatprep.subr.bf16.mxu0 0
        %3769 = vmatpush1.bf16.msra.mxu0 %v2860
        %3770 = vmatprep.subr.bf16.mxu0 0
        %3771 = vmatpush1.bf16.msra.mxu0 %v2867
        %3772 = vmatprep.subr.bf16.mxu0 0
        %3773 = vmatpush1.bf16.msra.mxu0 %v2874
        %3774 = vmatprep.subr.bf16.mxu0 0
        %3775 = vmatpush1.bf16.msra.mxu0 %v2881
        %3776 = vmatprep.subr.bf16.mxu0 0
        %3777 = vmatpush1.bf16.msra.mxu0 %v2888
        %3778 = vmatprep.mubr.bf16.mxu0 %v1185
        %3779 = vmatmul.mubr.bf16.gmra.mrb[0].mxu0 %v1184
        %v3780 = vpop.f32.mrb[0].mxu0
        %v3781 = vadd.f32 %v3741, %v3780
        %v3782 = vpop.f32.mrb[0].mxu0
        %v3783 = vpop.f32.mrb[0].mxu0
        %v3784 = vpop.f32.mrb[0].mxu0
        %3785 = vdwg.mxu0
        %3786 = vmatprep.subr.bf16.mxu0 0
        %3787 = vmatpush1.bf16.msra.mxu0 %v2895
        %3788 = vmatprep.subr.bf16.mxu0 0
        %3789 = vmatpush1.bf16.msra.mxu0 %v2902
        %3790 = vmatprep.subr.bf16.mxu0 0
        %3791 = vmatpush1.bf16.msra.mxu0 %v2909
        %3792 = vmatprep.subr.bf16.mxu0 0
        %3793 = vmatpush1.bf16.msra.mxu0 %v2916
        %3794 = vmatprep.subr.bf16.mxu0 0
        %3795 = vmatpush1.bf16.msra.mxu0 %v2923
        %3796 = vmatprep.subr.bf16.mxu0 0
        %3797 = vmatpush1.bf16.msra.mxu0 %v2930
        %3798 = vmatprep.subr.bf16.mxu0 0
        %3799 = vmatpush1.bf16.msra.mxu0 %v2937
        %3800 = vmatprep.subr.bf16.mxu0 0
        %3801 = vmatpush1.bf16.msra.mxu0 %v2944
        %3802 = vmatprep.subr.bf16.mxu0 0
        %3803 = vmatpush1.bf16.msra.mxu0 %v2951
        %3804 = vmatprep.subr.bf16.mxu0 0
        %3805 = vmatpush1.bf16.msra.mxu0 %v2958
        %3806 = vmatprep.subr.bf16.mxu0 0
        %3807 = vmatpush1.bf16.msra.mxu0 %v2965
        %3808 = vmatprep.subr.bf16.mxu0 0
        %3809 = vmatpush1.bf16.msra.mxu0 %v2972
        %3810 = vmatprep.subr.bf16.mxu0 0
        %3811 = vmatpush1.bf16.msra.mxu0 %v2979
        %3812 = vmatprep.subr.bf16.mxu0 0
        %3813 = vmatpush1.bf16.msra.mxu0 %v2986
        %3814 = vmatprep.subr.bf16.mxu0 0
        %3815 = vmatpush1.bf16.msra.mxu0 %v2993
        %3816 = vmatprep.subr.bf16.mxu0 0
        %3817 = vmatpush1.bf16.msra.mxu0 %v3000
        %3818 = vmatprep.mubr.bf16.mxu0 %v1187
        %3819 = vmatmul.mubr.bf16.gmra.mrb[0].mxu0 %v1186
        %v3820 = vpop.f32.mrb[0].mxu0
        %v3821 = vadd.f32 %v3781, %v3820
        %v3822 = vpop.f32.mrb[0].mxu0
        %v3823 = vpop.f32.mrb[0].mxu0
        %v3824 = vpop.f32.mrb[0].mxu0
        %3825 = vdwg.mxu0
        %v3833 = vcombine.low %v3454, %v3456
        %v3834 = vcombine.low %v3577, %v3579
        %v3836 = vunpack.c.l.s4 1983009808
        %v3837 = vunpack.c.0.s8 %v3836
        %v3838 = vlaneseq
        %v3839 = vshrl.u32 %v3838, 7
        %v3840 = vsub.s32 %v3837, %v3839
        %v3841 = vrot.slane %v3833, %v3840
        %v3843 = vunpack.c.l.s4 1983009808
        %v3844 = vunpack.c.0.s8 %v3843
        %v3845 = vlaneseq
        %v3846 = vshrl.u32 %v3845, 7
        %v3847 = vsub.s32 %v3844, %v3846
        %v3848 = vrot.slane %v3834, %v3847
        %v3849 = vcombine.low %v3841, %v3848
        %v3850 = vcombine.low %v3700, %v3702
        %v3852 = vunpack.c.l.s4 1983009808
        %v3853 = vunpack.c.0.s8 %v3852
        %v3854 = vlaneseq
        %v3855 = vshrl.u32 %v3854, 7
        %v3856 = vsub.s32 %v3853, %v3855
        %v3857 = vrot.slane %v3850, %v3856
        %v3859 = vunpack.c.l.s4 1983009808
        %v3860 = vunpack.c.0.s8 %v3859
        %v3861 = vlaneseq
        %v3862 = vshrl.u32 %v3861, 7
        %v3863 = vsub.s32 %v3860, %v3862
        %v3864 = vrot.slane %v3821, %v3863
        %v3865 = vcombine.low %v3857, %v3864
        %3868 = vst [vmem:[%s391] sm:$0xff] %v3849
        %3869 = vst [vmem:[%s391 + $0x8] sm:$0x3f] %v3865
        %p3870 = scmp.lt.s32.totalorder %s21, 1
        %s3871 = scalar_select %p3870, %s21, 1
        %s3872 = smul.addr %s3871, 6
        %s3873 = smul.addr %s3872, 2
        %s3874 = scalar_lea.vmem %s6, %s3873
        %p3875 = scmp.lt.s32.totalorder %s21, 1
        %s3876 = scalar_select %p3875, %s21, 1
        %s3877 = smul.addr %s3876, 7
        %s3878 = smul.addr %s3877, 2
        %s3879 = scalar_lea.vmem %s7, %s3878
        // Predicated region
        $region61: #{two_view_forward.1} parent=43 // pred_check
          %p3880 = pneg %p180
        $region62: #{two_view_forward.1} parent=43 // pred_check_branch
          %3882 = sbr.rel (%p3880) target = $region64
        $region63: #{two_view_forward.1} parent=43 // pred_region
          _
        $region64: #{two_view_forward.1} parent=43 // pred_fallthru
          _
        // Predicated region
        $region65: #{two_view_forward.1} parent=43 // pred_check
          %p3883 = pneg %p206
        $region66: #{two_view_forward.1} parent=43 // pred_check_branch
          %3885 = sbr.rel (%p3883) target = $region68
        $region67: #{two_view_forward.1} parent=43 // pred_region
          _
        $region68: #{two_view_forward.1} parent=43 // pred_fallthru
          _
      $region44: #{two_view_forward.1} parent=5 // pred_fallthru
        _
      %p3886 = scmp.le.s32.totalorder 2, %s16
      // Predicated region
      $region69: #{two_view_forward.1} parent=5 // pred_check
        %p3887 = pneg %p3886
      $region70: #{two_view_forward.1} parent=5 // pred_check_branch
        %3889 = sbr.rel (%p3887) target = $region72
      $region71: #{two_view_forward.1} parent=5 // pred_region
        %s3890 = ssub.s32 %s16, 2
        // Predicated region
        $region73: #{two_view_forward.1} parent=71 // pred_check
          %p3891 = pneg %p186
        $region74: #{two_view_forward.1} parent=71 // pred_check_branch
          %3893 = sbr.rel (%p3891) target = $region76
        $region75: #{two_view_forward.1} parent=71 // pred_region
          %p3894 = scmp.lt.s32.totalorder %s22, 1
          %s3895 = scalar_select %p3894, %s22, 1
          %s3896 = smul.addr %s3895, 6
          %s3897 = smul.addr %s3896, 2
          %s3898 = scalar_lea.vmem %s6, %s3897
        $region76: #{two_view_forward.1} parent=71 // pred_fallthru
          _
        // Predicated region
        $region77: #{two_view_forward.1} parent=71 // pred_check
          %p3899 = pneg %p212
        $region78: #{two_view_forward.1} parent=71 // pred_check_branch
          %3901 = sbr.rel (%p3899) target = $region80
        $region79: #{two_view_forward.1} parent=71 // pred_region
          %p3902 = scmp.lt.s32.totalorder %s22, 1
          %s3903 = scalar_select %p3902, %s22, 1
          %s3904 = smul.addr %s3903, 7
          %s3905 = smul.addr %s3904, 2
          %s3906 = scalar_lea.vmem %s7, %s3905
        $region80: #{two_view_forward.1} parent=71 // pred_fallthru
          _
      $region72: #{two_view_forward.1} parent=5 // pred_fallthru
        _
    $region6: #{two_view_forward.1} parent=1 // loop_footer
      %s20 = sadd.s32 1, %s16
    $region7: #{two_view_forward.1} parent=1 // loop_footer_branch
      %15 = sbr.rel target = $region3
    $region8: #{two_view_forward.1} parent=1 // loop_exit
      _
    %3907 = vsyncpa [#allocation3], 1
    %s3908 = scalar_lea.sflag [#allocation3], 1
    %3909 = vsyncpa %s3908, 1
    %3910 = vsyncpa [#allocation5], 1

</llo_original>
